<compile_context>
chip_gen: v7x
topology: tpu7x:2x2x1
jax: 0.10.0
libtpu: 0.0.40
codegen_flags: <defaults>
</compile_context>

<pallas_src>
import functools
import math

import jax
import jax.numpy as jnp
import numpy as np
from jax.experimental import pallas as pl
from jax.experimental.pallas import tpu as pltpu


def _round_up(v, m):
    return ((v + m - 1) // m) * m


# ----------------------------------------------------------------------------
# Kernel 1: patch pooling + ReLU + Q/K + softmax + attention-apply (per image)
# ----------------------------------------------------------------------------
def _patch_attn_kernel(y_ref, pw_ref, wq_ref, bq_ref, wk_ref, bk_ref, o_ref, *,
                       num_c, inv_sqrt_c):
    # y_ref:  (1, P, C*J)  flattened patches (per-patch order C, ph, pw) — DMA'd once
    # pw_ref: (P, J)       per-patch pooling weights (Linear(J->1, bias=False))
    # wq/wk:  (C, EP) lane-padded, bq/bk: (1, EP) (zeros in the padded columns)
    y = y_ref[0]                                             # (P, CJ)
    p_cnt, cj = y.shape
    j = cj // num_c

    # pooled[p, c] = sum_j y[p, c*J + j] * pw[p, j]
    pat = y.reshape(p_cnt, num_c, j)                         # in-kernel view, no 2nd DMA
    pooled = jnp.sum(pat * pw_ref[...][:, None, :], axis=-1)  # (P, C)
    seq = jnp.maximum(pooled, 0.0)                           # ReLU

    q = jnp.dot(seq, wq_ref[...], preferred_element_type=jnp.float32) + bq_ref[...]
    k = jnp.dot(seq, wk_ref[...], preferred_element_type=jnp.float32) + bk_ref[...]

    # scores = q @ k^T / sqrt(C)   (padded E columns are zero in both -> no effect)
    s = jax.lax.dot_general(q, k, (((1,), (1,)), ((), ())),
                            preferred_element_type=jnp.float32) * inv_sqrt_c
    s = s - jnp.max(s, axis=-1, keepdims=True)
    e = jnp.exp(s)
    attn = e * pl.reciprocal(jnp.sum(e, axis=-1, keepdims=True), approx=True)

    o_ref[0] = jnp.dot(attn, y, preferred_element_type=jnp.float32).astype(o_ref.dtype)


def _patch_attention_core(y_flat, pool_w, wq, bq, wk, bk, num_c, *, out_dtype):
    B, P, CJ = y_flat.shape
    J = pool_w.shape[1]
    E = wq.shape[1]
    EP = _round_up(E, 128)                                   # lane-dense Q/K width

    wq_p = jnp.pad(wq.astype(jnp.float32), ((0, 0), (0, EP - E)))
    wk_p = jnp.pad(wk.astype(jnp.float32), ((0, 0), (0, EP - E)))
    bq_p = jnp.pad(bq.astype(jnp.float32), (0, EP - E)).reshape(1, EP)
    bk_p = jnp.pad(bk.astype(jnp.float32), (0, EP - E)).reshape(1, EP)

    kernel = functools.partial(_patch_attn_kernel, num_c=num_c,
                               inv_sqrt_c=1.0 / math.sqrt(num_c))
    return pl.pallas_call(
        kernel,
        out_shape=jax.ShapeDtypeStruct((B, P, CJ), out_dtype),
        grid=(B,),
        in_specs=[
            pl.BlockSpec((1, P, CJ), lambda b: (b, 0, 0)),
            pl.BlockSpec((P, J), lambda b: (0, 0)),
            pl.BlockSpec((num_c, EP), lambda b: (0, 0)),
            pl.BlockSpec((1, EP), lambda b: (0, 0)),
            pl.BlockSpec((num_c, EP), lambda b: (0, 0)),
            pl.BlockSpec((1, EP), lambda b: (0, 0)),
        ],
        out_specs=pl.BlockSpec((1, P, CJ), lambda b: (b, 0, 0)),
        compiler_params=pltpu.CompilerParams(dimension_semantics=("parallel",)),
    )(y_flat, pool_w, wq_p, bq_p, wk_p, bk_p)


# ----------------------------------------------------------------------------
# Kernel 2: Conv2d(3x3, pad=1, no bias) + folded BatchNorm + SiLU, im2col-free
# ----------------------------------------------------------------------------
def _make_conv_bn_silu_kernel(tr, w_out):
    """One (image, row-tile) grid step.  refs:
       center (1,TR,W+2,C1), halo0 (1,1,W+2,C1), halo1 (1,1,W+2,C1),
       weights (3,3,C1,C2P) with BN scale folded in, bias (1,C2P),
       output (1,TR,W,C2P), scratch window (TR+2,W+2,C1)."""
    def kernel(xc_ref, h0_ref, h1_ref, w_ref, b_ref, o_ref, xw_ref):
        # Assemble the contiguous halo window in VMEM (one coalesced DMA + 2 tiny ones).
        xw_ref[:tr] = xc_ref[0]
        xw_ref[tr] = h0_ref[0, 0]
        xw_ref[tr + 1] = h1_ref[0, 0]

        c2p = b_ref.shape[1]
        m = tr * w_out
        acc = None
        for dy in range(3):                                  # 9 batched-M MXU matmuls
            for dx in range(3):
                lhs = xw_ref[dy:dy + tr, dx:dx + w_out, :].reshape(m, -1)
                part = jnp.dot(lhs, w_ref[dy, dx],
                               preferred_element_type=jnp.float32)
                acc = part if acc is None else acc + part
        y = acc + b_ref[...]                                 # folded-BN shift (f32)
        y = y * jax.nn.sigmoid(y)                            # SiLU (f32 math)
        o_ref[0] = y.reshape(tr, w_out, c2p).astype(o_ref.dtype)
    return kernel


def conv_bn_silu_nhwc(x_nhwc, weight, gamma, beta, running_mean, running_var, *,
                      eps=1e-3, compute_dtype=jnp.float32, row_tile=None,
                      out_dtype=jnp.float32):
    """x_nhwc: (N, H, W, C1). weight: (C2, C1, 3, 3) torch OIHW. Returns NHWC (N,H,W,C2)."""
    N, H, W, C1 = x_nhwc.shape
    C2 = weight.shape[0]
    C2P = _round_up(C2, 128)                                 # lane-dense output channels

    # Row tile: target M = TR*W in the 256-512 range; cdiv grid (no TR=1 fallback).
    if row_tile is None:
        row_tile = max(8, pl.cdiv(512, W))
    TR = min(H, row_tile)
    n_tiles = pl.cdiv(H, TR)
    HT = n_tiles * TR                                        # padded output rows

    # Fold BatchNorm (inference running stats) into the conv weights + a single bias.
    scale = gamma / jnp.sqrt(running_var + eps)
    bias = (beta - running_mean * scale).astype(jnp.float32)
    w_hwio = jnp.transpose(weight, (2, 3, 1, 0)) * scale[None, None, None, :]
    w_hwio = jnp.pad(w_hwio, ((0, 0), (0, 0), (0, 0), (0, C2P - C2))).astype(compute_dtype)
    bias_p = jnp.pad(bias, (0, C2P - C2)).reshape(1, C2P)

    # Single fused pad+cast pass: 1 top halo row, (HT-H+1) bottom rows, 1 col each side.
    Wp = W + 2
    x_pad = jnp.pad(x_nhwc.astype(compute_dtype),
                    ((0, 0), (1, HT - H + 1), (1, 1), (0, 0)))

    # Explicit VMEM budget (double-buffered blocks + scratch window + slack).
    in_itm = jnp.dtype(compute_dtype).itemsize
    need = (2 * ((TR + 2) * Wp * C1 * in_itm
                 + 9 * C1 * C2P * in_itm + C2P * 4
                 + TR * W * C2P * jnp.dtype(out_dtype).itemsize)
            + (TR + 2) * Wp * C1 * in_itm
            + (4 << 20))
    vmem_limit = int(min(max(need, 16 << 20), 48 << 20))

    out = pl.pallas_call(
        _make_conv_bn_silu_kernel(TR, W),
        out_shape=jax.ShapeDtypeStruct((N, HT, W, C2P), out_dtype),
        grid=(N, n_tiles),
        in_specs=[
            pl.BlockSpec((1, TR, Wp, C1), lambda n, i: (n, i, 0, 0)),            # center
            pl.BlockSpec((1, 1, Wp, C1), lambda n, i: (n, i * TR + TR, 0, 0)),   # halo 0
            pl.BlockSpec((1, 1, Wp, C1), lambda n, i: (n, i * TR + TR + 1, 0, 0)),  # halo 1
            pl.BlockSpec((3, 3, C1, C2P), lambda n, i: (0, 0, 0, 0)),
            pl.BlockSpec((1, C2P), lambda n, i: (0, 0)),
        ],
        out_specs=pl.BlockSpec((1, TR, W, C2P), lambda n, i: (n, i, 0, 0)),
        scratch_shapes=[pltpu.VMEM((TR + 2, Wp, C1), compute_dtype)],
        compiler_params=pltpu.CompilerParams(
            dimension_semantics=("parallel", "parallel"),
            vmem_limit_bytes=vmem_limit),
    )(x_pad, x_pad, x_pad, w_hwio, bias_p)

    return out[:, :H, :, :C2]                                # crop (fuses under jit)


# ----------------------------------------------------------------------------
# Full PatchAttention forward
# ----------------------------------------------------------------------------
def patch_attention_forward(x, params, *, patch_size=(8, 8), eps=1e-3,
                            compute_dtype=jnp.bfloat16):
    """x: (B, C, H, W) NCHW float32. Returns NCHW, matching the PyTorch module."""
    B, C, H, W = x.shape
    ph, pwid = patch_size[1], patch_size[0]                  # torch: dim2 <- [1], dim3 <- [0]
    py, px = H // ph, W // pwid
    P, J = py * px, ph * pwid

    # Patch extraction (layout only, fused under jit): p = iy*px + ix,
    # per-patch flatten order (C, ph, pw).
    y_flat = (x.reshape(B, C, py, ph, px, pwid)
               .transpose(0, 2, 4, 1, 3, 5)
               .reshape(B, P, C * J))

    mixed = _patch_attention_core(y_flat, params["pool_w"],
                                  params["wq"], params["bq"],
                                  params["wk"], params["bk"], C,
                                  out_dtype=compute_dtype)   # (B, P, C*J)

    # Patch reassembly -> NHWC image (layout only, fused under jit).
    img = (mixed.reshape(B, py, px, C, ph, pwid)
                .transpose(0, 1, 4, 2, 5, 3)
                .reshape(B, H, W, C))

    out_nhwc = conv_bn_silu_nhwc(img, params["conv_w"], params["gamma"],
                                 params["beta"], params["run_mean"],
                                 params["run_var"], eps=eps,
                                 compute_dtype=compute_dtype,
                                 out_dtype=jnp.float32)
    return jnp.transpose(out_nhwc, (0, 3, 1, 2))             # NCHW (module contract)


# ----------------------------------------------------------------------------
# Pure-JAX reference (mirrors the PyTorch forward) for the correctness check
# ----------------------------------------------------------------------------
def _reference_forward(x, params, patch_size=(8, 8), eps=1e-3):
    B, C, H, W = x.shape
    ph, pwid = patch_size[1], patch_size[0]
    py, px = H // ph, W // pwid
    P, J = py * px, ph * pwid
    pat = x.reshape(B, C, py, ph, px, pwid).transpose(0, 2, 4, 1, 3, 5).reshape(B, P, C, J)
    seq = jax.nn.relu(jnp.einsum("bpcj,pj->bpc", pat, params["pool_w"],
                                 precision="highest"))
    q = jnp.einsum("bpc,ce->bpe", seq, params["wq"], precision="highest") + params["bq"]
    k = jnp.einsum("bpc,ce->bpe", seq, params["wk"], precision="highest") + params["bk"]
    s = jnp.einsum("bpe,bqe->bpq", q, k, precision="highest") / math.sqrt(C)
    attn = jax.nn.softmax(s, axis=-1)
    mixed = jnp.einsum("bpq,bqd->bpd", attn, pat.reshape(B, P, C * J),
                       precision="highest")
    img = (mixed.reshape(B, py, px, C, ph, pwid)
                .transpose(0, 3, 1, 4, 2, 5).reshape(B, C, H, W))
    conv = jax.lax.conv_general_dilated(
        img, params["conv_w"], (1, 1), ((1, 1), (1, 1)),
        dimension_numbers=("NCHW", "OIHW", "NCHW"),
        precision=jax.lax.Precision.HIGHEST)
    scale = params["gamma"] / jnp.sqrt(params["run_var"] + eps)
    shift = params["beta"] - params["run_mean"] * scale
    bn = conv * scale[None, :, None, None] + shift[None, :, None, None]
    return bn * jax.nn.sigmoid(bn)


if __name__ == "__main__":
    key = jax.random.PRNGKey(0)
    ks = jax.random.split(key, 12)

    B, C1, H, W = 2, 4, 16, 16
    EMB = 32
    PATCH = (8, 8)
    py, px = H // PATCH[1], W // PATCH[0]
    P, J = py * px, PATCH[0] * PATCH[1]

    x = jax.random.normal(ks[0], (B, C1, H, W), jnp.float32)
    params = dict(
        pool_w=jax.random.normal(ks[1], (P, J), jnp.float32) * np.sqrt(2.0 / J),
        wq=jax.random.normal(ks[2], (C1, EMB), jnp.float32) / np.sqrt(C1),
        bq=0.1 * jax.random.normal(ks[3], (EMB,), jnp.float32),
        wk=jax.random.normal(ks[4], (C1, EMB), jnp.float32) / np.sqrt(C1),
        bk=0.1 * jax.random.normal(ks[5], (EMB,), jnp.float32),
        conv_w=jax.random.normal(ks[6], (C1, C1, 3, 3), jnp.float32) / np.sqrt(C1 * 9),
        gamma=1.0 + 0.1 * jax.random.normal(ks[7], (C1,), jnp.float32),
        beta=0.1 * jax.random.normal(ks[8], (C1,), jnp.float32),
        run_mean=0.1 * jax.random.normal(ks[9], (C1,), jnp.float32),
        run_var=jax.random.uniform(ks[10], (C1,), minval=0.5, maxval=1.5,
                                   dtype=jnp.float32),
    )

    # f32 for the exact-semantics check; pass compute_dtype=jnp.bfloat16 on v6e/v7x
    # to halve HBM traffic on the conv path (f32 accumulation is kept in-kernel).
    fwd = jax.jit(functools.partial(patch_attention_forward, patch_size=PATCH,
                                    compute_dtype=jnp.float32))
    out = jax.block_until_ready(fwd(x, params))

    ref = _reference_forward(x, params, patch_size=PATCH)
    assert out.shape == (B, C1, H, W)
    np.testing.assert_allclose(np.asarray(out), np.asarray(ref),
                               rtol=5e-3, atol=5e-3)
    print("KERNEL_OK")
</pallas_src>

<mosaic_0001>
module attributes {stable_mosaic.version = 11 : i64} {
  func.func @_patch_attn_kernel(%arg0: i32, %arg1: memref<1x4x256xf32, #tpu.memory_space<vmem>>, %arg2: memref<4x64xf32, #tpu.memory_space<vmem>>, %arg3: memref<4x128xf32, #tpu.memory_space<vmem>>, %arg4: memref<1x128xf32, #tpu.memory_space<vmem>>, %arg5: memref<4x128xf32, #tpu.memory_space<vmem>>, %arg6: memref<1x128xf32, #tpu.memory_space<vmem>>, %arg7: memref<1x4x256xf32, #tpu.memory_space<vmem>>) attributes {dimension_semantics = [#tpu.dimension_semantics<parallel>], iteration_bounds = array<i64: 2>, scalar_prefetch = 0 : i64, scratch_operands = 0 : i64, tpu.core_type = #tpu.core_type<tc>, window_params = [{transform_indices = @transform_0, window_bounds = array<i64: 1, 4, 256>}, {pipeline_mode = #tpu.pipeline_mode<synchronous>, transform_indices = @transform_1, window_bounds = array<i64: 4, 64>}, {pipeline_mode = #tpu.pipeline_mode<synchronous>, transform_indices = @transform_2, window_bounds = array<i64: 4, 128>}, {pipeline_mode = #tpu.pipeline_mode<synchronous>, transform_indices = @transform_3, window_bounds = array<i64: 1, 128>}, {pipeline_mode = #tpu.pipeline_mode<synchronous>, transform_indices = @transform_4, window_bounds = array<i64: 4, 128>}, {pipeline_mode = #tpu.pipeline_mode<synchronous>, transform_indices = @transform_5, window_bounds = array<i64: 1, 128>}, {transform_indices = @transform_6, window_bounds = array<i64: 1, 4, 256>}]} {
    %c0 = arith.constant 0 : index
    %c0_0 = arith.constant 0 : index
    %c0_1 = arith.constant 0 : index
    %0 = vector.load %arg1[%c0, %c0_0, %c0_1] : memref<1x4x256xf32, #tpu.memory_space<vmem>>, vector<1x4x256xf32>
    %1 = vector.shape_cast %0 : vector<1x4x256xf32> to vector<4x256xf32>
    %2 = vector.shape_cast %1 : vector<4x256xf32> to vector<4x4x64xf32>
    %c0_2 = arith.constant 0 : index
    %c0_3 = arith.constant 0 : index
    %3 = vector.load %arg2[%c0_2, %c0_3] : memref<4x64xf32, #tpu.memory_space<vmem>>, vector<4x64xf32>
    %4 = vector.shape_cast %3 : vector<4x64xf32> to vector<4x1x64xf32>
    %5 = vector.broadcast %4 : vector<4x1x64xf32> to vector<4x4x64xf32>
    %6 = arith.mulf %2, %5 : vector<4x4x64xf32>
    %cst = arith.constant dense<0.000000e+00> : vector<4x4xf32>
    %7 = vector.multi_reduction <add>, %6, %cst [2] : vector<4x4x64xf32> to vector<4x4xf32>
    %cst_4 = arith.constant 0.000000e+00 : f32
    %8 = vector.broadcast %cst_4 : f32 to vector<4x4xf32>
    %9 = arith.maximumf %7, %8 : vector<4x4xf32>
    %c0_5 = arith.constant 0 : index
    %c0_6 = arith.constant 0 : index
    %10 = vector.load %arg3[%c0_5, %c0_6] : memref<4x128xf32, #tpu.memory_space<vmem>>, vector<4x128xf32>
    %cst_7 = arith.constant dense<0.000000e+00> : vector<4x128xf32>
    %11 = tpu.matmul %9, %10, %cst_7 {dimension_numbers = #tpu.dot_dimension_numbers<[1], [0], [0], [1], [0, 0, 1, 1], [], []>} : vector<4x4xf32>, vector<4x128xf32>, vector<4x128xf32> -> vector<4x128xf32>
    %c0_8 = arith.constant 0 : index
    %c0_9 = arith.constant 0 : index
    %12 = vector.load %arg4[%c0_8, %c0_9] : memref<1x128xf32, #tpu.memory_space<vmem>>, vector<1x128xf32>
    %13 = vector.broadcast %12 : vector<1x128xf32> to vector<4x128xf32>
    %14 = arith.addf %11, %13 : vector<4x128xf32>
    %c0_10 = arith.constant 0 : index
    %c0_11 = arith.constant 0 : index
    %15 = vector.load %arg5[%c0_10, %c0_11] : memref<4x128xf32, #tpu.memory_space<vmem>>, vector<4x128xf32>
    %cst_12 = arith.constant dense<0.000000e+00> : vector<4x128xf32>
    %16 = tpu.matmul %9, %15, %cst_12 {dimension_numbers = #tpu.dot_dimension_numbers<[1], [0], [0], [1], [0, 0, 1, 1], [], []>} : vector<4x4xf32>, vector<4x128xf32>, vector<4x128xf32> -> vector<4x128xf32>
    %c0_13 = arith.constant 0 : index
    %c0_14 = arith.constant 0 : index
    %17 = vector.load %arg6[%c0_13, %c0_14] : memref<1x128xf32, #tpu.memory_space<vmem>>, vector<1x128xf32>
    %18 = vector.broadcast %17 : vector<1x128xf32> to vector<4x128xf32>
    %19 = arith.addf %16, %18 : vector<4x128xf32>
    %cst_15 = arith.constant dense<0.000000e+00> : vector<4x4xf32>
    %20 = tpu.matmul %14, %19, %cst_15 {dimension_numbers = #tpu.dot_dimension_numbers<[1], [1], [0], [0], [0, 0, 1, 0], [], []>} : vector<4x128xf32>, vector<4x128xf32>, vector<4x4xf32> -> vector<4x4xf32>
    %cst_16 = arith.constant 5.000000e-01 : f32
    %21 = vector.broadcast %cst_16 : f32 to vector<4x4xf32>
    %22 = arith.mulf %20, %21 : vector<4x4xf32>
    %cst_17 = arith.constant dense<0xFF800000> : vector<4xf32>
    %23 = vector.multi_reduction <maximumf>, %22, %cst_17 [1] : vector<4x4xf32> to vector<4xf32>
    %24 = vector.shape_cast %23 : vector<4xf32> to vector<4x1xf32>
    %25 = vector.broadcast %24 : vector<4x1xf32> to vector<4x4xf32>
    %26 = arith.subf %22, %25 : vector<4x4xf32>
    %27 = math.exp %26 : vector<4x4xf32>
    %cst_18 = arith.constant dense<0.000000e+00> : vector<4xf32>
    %28 = vector.multi_reduction <add>, %27, %cst_18 [1] : vector<4x4xf32> to vector<4xf32>
    %29 = vector.shape_cast %28 : vector<4xf32> to vector<4x1xf32>
    %30 = tpu.reciprocal %29 {approx = true} : vector<4x1xf32> -> vector<4x1xf32>
    %31 = vector.broadcast %30 : vector<4x1xf32> to vector<4x4xf32>
    %32 = arith.mulf %27, %31 : vector<4x4xf32>
    %cst_19 = arith.constant dense<0.000000e+00> : vector<4x256xf32>
    %33 = tpu.matmul %32, %1, %cst_19 {dimension_numbers = #tpu.dot_dimension_numbers<[1], [0], [0], [1], [0, 0, 1, 1], [], []>} : vector<4x4xf32>, vector<4x256xf32>, vector<4x256xf32> -> vector<4x256xf32>
    %c0_20 = arith.constant 0 : index
    %c0_21 = arith.constant 0 : index
    %c0_22 = arith.constant 0 : index
    %34 = vector.load %arg7[%c0_20, %c0_21, %c0_22] : memref<1x4x256xf32, #tpu.memory_space<vmem>>, vector<1x4x256xf32>
    %35 = vector.shape_cast %34 : vector<1x4x256xf32> to vector<4x256xf32>
    %36 = vector.shape_cast %33 : vector<4x256xf32> to vector<1x4x256xf32>
    tpu.vector_store %arg7[%c0_20, %c0_21, %c0_22], %36 {strides = array<i32>} : memref<1x4x256xf32, #tpu.memory_space<vmem>>, vector<1x4x256xf32>,
    return
  }
  func.func @transform_0(%arg0: i32) -> (i32, i32, i32) {
    %c0_i32 = arith.constant 0 : i32
    %c0_i32_0 = arith.constant 0 : i32
    %c0_i32_1 = arith.constant 0 : i32
    return %arg0, %c0_i32, %c0_i32_0 : i32, i32, i32
  }
  func.func @transform_1(%arg0: i32) -> (i32, i32) {
    %c0_i32 = arith.constant 0 : i32
    %c0_i32_0 = arith.constant 0 : i32
    %c0_i32_1 = arith.constant 0 : i32
    return %c0_i32, %c0_i32_0 : i32, i32
  }
  func.func @transform_2(%arg0: i32) -> (i32, i32) {
    %c0_i32 = arith.constant 0 : i32
    %c0_i32_0 = arith.constant 0 : i32
    %c0_i32_1 = arith.constant 0 : i32
    return %c0_i32, %c0_i32_0 : i32, i32
  }
  func.func @transform_3(%arg0: i32) -> (i32, i32) {
    %c0_i32 = arith.constant 0 : i32
    %c0_i32_0 = arith.constant 0 : i32
    %c0_i32_1 = arith.constant 0 : i32
    return %c0_i32, %c0_i32_0 : i32, i32
  }
  func.func @transform_4(%arg0: i32) -> (i32, i32) {
    %c0_i32 = arith.constant 0 : i32
    %c0_i32_0 = arith.constant 0 : i32
    %c0_i32_1 = arith.constant 0 : i32
    return %c0_i32, %c0_i32_0 : i32, i32
  }
  func.func @transform_5(%arg0: i32) -> (i32, i32) {
    %c0_i32 = arith.constant 0 : i32
    %c0_i32_0 = arith.constant 0 : i32
    %c0_i32_1 = arith.constant 0 : i32
    return %c0_i32, %c0_i32_0 : i32, i32
  }
  func.func @transform_6(%arg0: i32) -> (i32, i32, i32) {
    %c0_i32 = arith.constant 0 : i32
    %c0_i32_0 = arith.constant 0 : i32
    %c0_i32_1 = arith.constant 0 : i32
    return %arg0, %c0_i32, %c0_i32_0 : i32, i32, i32
  }
}

module attributes {stable_mosaic.version = 11 : i64} {
  func.func @kernel(%arg0: i32, %arg1: i32, %arg2: memref<1x16x18x4xf32, #tpu.memory_space<vmem>>, %arg3: memref<1x1x18x4xf32, #tpu.memory_space<vmem>>, %arg4: memref<1x1x18x4xf32, #tpu.memory_space<vmem>>, %arg5: memref<3x3x4x128xf32, #tpu.memory_space<vmem>>, %arg6: memref<1x128xf32, #tpu.memory_space<vmem>>, %arg7: memref<1x16x16x128xf32, #tpu.memory_space<vmem>>, %arg8: memref<18x18x4xf32, #tpu.memory_space<vmem>>) attributes {dimension_semantics = [#tpu.dimension_semantics<parallel>, #tpu.dimension_semantics<parallel>], iteration_bounds = array<i64: 2, 1>, scalar_prefetch = 0 : i64, scratch_operands = 1 : i64, tpu.core_type = #tpu.core_type<tc>, window_params = [{transform_indices = @transform_0, window_bounds = array<i64: 1, 16, 18, 4>}, {transform_indices = @transform_1, window_bounds = array<i64: 1, 1, 18, 4>}, {transform_indices = @transform_2, window_bounds = array<i64: 1, 1, 18, 4>}, {pipeline_mode = #tpu.pipeline_mode<synchronous>, transform_indices = @transform_3, window_bounds = array<i64: 3, 3, 4, 128>}, {pipeline_mode = #tpu.pipeline_mode<synchronous>, transform_indices = @transform_4, window_bounds = array<i64: 1, 128>}, {transform_indices = @transform_5, window_bounds = array<i64: 1, 16, 16, 128>}]} {
    %c0 = arith.constant 0 : index
    %c0_0 = arith.constant 0 : index
    %c0_1 = arith.constant 0 : index
    %c0_2 = arith.constant 0 : index
    %0 = vector.load %arg2[%c0, %c0_0, %c0_1, %c0_2] : memref<1x16x18x4xf32, #tpu.memory_space<vmem>>, vector<1x16x18x4xf32>
    %1 = vector.shape_cast %0 : vector<1x16x18x4xf32> to vector<16x18x4xf32>
    %c0_3 = arith.constant 0 : index
    %c0_4 = arith.constant 0 : index
    %c0_5 = arith.constant 0 : index
    %2 = vector.load %arg8[%c0_3, %c0_4, %c0_5] : memref<18x18x4xf32, #tpu.memory_space<vmem>>, vector<16x18x4xf32>
    tpu.vector_store %arg8[%c0_3, %c0_4, %c0_5], %1 {strides = array<i32>} : memref<18x18x4xf32, #tpu.memory_space<vmem>>, vector<16x18x4xf32>,
    %c0_6 = arith.constant 0 : index
    %c0_7 = arith.constant 0 : index
    %c0_8 = arith.constant 0 : index
    %c0_9 = arith.constant 0 : index
    %3 = vector.load %arg3[%c0_6, %c0_7, %c0_8, %c0_9] : memref<1x1x18x4xf32, #tpu.memory_space<vmem>>, vector<1x1x18x4xf32>
    %4 = vector.shape_cast %3 : vector<1x1x18x4xf32> to vector<18x4xf32>
    %c16 = arith.constant 16 : index
    %c0_10 = arith.constant 0 : index
    %c0_11 = arith.constant 0 : index
    %5 = vector.load %arg8[%c16, %c0_10, %c0_11] : memref<18x18x4xf32, #tpu.memory_space<vmem>>, vector<1x18x4xf32>
    %6 = vector.shape_cast %5 : vector<1x18x4xf32> to vector<18x4xf32>
    %7 = vector.shape_cast %4 : vector<18x4xf32> to vector<1x18x4xf32>
    tpu.vector_store %arg8[%c16, %c0_10, %c0_11], %7 {strides = array<i32>} : memref<18x18x4xf32, #tpu.memory_space<vmem>>, vector<1x18x4xf32>,
    %c0_12 = arith.constant 0 : index
    %c0_13 = arith.constant 0 : index
    %c0_14 = arith.constant 0 : index
    %c0_15 = arith.constant 0 : index
    %8 = vector.load %arg4[%c0_12, %c0_13, %c0_14, %c0_15] : memref<1x1x18x4xf32, #tpu.memory_space<vmem>>, vector<1x1x18x4xf32>
    %9 = vector.shape_cast %8 : vector<1x1x18x4xf32> to vector<18x4xf32>
    %c17 = arith.constant 17 : index
    %c0_16 = arith.constant 0 : index
    %c0_17 = arith.constant 0 : index
    %10 = vector.load %arg8[%c17, %c0_16, %c0_17] : memref<18x18x4xf32, #tpu.memory_space<vmem>>, vector<1x18x4xf32>
    %11 = vector.shape_cast %10 : vector<1x18x4xf32> to vector<18x4xf32>
    %12 = vector.shape_cast %9 : vector<18x4xf32> to vector<1x18x4xf32>
    tpu.vector_store %arg8[%c17, %c0_16, %c0_17], %12 {strides = array<i32>} : memref<18x18x4xf32, #tpu.memory_space<vmem>>, vector<1x18x4xf32>,
    %c0_18 = arith.constant 0 : index
    %c0_19 = arith.constant 0 : index
    %c0_20 = arith.constant 0 : index
    %13 = vector.load %arg8[%c0_18, %c0_19, %c0_20] : memref<18x18x4xf32, #tpu.memory_space<vmem>>, vector<16x16x4xf32>
    %14 = vector.shape_cast %13 : vector<16x16x4xf32> to vector<256x4xf32>
    %c0_21 = arith.constant 0 : index
    %c0_22 = arith.constant 0 : index
    %c0_23 = arith.constant 0 : index
    %c0_24 = arith.constant 0 : index
    %15 = vector.load %arg5[%c0_21, %c0_22, %c0_23, %c0_24] : memref<3x3x4x128xf32, #tpu.memory_space<vmem>>, vector<1x1x4x128xf32>
    %16 = vector.shape_cast %15 : vector<1x1x4x128xf32> to vector<4x128xf32>
    %cst = arith.constant dense<0.000000e+00> : vector<256x128xf32>
    %17 = tpu.matmul %14, %16, %cst {dimension_numbers = #tpu.dot_dimension_numbers<[1], [0], [0], [1], [0, 0, 1, 1], [], []>} : vector<256x4xf32>, vector<4x128xf32>, vector<256x128xf32> -> vector<256x128xf32>
    %c0_25 = arith.constant 0 : index
    %c1 = arith.constant 1 : index
    %c0_26 = arith.constant 0 : index
    %18 = vector.load %arg8[%c0_25, %c1, %c0_26] : memref<18x18x4xf32, #tpu.memory_space<vmem>>, vector<16x16x4xf32>
    %19 = vector.shape_cast %18 : vector<16x16x4xf32> to vector<256x4xf32>
    %c0_27 = arith.constant 0 : index
    %c1_28 = arith.constant 1 : index
    %c0_29 = arith.constant 0 : index
    %c0_30 = arith.constant 0 : index
    %20 = vector.load %arg5[%c0_27, %c1_28, %c0_29, %c0_30] : memref<3x3x4x128xf32, #tpu.memory_space<vmem>>, vector<1x1x4x128xf32>
    %21 = vector.shape_cast %20 : vector<1x1x4x128xf32> to vector<4x128xf32>
    %cst_31 = arith.constant dense<0.000000e+00> : vector<256x128xf32>
    %22 = tpu.matmul %19, %21, %cst_31 {dimension_numbers = #tpu.dot_dimension_numbers<[1], [0], [0], [1], [0, 0, 1, 1], [], []>} : vector<256x4xf32>, vector<4x128xf32>, vector<256x128xf32> -> vector<256x128xf32>
    %23 = arith.addf %17, %22 : vector<256x128xf32>
    %c0_32 = arith.constant 0 : index
    %c2 = arith.constant 2 : index
    %c0_33 = arith.constant 0 : index
    %24 = vector.load %arg8[%c0_32, %c2, %c0_33] : memref<18x18x4xf32, #tpu.memory_space<vmem>>, vector<16x16x4xf32>
    %25 = vector.shape_cast %24 : vector<16x16x4xf32> to vector<256x4xf32>
    %c0_34 = arith.constant 0 : index
    %c2_35 = arith.constant 2 : index
    %c0_36 = arith.constant 0 : index
    %c0_37 = arith.constant 0 : index
    %26 = vector.load %arg5[%c0_34, %c2_35, %c0_36, %c0_37] : memref<3x3x4x128xf32, #tpu.memory_space<vmem>>, vector<1x1x4x128xf32>
    %27 = vector.shape_cast %26 : vector<1x1x4x128xf32> to vector<4x128xf32>
    %cst_38 = arith.constant dense<0.000000e+00> : vector<256x128xf32>
    %28 = tpu.matmul %25, %27, %cst_38 {dimension_numbers = #tpu.dot_dimension_numbers<[1], [0], [0], [1], [0, 0, 1, 1], [], []>} : vector<256x4xf32>, vector<4x128xf32>, vector<256x128xf32> -> vector<256x128xf32>
    %29 = arith.addf %23, %28 : vector<256x128xf32>
    %c1_39 = arith.constant 1 : index
    %c0_40 = arith.constant 0 : index
    %c0_41 = arith.constant 0 : index
    %30 = vector.load %arg8[%c1_39, %c0_40, %c0_41] : memref<18x18x4xf32, #tpu.memory_space<vmem>>, vector<16x16x4xf32>
    %31 = vector.shape_cast %30 : vector<16x16x4xf32> to vector<256x4xf32>
    %c1_42 = arith.constant 1 : index
    %c0_43 = arith.constant 0 : index
    %c0_44 = arith.constant 0 : index
    %c0_45 = arith.constant 0 : index
    %32 = vector.load %arg5[%c1_42, %c0_43, %c0_44, %c0_45] : memref<3x3x4x128xf32, #tpu.memory_space<vmem>>, vector<1x1x4x128xf32>
    %33 = vector.shape_cast %32 : vector<1x1x4x128xf32> to vector<4x128xf32>
    %cst_46 = arith.constant dense<0.000000e+00> : vector<256x128xf32>
    %34 = tpu.matmul %31, %33, %cst_46 {dimension_numbers = #tpu.dot_dimension_numbers<[1], [0], [0], [1], [0, 0, 1, 1], [], []>} : vector<256x4xf32>, vector<4x128xf32>, vector<256x128xf32> -> vector<256x128xf32>
    %35 = arith.addf %29, %34 : vector<256x128xf32>
    %c1_47 = arith.constant 1 : index
    %c1_48 = arith.constant 1 : index
    %c0_49 = arith.constant 0 : index
    %36 = vector.load %arg8[%c1_47, %c1_48, %c0_49] : memref<18x18x4xf32, #tpu.memory_space<vmem>>, vector<16x16x4xf32>
    %37 = vector.shape_cast %36 : vector<16x16x4xf32> to vector<256x4xf32>
    %c1_50 = arith.constant 1 : index
    %c1_51 = arith.constant 1 : index
    %c0_52 = arith.constant 0 : index
    %c0_53 = arith.constant 0 : index
    %38 = vector.load %arg5[%c1_50, %c1_51, %c0_52, %c0_53] : memref<3x3x4x128xf32, #tpu.memory_space<vmem>>, vector<1x1x4x128xf32>
    %39 = vector.shape_cast %38 : vector<1x1x4x128xf32> to vector<4x128xf32>
    %cst_54 = arith.constant dense<0.000000e+00> : vector<256x128xf32>
    %40 = tpu.matmul %37, %39, %cst_54 {dimension_numbers = #tpu.dot_dimension_numbers<[1], [0], [0], [1], [0, 0, 1, 1], [], []>} : vector<256x4xf32>, vector<4x128xf32>, vector<256x128xf32> -> vector<256x128xf32>
    %41 = arith.addf %35, %40 : vector<256x128xf32>
    %c1_55 = arith.constant 1 : index
    %c2_56 = arith.constant 2 : index
    %c0_57 = arith.constant 0 : index
    %42 = vector.load %arg8[%c1_55, %c2_56, %c0_57] : memref<18x18x4xf32, #tpu.memory_space<vmem>>, vector<16x16x4xf32>
    %43 = vector.shape_cast %42 : vector<16x16x4xf32> to vector<256x4xf32>
    %c1_58 = arith.constant 1 : index
    %c2_59 = arith.constant 2 : index
    %c0_60 = arith.constant 0 : index
    %c0_61 = arith.constant 0 : index
    %44 = vector.load %arg5[%c1_58, %c2_59, %c0_60, %c0_61] : memref<3x3x4x128xf32, #tpu.memory_space<vmem>>, vector<1x1x4x128xf32>
    %45 = vector.shape_cast %44 : vector<1x1x4x128xf32> to vector<4x128xf32>
    %cst_62 = arith.constant dense<0.000000e+00> : vector<256x128xf32>
    %46 = tpu.matmul %43, %45, %cst_62 {dimension_numbers = #tpu.dot_dimension_numbers<[1], [0], [0], [1], [0, 0, 1, 1], [], []>} : vector<256x4xf32>, vector<4x128xf32>, vector<256x128xf32> -> vector<256x128xf32>
    %47 = arith.addf %41, %46 : vector<256x128xf32>
    %c2_63 = arith.constant 2 : index
    %c0_64 = arith.constant 0 : index
    %c0_65 = arith.constant 0 : index
    %48 = vector.load %arg8[%c2_63, %c0_64, %c0_65] : memref<18x18x4xf32, #tpu.memory_space<vmem>>, vector<16x16x4xf32>
    %49 = vector.shape_cast %48 : vector<16x16x4xf32> to vector<256x4xf32>
    %c2_66 = arith.constant 2 : index
    %c0_67 = arith.constant 0 : index
    %c0_68 = arith.constant 0 : index
    %c0_69 = arith.constant 0 : index
    %50 = vector.load %arg5[%c2_66, %c0_67, %c0_68, %c0_69] : memref<3x3x4x128xf32, #tpu.memory_space<vmem>>, vector<1x1x4x128xf32>
    %51 = vector.shape_cast %50 : vector<1x1x4x128xf32> to vector<4x128xf32>
    %cst_70 = arith.constant dense<0.000000e+00> : vector<256x128xf32>
    %52 = tpu.matmul %49, %51, %cst_70 {dimension_numbers = #tpu.dot_dimension_numbers<[1], [0], [0], [1], [0, 0, 1, 1], [], []>} : vector<256x4xf32>, vector<4x128xf32>, vector<256x128xf32> -> vector<256x128xf32>
    %53 = arith.addf %47, %52 : vector<256x128xf32>
    %c2_71 = arith.constant 2 : index
    %c1_72 = arith.constant 1 : index
    %c0_73 = arith.constant 0 : index
    %54 = vector.load %arg8[%c2_71, %c1_72, %c0_73] : memref<18x18x4xf32, #tpu.memory_space<vmem>>, vector<16x16x4xf32>
    %55 = vector.shape_cast %54 : vector<16x16x4xf32> to vector<256x4xf32>
    %c2_74 = arith.constant 2 : index
    %c1_75 = arith.constant 1 : index
    %c0_76 = arith.constant 0 : index
    %c0_77 = arith.constant 0 : index
    %56 = vector.load %arg5[%c2_74, %c1_75, %c0_76, %c0_77] : memref<3x3x4x128xf32, #tpu.memory_space<vmem>>, vector<1x1x4x128xf32>
    %57 = vector.shape_cast %56 : vector<1x1x4x128xf32> to vector<4x128xf32>
    %cst_78 = arith.constant dense<0.000000e+00> : vector<256x128xf32>
    %58 = tpu.matmul %55, %57, %cst_78 {dimension_numbers = #tpu.dot_dimension_numbers<[1], [0], [0], [1], [0, 0, 1, 1], [], []>} : vector<256x4xf32>, vector<4x128xf32>, vector<256x128xf32> -> vector<256x128xf32>
    %59 = arith.addf %53, %58 : vector<256x128xf32>
    %c2_79 = arith.constant 2 : index
    %c2_80 = arith.constant 2 : index
    %c0_81 = arith.constant 0 : index
    %60 = vector.load %arg8[%c2_79, %c2_80, %c0_81] : memref<18x18x4xf32, #tpu.memory_space<vmem>>, vector<16x16x4xf32>
    %61 = vector.shape_cast %60 : vector<16x16x4xf32> to vector<256x4xf32>
    %c2_82 = arith.constant 2 : index
    %c2_83 = arith.constant 2 : index
    %c0_84 = arith.constant 0 : index
    %c0_85 = arith.constant 0 : index
    %62 = vector.load %arg5[%c2_82, %c2_83, %c0_84, %c0_85] : memref<3x3x4x128xf32, #tpu.memory_space<vmem>>, vector<1x1x4x128xf32>
    %63 = vector.shape_cast %62 : vector<1x1x4x128xf32> to vector<4x128xf32>
    %cst_86 = arith.constant dense<0.000000e+00> : vector<256x128xf32>
    %64 = tpu.matmul %61, %63, %cst_86 {dimension_numbers = #tpu.dot_dimension_numbers<[1], [0], [0], [1], [0, 0, 1, 1], [], []>} : vector<256x4xf32>, vector<4x128xf32>, vector<256x128xf32> -> vector<256x128xf32>
    %65 = arith.addf %59, %64 : vector<256x128xf32>
    %c0_87 = arith.constant 0 : index
    %c0_88 = arith.constant 0 : index
    %66 = vector.load %arg6[%c0_87, %c0_88] : memref<1x128xf32, #tpu.memory_space<vmem>>, vector<1x128xf32>
    %67 = vector.broadcast %66 : vector<1x128xf32> to vector<256x128xf32>
    %68 = arith.addf %65, %67 : vector<256x128xf32>
    %69 = arith.negf %68 : vector<256x128xf32>
    %70 = math.exp %69 : vector<256x128xf32>
    %cst_89 = arith.constant 1.000000e+00 : f32
    %71 = vector.broadcast %cst_89 : f32 to vector<256x128xf32>
    %72 = arith.addf %71, %70 : vector<256x128xf32>
    %73 = arith.divf %71, %72 : vector<256x128xf32>
    %74 = arith.mulf %68, %73 : vector<256x128xf32>
    %75 = vector.shape_cast %74 : vector<256x128xf32> to vector<16x16x128xf32>
    %c0_90 = arith.constant 0 : index
    %c0_91 = arith.constant 0 : index
    %c0_92 = arith.constant 0 : index
    %c0_93 = arith.constant 0 : index
    %76 = vector.load %arg7[%c0_90, %c0_91, %c0_92, %c0_93] : memref<1x16x16x128xf32, #tpu.memory_space<vmem>>, vector<1x16x16x128xf32>
    %77 = vector.shape_cast %76 : vector<1x16x16x128xf32> to vector<16x16x128xf32>
    %78 = vector.shape_cast %75 : vector<16x16x128xf32> to vector<1x16x16x128xf32>
    tpu.vector_store %arg7[%c0_90, %c0_91, %c0_92, %c0_93], %78 {strides = array<i32>} : memref<1x16x16x128xf32, #tpu.memory_space<vmem>>, vector<1x16x16x128xf32>,
    return
  }
  func.func @transform_0(%arg0: i32, %arg1: i32) -> (i32, i32, i32, i32) {
    %c0_i32 = arith.constant 0 : i32
    %c0_i32_0 = arith.constant 0 : i32
    %c0_i32_1 = arith.constant 0 : i32
    return %arg0, %arg1, %c0_i32, %c0_i32_0 : i32, i32, i32, i32
  }
  func.func @transform_1(%arg0: i32, %arg1: i32) -> (i32, i32, i32, i32) {
    %c16_i32 = arith.constant 16 : i32
    %0 = arith.muli %arg1, %c16_i32 : i32
    %c16_i32_0 = arith.constant 16 : i32
    %1 = arith.addi %0, %c16_i32_0 : i32
    %c0_i32 = arith.constant 0 : i32
    %c0_i32_1 = arith.constant 0 : i32
    %c0_i32_2 = arith.constant 0 : i32
    return %arg0, %1, %c0_i32, %c0_i32_1 : i32, i32, i32, i32
  }
  func.func @transform_2(%arg0: i32, %arg1: i32) -> (i32, i32, i32, i32) {
    %c16_i32 = arith.constant 16 : i32
    %0 = arith.muli %arg1, %c16_i32 : i32
    %c16_i32_0 = arith.constant 16 : i32
    %1 = arith.addi %0, %c16_i32_0 : i32
    %c1_i32 = arith.constant 1 : i32
    %2 = arith.addi %1, %c1_i32 : i32
    %c0_i32 = arith.constant 0 : i32
    %c0_i32_1 = arith.constant 0 : i32
    %c0_i32_2 = arith.constant 0 : i32
    return %arg0, %2, %c0_i32, %c0_i32_1 : i32, i32, i32, i32
  }
  func.func @transform_3(%arg0: i32, %arg1: i32) -> (i32, i32, i32, i32) {
    %c0_i32 = arith.constant 0 : i32
    %c0_i32_0 = arith.constant 0 : i32
    %c0_i32_1 = arith.constant 0 : i32
    %c0_i32_2 = arith.constant 0 : i32
    %c0_i32_3 = arith.constant 0 : i32
    return %c0_i32, %c0_i32_0, %c0_i32_1, %c0_i32_2 : i32, i32, i32, i32
  }
  func.func @transform_4(%arg0: i32, %arg1: i32) -> (i32, i32) {
    %c0_i32 = arith.constant 0 : i32
    %c0_i32_0 = arith.constant 0 : i32
    %c0_i32_1 = arith.constant 0 : i32
    return %c0_i32, %c0_i32_0 : i32, i32
  }
  func.func @transform_5(%arg0: i32, %arg1: i32) -> (i32, i32, i32, i32) {
    %c0_i32 = arith.constant 0 : i32
    %c0_i32_0 = arith.constant 0 : i32
    %c0_i32_1 = arith.constant 0 : i32
    return %arg0, %arg1, %c0_i32, %c0_i32_0 : i32, i32, i32, i32
  }
}

</mosaic_0001>

<llo_original>
// kernel: patch_attention_forward.2
$region0: #{patch_attention_forward.2}
  #allocation0 [shape = 'u32[]', space=smem, size = 0x4, offset = 0x4, fixed_abs, tag = 'smem constant byte address 0x4 - core index']
  #allocation1 [shape = 'u32[144,128]{1,0:T(1,128)}', space=vmem, size = 0x12000, scoped, tag = 'internal scratch']
  %s0 = inlined_call_operand.vmem [shape: f32[2,4,256], index: 0, kind: input, shape index: {}]
  %s1 = inlined_call_operand.vmem [shape: f32[4,64], index: 1, kind: input, shape index: {}]
  %s2 = inlined_call_operand.vmem [shape: f32[4,128], index: 2, kind: input, shape index: {}]
  %s3 = inlined_call_operand.vmem [shape: f32[1,128], index: 3, kind: input, shape index: {}]
  %s4 = inlined_call_operand.vmem [shape: f32[4,128], index: 4, kind: input, shape index: {}]
  %s5 = inlined_call_operand.vmem [shape: f32[1,128], index: 5, kind: input, shape index: {}]
  %s6 = inlined_call_operand.vmem [shape: f32[2,4,256], index: 6, kind: output, shape index: {}]
  %s7 = sld [smem:[#allocation0]]
  $region57: #{patch_attention_forward.2} parent=0
    _
  %s9 = ssub.s32 1, %s7
  %s10 = scalar_select 0, %s9, %s7
  loop: start=0, step=1, limit=4
  $region2: #{patch_attention_forward.2} parent=0 // loop_pre_header
    _
  $region3: #{patch_attention_forward.2} parent=0 // loop_header
    %s12 = sphi 0, %s16
    %p13 = scmp.ge.s32.totalorder %s12, 4
    %s22 = sphi 0, %s24
    %s25 = sphi 0, %s22
    %s26 = sphi 0, %s25
    %s42 = sphi 0, %s26
    %s46 = sphi 0, %s46
    %s48 = sphi 0, %s46
    %s49 = sphi 0, %s48
    %s63 = sphi 0, %s49
    %s67 = sphi 0, %s67
    %s69 = sphi 0, %s67
    %s70 = sphi 0, %s69
    %s84 = sphi 0, %s70
    %s88 = sphi 0, %s88
    %s90 = sphi 0, %s88
    %s91 = sphi 0, %s90
    %s105 = sphi 0, %s91
    %s109 = sphi 0, %s109
    %s111 = sphi 0, %s109
    %s112 = sphi 0, %s111
    %s126 = sphi 0, %s112
    %s130 = sphi 0, %s130
    %s132 = sphi 0, %s130
    %s133 = sphi 0, %s132
    %s147 = sphi 0, %s133
    %s153 = sphi 0, %s155
    %s156 = sphi 0, %s153
    %s157 = sphi 0, %s156
    %s173 = sphi 0, %s157
  $region4: #{patch_attention_forward.2} parent=0 // loop_header_branch
    %15 = sbr.rel (%p13) target = $region8
  $region5: #{patch_attention_forward.2} parent=0 // loop_body
    %s17 = ssub.s32 %s12, 1
    %s18 = ssub.s32 %s12, 2
    %s19 = sadd.s32 %s12, 1
    %s20 = ssub.s32 %s12, %s19
    %p21 = scmp.eq.s32.totalorder %s20, 0
    %s23 = sadd.s32 %s22, 1
    %s24 = scalar_select %p21, %s22, %s23
    %p27 = pneg %p21
    %p28 = scmp.eq.s32.totalorder %s12, 1
    %p29 = por %p27, %p28
    %p30 = scmp.ne.s32.totalorder %s22, %s25
    %p31 = scmp.eq.s32.totalorder %s12, 0
    %p32 = por %p30, %p31
    %p33 = scmp.ne.s32.totalorder %s22, %s25
    %p34 = scmp.eq.s32.totalorder %s17, 1
    %p35 = por %p33, %p34
    %p36 = scmp.ne.s32.totalorder %s25, %s26
    %p37 = scmp.eq.s32.totalorder %s17, 0
    %p38 = por %p36, %p37
    %p39 = scmp.ne.s32.totalorder %s25, %s26
    %p40 = scmp.eq.s32.totalorder %s18, 1
    %p41 = por %p39, %p40
    %p43 = scmp.ne.s32.totalorder %s26, %s42
    %p44 = scmp.eq.s32.totalorder %s18, 0
    %p45 = por %p43, %p44
    %s47 = sadd.s32 %s46, 1
    %p50 = scmp.eq.s32.totalorder %s12, 1
    %p51 = scmp.ne.s32.totalorder %s46, %s48
    %p52 = scmp.eq.s32.totalorder %s12, 0
    %p53 = por %p51, %p52
    %p54 = scmp.ne.s32.totalorder %s46, %s48
    %p55 = scmp.eq.s32.totalorder %s17, 1
    %p56 = por %p54, %p55
    %p57 = scmp.ne.s32.totalorder %s48, %s49
    %p58 = scmp.eq.s32.totalorder %s17, 0
    %p59 = por %p57, %p58
    %p60 = scmp.ne.s32.totalorder %s48, %s49
    %p61 = scmp.eq.s32.totalorder %s18, 1
    %p62 = por %p60, %p61
    %p64 = scmp.ne.s32.totalorder %s49, %s63
    %p65 = scmp.eq.s32.totalorder %s18, 0
    %p66 = por %p64, %p65
    %s68 = sadd.s32 %s67, 1
    %p71 = scmp.eq.s32.totalorder %s12, 1
    %p72 = scmp.ne.s32.totalorder %s67, %s69
    %p73 = scmp.eq.s32.totalorder %s12, 0
    %p74 = por %p72, %p73
    %p75 = scmp.ne.s32.totalorder %s67, %s69
    %p76 = scmp.eq.s32.totalorder %s17, 1
    %p77 = por %p75, %p76
    %p78 = scmp.ne.s32.totalorder %s69, %s70
    %p79 = scmp.eq.s32.totalorder %s17, 0
    %p80 = por %p78, %p79
    %p81 = scmp.ne.s32.totalorder %s69, %s70
    %p82 = scmp.eq.s32.totalorder %s18, 1
    %p83 = por %p81, %p82
    %p85 = scmp.ne.s32.totalorder %s70, %s84
    %p86 = scmp.eq.s32.totalorder %s18, 0
    %p87 = por %p85, %p86
    %s89 = sadd.s32 %s88, 1
    %p92 = scmp.eq.s32.totalorder %s12, 1
    %p93 = scmp.ne.s32.totalorder %s88, %s90
    %p94 = scmp.eq.s32.totalorder %s12, 0
    %p95 = por %p93, %p94
    %p96 = scmp.ne.s32.totalorder %s88, %s90
    %p97 = scmp.eq.s32.totalorder %s17, 1
    %p98 = por %p96, %p97
    %p99 = scmp.ne.s32.totalorder %s90, %s91
    %p100 = scmp.eq.s32.totalorder %s17, 0
    %p101 = por %p99, %p100
    %p102 = scmp.ne.s32.totalorder %s90, %s91
    %p103 = scmp.eq.s32.totalorder %s18, 1
    %p104 = por %p102, %p103
    %p106 = scmp.ne.s32.totalorder %s91, %s105
    %p107 = scmp.eq.s32.totalorder %s18, 0
    %p108 = por %p106, %p107
    %s110 = sadd.s32 %s109, 1
    %p113 = scmp.eq.s32.totalorder %s12, 1
    %p114 = scmp.ne.s32.totalorder %s109, %s111
    %p115 = scmp.eq.s32.totalorder %s12, 0
    %p116 = por %p114, %p115
    %p117 = scmp.ne.s32.totalorder %s109, %s111
    %p118 = scmp.eq.s32.totalorder %s17, 1
    %p119 = por %p117, %p118
    %p120 = scmp.ne.s32.totalorder %s111, %s112
    %p121 = scmp.eq.s32.totalorder %s17, 0
    %p122 = por %p120, %p121
    %p123 = scmp.ne.s32.totalorder %s111, %s112
    %p124 = scmp.eq.s32.totalorder %s18, 1
    %p125 = por %p123, %p124
    %p127 = scmp.ne.s32.totalorder %s112, %s126
    %p128 = scmp.eq.s32.totalorder %s18, 0
    %p129 = por %p127, %p128
    %s131 = sadd.s32 %s130, 1
    %p134 = scmp.eq.s32.totalorder %s12, 1
    %p135 = scmp.ne.s32.totalorder %s130, %s132
    %p136 = scmp.eq.s32.totalorder %s12, 0
    %p137 = por %p135, %p136
    %p138 = scmp.ne.s32.totalorder %s130, %s132
    %p139 = scmp.eq.s32.totalorder %s17, 1
    %p140 = por %p138, %p139
    %p141 = scmp.ne.s32.totalorder %s132, %s133
    %p142 = scmp.eq.s32.totalorder %s17, 0
    %p143 = por %p141, %p142
    %p144 = scmp.ne.s32.totalorder %s132, %s133
    %p145 = scmp.eq.s32.totalorder %s18, 1
    %p146 = por %p144, %p145
    %p148 = scmp.ne.s32.totalorder %s133, %s147
    %p149 = scmp.eq.s32.totalorder %s18, 0
    %p150 = por %p148, %p149
    %s151 = ssub.s32 %s12, %s19
    %p152 = scmp.eq.s32.totalorder %s151, 0
    %s154 = sadd.s32 %s153, 1
    %s155 = scalar_select %p152, %s153, %s154
    %p158 = pneg %p152
    %p159 = scmp.eq.s32.totalorder %s12, 1
    %p160 = por %p158, %p159
    %p161 = scmp.ne.s32.totalorder %s153, %s156
    %p162 = scmp.eq.s32.totalorder %s12, 0
    %p163 = por %p161, %p162
    %p164 = scmp.ne.s32.totalorder %s153, %s156
    %p165 = scmp.eq.s32.totalorder %s17, 1
    %p166 = por %p164, %p165
    %p167 = scmp.ne.s32.totalorder %s156, %s157
    %p168 = scmp.eq.s32.totalorder %s17, 0
    %p169 = por %p167, %p168
    %p170 = scmp.ne.s32.totalorder %s156, %s157
    %p171 = scmp.eq.s32.totalorder %s18, 1
    %p172 = por %p170, %p171
    %p174 = scmp.ne.s32.totalorder %s157, %s173
    %p175 = scmp.eq.s32.totalorder %s18, 0
    %p176 = por %p174, %p175
    %p177 = scmp.le.s32.totalorder 1, %s12
    %p178 = scmp.lt.s32.totalorder %s12, 3
    %p179 = pnand %p177, %p178
    %p180 = pneg %p179
    // Predicated region
    $region9: #{patch_attention_forward.2} parent=5 // pred_check
      _
    $region10: #{patch_attention_forward.2} parent=5 // pred_check_branch
      %182 = sbr.rel (%p179) target = $region12
    $region11: #{patch_attention_forward.2} parent=5 // pred_region
      %s183 = ssub.s32 %s12, 1
      // Predicated region
      $region13: #{patch_attention_forward.2} parent=11 // pred_check
        %p184 = pneg %p59
      $region14: #{patch_attention_forward.2} parent=11 // pred_check_branch
        %186 = sbr.rel (%p184) target = $region16
      $region15: #{patch_attention_forward.2} parent=11 // pred_region
        _
      $region16: #{patch_attention_forward.2} parent=11 // pred_fallthru
        _
      // Predicated region
      $region17: #{patch_attention_forward.2} parent=11 // pred_check
        %p187 = pneg %p80
      $region18: #{patch_attention_forward.2} parent=11 // pred_check_branch
        %189 = sbr.rel (%p187) target = $region20
      $region19: #{patch_attention_forward.2} parent=11 // pred_region
        _
      $region20: #{patch_attention_forward.2} parent=11 // pred_fallthru
        _
      // Predicated region
      $region21: #{patch_attention_forward.2} parent=11 // pred_check
        %p190 = pneg %p101
      $region22: #{patch_attention_forward.2} parent=11 // pred_check_branch
        %192 = sbr.rel (%p190) target = $region24
      $region23: #{patch_attention_forward.2} parent=11 // pred_region
        _
      $region24: #{patch_attention_forward.2} parent=11 // pred_fallthru
        _
      // Predicated region
      $region25: #{patch_attention_forward.2} parent=11 // pred_check
        %p193 = pneg %p122
      $region26: #{patch_attention_forward.2} parent=11 // pred_check_branch
        %195 = sbr.rel (%p193) target = $region28
      $region27: #{patch_attention_forward.2} parent=11 // pred_region
        _
      $region28: #{patch_attention_forward.2} parent=11 // pred_fallthru
        _
      // Predicated region
      $region29: #{patch_attention_forward.2} parent=11 // pred_check
        %p196 = pneg %p143
      $region30: #{patch_attention_forward.2} parent=11 // pred_check_branch
        %198 = sbr.rel (%p196) target = $region32
      $region31: #{patch_attention_forward.2} parent=11 // pred_region
        _
      $region32: #{patch_attention_forward.2} parent=11 // pred_fallthru
        _
    $region12: #{patch_attention_forward.2} parent=5 // pred_fallthru
      _
    %p199 = scmp.lt.s32.totalorder %s12, 2
    // Predicated region
    $region33: #{patch_attention_forward.2} parent=5 // pred_check
      %p200 = pneg %p199
    $region34: #{patch_attention_forward.2} parent=5 // pred_check_branch
      %202 = sbr.rel (%p200) target = $region36
    $region35: #{patch_attention_forward.2} parent=5 // pred_region
      // Predicated region
      $region37: #{patch_attention_forward.2} parent=35 // pred_check
        %p203 = pneg %p32
      $region38: #{patch_attention_forward.2} parent=35 // pred_check_branch
        %205 = sbr.rel (%p203) target = $region40
      $region39: #{patch_attention_forward.2} parent=35 // pred_region
        %p206 = scmp.lt.s32.totalorder %s12, 1
        %s207 = scalar_select %p206, %s12, 1
        %s208 = smul.addr %s207, 2
        %s209 = smul.addr %s208, 4
        %s210 = scalar_lea.vmem %s0, %s209
      $region40: #{patch_attention_forward.2} parent=35 // pred_fallthru
        _
    $region36: #{patch_attention_forward.2} parent=5 // pred_fallthru
      _
    %p211 = scmp.le.s32.totalorder 1, %s12
    %p212 = scmp.lt.s32.totalorder %s12, 3
    %p213 = pnand %p211, %p212
    %p214 = pneg %p213
    // Predicated region
    $region41: #{patch_attention_forward.2} parent=5 // pred_check
      _
    $region42: #{patch_attention_forward.2} parent=5 // pred_check_branch
      %216 = sbr.rel (%p213) target = $region44
    $region43: #{patch_attention_forward.2} parent=5 // pred_region
      %s217 = ssub.s32 %s12, 1
      %p218 = scmp.lt.s32.totalorder %s17, 1
      %s219 = scalar_select %p218, %s17, 1
      %s220 = smul.addr %s219, 2
      %s221 = smul.addr %s220, 4
      %s222 = scalar_lea.vmem %s0, %s221
      %p223 = pneg %p38
      %p224 = pneg %p35
      %p225 = pneg %p59
      %p226 = pneg %p56
      %p227 = pneg %p80
      %p228 = pneg %p77
      %p229 = pneg %p101
      %p230 = pneg %p98
      %p231 = pneg %p122
      %p232 = pneg %p119
      %p233 = pneg %p143
      %p234 = pneg %p140
      %p235 = pneg %p169
      %p236 = pneg %p166
      %p237 = scmp.lt.s32.totalorder %s17, 1
      %s238 = scalar_select %p237, %s17, 1
      %s239 = smul.addr %s238, 2
      %s240 = smul.addr %s239, 4
      %s241 = scalar_lea.vmem %s6, %s240
      %p242 = scmp.lt.s32.totalorder %s17, 1
      %s243 = scalar_select %p242, %s17, 1
      %s244 = smul.addr %s243, 2
      %s245 = smul.addr %s244, 4
      %s246 = scalar_lea.vmem %s0, %s245
      %p247 = scmp.lt.s32.totalorder %s17, 1
      %s248 = scalar_select %p247, %s17, 1
      %s249 = smul.addr %s248, 2
      %s250 = smul.addr %s249, 4
      %s251 = scalar_lea.vmem %s6, %s250
      %v252 = vld [vmem:[%s246] sm:$0xff]
      %v254 = vrot.slane %v252, 4
      %256 = vrot.lane.b32.xlu0 %v252, 64
      %v257 = vpop.permute.xlu0 %256
      %v258 = vrot.slane %v257, 4
      %v261 = vcombine.low %v252, %v254
      %v263 = vunpack.c.l.s4 1983009808
      %v264 = vunpack.c.0.s8 %v263
      %v265 = vlaneseq
      %v266 = vshrl.u32 %v265, 7
      %v267 = vsub.s32 %v264, %v266
      %v268 = vrot.slane %v261, %v267
      %v269 = vcombine.low %v257, %v258
      %v271 = vunpack.c.l.s4 1983009808
      %v272 = vunpack.c.0.s8 %v271
      %v273 = vlaneseq
      %v274 = vshrl.u32 %v273, 7
      %v275 = vsub.s32 %v272, %v274
      %v276 = vrot.slane %v269, %v275
      %v277 = vcombine.low %v268, %v276
      %v278 = vcombine.high %v268, %v276
      %v280 = vunpack.c.l.s4 1934713408
      %v281 = vunpack.c.0.s8 %v280
      %v282 = vlaneseq
      %v283 = vshrl.u32 %v282, 7
      %v284 = vsub.s32 %v281, %v283
      %v285 = vrot.slane %v277, %v284
      %v287 = vunpack.c.l.s4 1934713408
      %v288 = vunpack.c.0.s8 %v287
      %v289 = vlaneseq
      %v290 = vshrl.u32 %v289, 7
      %v291 = vsub.s32 %v288, %v290
      %v292 = vrot.slane %v278, %v291
      %v293 = vcombine.high %v285, 0.0
      %v294 = vcombine.high %v292, 0.0
      %v295 = vld [vmem:[%s1] sm:$0xf]
      %v298 = vunpack.c.l.s4 1966171168
      %v299 = vunpack.c.0.s8 %v298
      %v300 = vlaneseq
      %v301 = vshrl.u32 %v300, 7
      %v302 = vsub.s32 %v299, %v301
      %v303 = vrot.slane %v295, %v302
      %v304 = vcombine.high %v303, %v303
      %v306 = vunpack.c.l.s4 1966171168
      %v307 = vunpack.c.0.s8 %v306
      %v308 = vlaneseq
      %v309 = vshrl.u32 %v308, 7
      %v310 = vsub.s32 %v307, %v309
      %v311 = vrot.slane %v303, %v310
      %v313 = vunpack.c.l.s4 1966171168
      %v314 = vunpack.c.0.s8 %v313
      %v315 = vlaneseq
      %v316 = vshrl.u32 %v315, 7
      %v317 = vsub.s32 %v314, %v316
      %v318 = vrot.slane %v304, %v317
      %v319 = vcombine.high %v311, %v311
      %v320 = vcombine.high %v318, %v318
      %v321 = vlaneseq
      %v322 = vshrl.u32 %v321, 7
      %v323 = vsub.s32 0, %v322
      %v324 = vrot.slane %v311, %v323
      %v325 = vlaneseq
      %v326 = vshrl.u32 %v325, 7
      %v327 = vsub.s32 0, %v326
      %v328 = vrot.slane %v318, %v327
      %v329 = vlaneseq
      %v330 = vshrl.u32 %v329, 7
      %v331 = vsub.s32 0, %v330
      %v332 = vrot.slane %v319, %v331
      %v333 = vlaneseq
      %v334 = vshrl.u32 %v333, 7
      %v335 = vsub.s32 0, %v334
      %v336 = vrot.slane %v320, %v335
      %v341 = vmul.f32 %v285, %v324
      %v342 = vmul.f32 %v293, %v328
      %v343 = vmul.f32 %v292, %v332
      %v344 = vmul.f32 %v294, %v336
      %vm345 = vcmask 519168
      %v346 = vsel %vm345, %v341, 0.0
      %347 = vadd.xlane.f32.xlu0 %v346
      %v348 = vpop.xlane.xlu0 %347
      %v349 = vsel %vm345, %v342, 0.0
      %350 = vadd.xlane.f32.xlu0 %v349
      %v351 = vpop.xlane.xlu0 %350
      %v352 = vsel %vm345, %v343, 0.0
      %353 = vadd.xlane.f32.xlu0 %v352
      %v354 = vpop.xlane.xlu0 %353
      %v355 = vsel %vm345, %v344, 0.0
      %356 = vadd.xlane.f32.xlu0 %v355
      %v357 = vpop.xlane.xlu0 %356
      %v358 = vmax.f32 %v348, 0.0
      %v359 = vmax.f32 %v351, 0.0
      %v360 = vmax.f32 %v354, 0.0
      %v361 = vmax.f32 %v357, 0.0
      %v362 = vld [vmem:[%s2] sm:$0xf]
      %v363 = vld [vmem:[%s3] sm:$0x1]
      %v365 = vlaneseq
      %v366 = vshrl.u32 %v365, 7
      %v367 = vsub.s32 0, %v366
      %v368 = vrot.slane %v363, %v367
      %v374 = vlaneseq
      %v375 = vand.u32 %v374, 127
      %v376 = vlaneseq
      %v377 = vshrl.u32 %v376, 7
      %v378 = vsub.s32 %v375, %v377
      %v379 = vrot.slane %v358, %v378
      %v380 = vlaneseq
      %v381 = vshrl.u32 %v380, 7
      %v382 = vsub.s32 %v375, %v381
      %v383 = vrot.slane %v359, %v382
      %v384 = vlaneseq
      %v385 = vshrl.u32 %v384, 7
      %v386 = vsub.s32 %v375, %v385
      %v387 = vrot.slane %v360, %v386
      %v388 = vlaneseq
      %v389 = vshrl.u32 %v388, 7
      %v390 = vsub.s32 %v375, %v389
      %v391 = vrot.slane %v361, %v390
      %vm392 = vcmask 1041409
      %v393 = vsel %vm392, %v383, %v379
      %vm394 = vcmask 1042434
      %v395 = vsel %vm394, %v387, %v393
      %vm396 = vcmask 1043459
      %v397 = vsel %vm396, %v391, %v395
      %vm398 = vcmask 31744
      %v399 = vsel %vm398, %v397, 0
      %vm401 = vcmask 1043456
      %v403 = vsel %vm401, %v362, 0
      %405 = vmatprep.subr.mxu0 0.0
      %406 = vmatpush1.msra.mxu0 %v403
      %407 = vmatprep.subr.mxu0 0.0
      %408 = vmatpush1.msra.mxu0 0.0
      %409 = vmatprep.subr.mxu0 0.0
      %410 = vmatpush1.msra.mxu0 0.0
      %411 = vmatprep.subr.mxu0 0.0
      %412 = vmatpush1.msra.mxu0 0.0
      %413 = vmatprep.subr.mxu0 0.0
      %414 = vmatpush1.msra.mxu0 0.0
      %415 = vmatprep.subr.mxu0 0.0
      %416 = vmatpush1.msra.mxu0 0.0
      %417 = vmatprep.subr.mxu0 0.0
      %418 = vmatpush1.msra.mxu0 0.0
      %419 = vmatprep.subr.mxu0 0.0
      %420 = vmatpush1.msra.mxu0 0.0
      %421 = vmatprep.subr.mxu0 0.0
      %422 = vmatpush1.msra.mxu0 0.0
      %423 = vmatprep.subr.mxu0 0.0
      %424 = vmatpush1.msra.mxu0 0.0
      %425 = vmatprep.subr.mxu0 0.0
      %426 = vmatpush1.msra.mxu0 0.0
      %427 = vmatprep.subr.mxu0 0.0
      %428 = vmatpush1.msra.mxu0 0.0
      %429 = vmatprep.subr.mxu0 0.0
      %430 = vmatpush1.msra.mxu0 0.0
      %431 = vmatprep.subr.mxu0 0.0
      %432 = vmatpush1.msra.mxu0 0.0
      %433 = vmatprep.subr.mxu0 0.0
      %434 = vmatpush1.msra.mxu0 0.0
      %435 = vmatprep.subr.mxu0 0.0
      %436 = vmatpush1.msra.mxu0 0.0
      %437 = vmatprep.subr.mxu0 0.0
      %438 = vmatpush1.msra.mxu0 0.0
      %439 = vmatprep.subr.mxu0 0.0
      %440 = vmatpush1.msra.mxu0 0.0
      %441 = vmatprep.subr.mxu0 0.0
      %442 = vmatpush1.msra.mxu0 0.0
      %443 = vmatprep.subr.mxu0 0.0
      %444 = vmatpush1.msra.mxu0 0.0
      %445 = vmatprep.subr.mxu0 0.0
      %446 = vmatpush1.msra.mxu0 0.0
      %447 = vmatprep.subr.mxu0 0.0
      %448 = vmatpush1.msra.mxu0 0.0
      %449 = vmatprep.subr.mxu0 0.0
      %450 = vmatpush1.msra.mxu0 0.0
      %451 = vmatprep.subr.mxu0 0.0
      %452 = vmatpush1.msra.mxu0 0.0
      %453 = vmatprep.subr.mxu0 0.0
      %454 = vmatpush1.msra.mxu0 0.0
      %455 = vmatprep.subr.mxu0 0.0
      %456 = vmatpush1.msra.mxu0 0.0
      %457 = vmatprep.subr.mxu0 0.0
      %458 = vmatpush1.msra.mxu0 0.0
      %459 = vmatprep.subr.mxu0 0.0
      %460 = vmatpush1.msra.mxu0 0.0
      %461 = vmatprep.subr.mxu0 0.0
      %462 = vmatpush1.msra.mxu0 0.0
      %463 = vmatprep.subr.mxu0 0.0
      %464 = vmatpush1.msra.mxu0 0.0
      %465 = vmatprep.subr.mxu0 0.0
      %466 = vmatpush1.msra.mxu0 0.0
      %467 = vmatprep.subr.mxu0 0.0
      %468 = vmatpush1.msra.mxu0 0.0
      %469 = vmatprep.mubr.f32.mxu0 0.0
      %470 = vmatmul.mubr.f32.gmra.mrb[0].mxu0 %v399
      %v471 = vpop.f32.mrb[0].mxu0
      %v472 = vadd.f32 %v368, %v471
      %v473 = vpop.f32.mrb[0].mxu0
      %474 = vdwg.mxu0
      %v475 = vld [vmem:[%s4] sm:$0xf]
      %v476 = vld [vmem:[%s5] sm:$0x1]
      %v478 = vlaneseq
      %v479 = vshrl.u32 %v478, 7
      %v480 = vsub.s32 0, %v479
      %v481 = vrot.slane %v476, %v480
      %v484 = vsel %vm401, %v475, 0
      %486 = vmatprep.subr.mxu0 0.0
      %487 = vmatpush1.msra.mxu0 %v484
      %488 = vmatprep.subr.mxu0 0.0
      %489 = vmatpush1.msra.mxu0 0.0
      %490 = vmatprep.subr.mxu0 0.0
      %491 = vmatpush1.msra.mxu0 0.0
      %492 = vmatprep.subr.mxu0 0.0
      %493 = vmatpush1.msra.mxu0 0.0
      %494 = vmatprep.subr.mxu0 0.0
      %495 = vmatpush1.msra.mxu0 0.0
      %496 = vmatprep.subr.mxu0 0.0
      %497 = vmatpush1.msra.mxu0 0.0
      %498 = vmatprep.subr.mxu0 0.0
      %499 = vmatpush1.msra.mxu0 0.0
      %500 = vmatprep.subr.mxu0 0.0
      %501 = vmatpush1.msra.mxu0 0.0
      %502 = vmatprep.subr.mxu0 0.0
      %503 = vmatpush1.msra.mxu0 0.0
      %504 = vmatprep.subr.mxu0 0.0
      %505 = vmatpush1.msra.mxu0 0.0
      %506 = vmatprep.subr.mxu0 0.0
      %507 = vmatpush1.msra.mxu0 0.0
      %508 = vmatprep.subr.mxu0 0.0
      %509 = vmatpush1.msra.mxu0 0.0
      %510 = vmatprep.subr.mxu0 0.0
      %511 = vmatpush1.msra.mxu0 0.0
      %512 = vmatprep.subr.mxu0 0.0
      %513 = vmatpush1.msra.mxu0 0.0
      %514 = vmatprep.subr.mxu0 0.0
      %515 = vmatpush1.msra.mxu0 0.0
      %516 = vmatprep.subr.mxu0 0.0
      %517 = vmatpush1.msra.mxu0 0.0
      %518 = vmatprep.subr.mxu0 0.0
      %519 = vmatpush1.msra.mxu0 0.0
      %520 = vmatprep.subr.mxu0 0.0
      %521 = vmatpush1.msra.mxu0 0.0
      %522 = vmatprep.subr.mxu0 0.0
      %523 = vmatpush1.msra.mxu0 0.0
      %524 = vmatprep.subr.mxu0 0.0
      %525 = vmatpush1.msra.mxu0 0.0
      %526 = vmatprep.subr.mxu0 0.0
      %527 = vmatpush1.msra.mxu0 0.0
      %528 = vmatprep.subr.mxu0 0.0
      %529 = vmatpush1.msra.mxu0 0.0
      %530 = vmatprep.subr.mxu0 0.0
      %531 = vmatpush1.msra.mxu0 0.0
      %532 = vmatprep.subr.mxu0 0.0
      %533 = vmatpush1.msra.mxu0 0.0
      %534 = vmatprep.subr.mxu0 0.0
      %535 = vmatpush1.msra.mxu0 0.0
      %536 = vmatprep.subr.mxu0 0.0
      %537 = vmatpush1.msra.mxu0 0.0
      %538 = vmatprep.subr.mxu0 0.0
      %539 = vmatpush1.msra.mxu0 0.0
      %540 = vmatprep.subr.mxu0 0.0
      %541 = vmatpush1.msra.mxu0 0.0
      %542 = vmatprep.subr.mxu0 0.0
      %543 = vmatpush1.msra.mxu0 0.0
      %544 = vmatprep.subr.mxu0 0.0
      %545 = vmatpush1.msra.mxu0 0.0
      %546 = vmatprep.subr.mxu0 0.0
      %547 = vmatpush1.msra.mxu0 0.0
      %548 = vmatprep.subr.mxu0 0.0
      %549 = vmatpush1.msra.mxu0 0.0
      %550 = vmatprep.mubr.f32.mxu0 0.0
      %551 = vmatmul.mubr.f32.gmra.mrb[0].mxu0 %v399
      %v552 = vpop.f32.mrb[0].mxu0
      %v553 = vadd.f32 %v481, %v552
      %v554 = vpop.f32.mrb[0].mxu0
      %555 = vdwg.mxu0
      %556 = vmatprep.subr.mxu0 0.0
      %557 = vmatpush1.xpose.msra.mxu0 %v553
      %558 = vmatprep.subr.mxu0 0.0
      %559 = vmatpush1.xpose.msra.mxu0 0.0
      %560 = vmatprep.subr.mxu0 0.0
      %561 = vmatpush1.xpose.msra.mxu0 0.0
      %562 = vmatprep.subr.mxu0 0.0
      %563 = vmatpush1.xpose.msra.mxu0 0.0
      %564 = vmatprep.subr.mxu0 0.0
      %565 = vmatpush1.xpose.msra.mxu0 0.0
      %566 = vmatprep.subr.mxu0 0.0
      %567 = vmatpush1.xpose.msra.mxu0 0.0
      %568 = vmatprep.subr.mxu0 0.0
      %569 = vmatpush1.xpose.msra.mxu0 0.0
      %570 = vmatprep.subr.mxu0 0.0
      %571 = vmatpush1.xpose.msra.mxu0 0.0
      %572 = vmatprep.subr.mxu0 0.0
      %573 = vmatpush1.xpose.msra.mxu0 0.0
      %574 = vmatprep.subr.mxu0 0.0
      %575 = vmatpush1.xpose.msra.mxu0 0.0
      %576 = vmatprep.subr.mxu0 0.0
      %577 = vmatpush1.xpose.msra.mxu0 0.0
      %578 = vmatprep.subr.mxu0 0.0
      %579 = vmatpush1.xpose.msra.mxu0 0.0
      %580 = vmatprep.subr.mxu0 0.0
      %581 = vmatpush1.xpose.msra.mxu0 0.0
      %582 = vmatprep.subr.mxu0 0.0
      %583 = vmatpush1.xpose.msra.mxu0 0.0
      %584 = vmatprep.subr.mxu0 0.0
      %585 = vmatpush1.xpose.msra.mxu0 0.0
      %586 = vmatprep.subr.mxu0 0.0
      %587 = vmatpush1.xpose.msra.mxu0 0.0
      %588 = vmatprep.subr.mxu0 0.0
      %589 = vmatpush1.xpose.msra.mxu0 0.0
      %590 = vmatprep.subr.mxu0 0.0
      %591 = vmatpush1.xpose.msra.mxu0 0.0
      %592 = vmatprep.subr.mxu0 0.0
      %593 = vmatpush1.xpose.msra.mxu0 0.0
      %594 = vmatprep.subr.mxu0 0.0
      %595 = vmatpush1.xpose.msra.mxu0 0.0
      %596 = vmatprep.subr.mxu0 0.0
      %597 = vmatpush1.xpose.msra.mxu0 0.0
      %598 = vmatprep.subr.mxu0 0.0
      %599 = vmatpush1.xpose.msra.mxu0 0.0
      %600 = vmatprep.subr.mxu0 0.0
      %601 = vmatpush1.xpose.msra.mxu0 0.0
      %602 = vmatprep.subr.mxu0 0.0
      %603 = vmatpush1.xpose.msra.mxu0 0.0
      %604 = vmatprep.subr.mxu0 0.0
      %605 = vmatpush1.xpose.msra.mxu0 0.0
      %606 = vmatprep.subr.mxu0 0.0
      %607 = vmatpush1.xpose.msra.mxu0 0.0
      %608 = vmatprep.subr.mxu0 0.0
      %609 = vmatpush1.xpose.msra.mxu0 0.0
      %610 = vmatprep.subr.mxu0 0.0
      %611 = vmatpush1.xpose.msra.mxu0 0.0
      %612 = vmatprep.subr.mxu0 0.0
      %613 = vmatpush1.xpose.msra.mxu0 0.0
      %614 = vmatprep.subr.mxu0 0.0
      %615 = vmatpush1.xpose.msra.mxu0 0.0
      %616 = vmatprep.subr.mxu0 0.0
      %617 = vmatpush1.xpose.msra.mxu0 0.0
      %618 = vmatprep.subr.mxu0 0.0
      %619 = vmatpush1.xpose.msra.mxu0 0.0
      %620 = vmatprep.mubr.f32.mxu0 0.0
      %621 = vmatmul.mubr.f32.gmra.mrb[0].mxu0 %v472
      %v622 = vpop.f32.mrb[0].mxu0
      %v623 = vadd.f32 0.0, %v622
      %v624 = vpop.f32.mrb[0].mxu0
      %625 = vdwg.mxu0
      %v626 = vmul.f32 %v623, 0.5
      %vm627 = vcmask 27648
      %v628 = vsel %vm627, %v626, -inf
      %629 = vmax.xlane.f32.xlu0 %v628
      %v630 = vpop.xlane.xlu0 %629
      %v631 = vsub.f32 %v626, %v630
      %v632 = vmul.f32 %v631, 1.442695
      %v633 = vpow.pop %v632
      %v634 = vsel %vm627, %v633, 0.0
      %635 = vadd.xlane.f32.xlu0 %v634
      %v636 = vpop.xlane.xlu0 %635
      %v637 = vrcp.pop %v636
      %v638 = vmul.f32 %v633, %v637
      %v639 = vcombine.high %v252, %v252
      %v641 = vsel %vm398, %v638, 0
      %v643 = vsel %vm401, %v252, 0
      %v645 = vsel %vm401, %v639, 0
      %647 = vmatprep.subr.mxu0 %v645
      %648 = vmatpush1.msra.mxu0 %v643
      %649 = vmatprep.subr.mxu0 0.0
      %650 = vmatpush1.msra.mxu0 0.0
      %651 = vmatprep.subr.mxu0 0.0
      %652 = vmatpush1.msra.mxu0 0.0
      %653 = vmatprep.subr.mxu0 0.0
      %654 = vmatpush1.msra.mxu0 0.0
      %655 = vmatprep.subr.mxu0 0.0
      %656 = vmatpush1.msra.mxu0 0.0
      %657 = vmatprep.subr.mxu0 0.0
      %658 = vmatpush1.msra.mxu0 0.0
      %659 = vmatprep.subr.mxu0 0.0
      %660 = vmatpush1.msra.mxu0 0.0
      %661 = vmatprep.subr.mxu0 0.0
      %662 = vmatpush1.msra.mxu0 0.0
      %663 = vmatprep.subr.mxu0 0.0
      %664 = vmatpush1.msra.mxu0 0.0
      %665 = vmatprep.subr.mxu0 0.0
      %666 = vmatpush1.msra.mxu0 0.0
      %667 = vmatprep.subr.mxu0 0.0
      %668 = vmatpush1.msra.mxu0 0.0
      %669 = vmatprep.subr.mxu0 0.0
      %670 = vmatpush1.msra.mxu0 0.0
      %671 = vmatprep.subr.mxu0 0.0
      %672 = vmatpush1.msra.mxu0 0.0
      %673 = vmatprep.subr.mxu0 0.0
      %674 = vmatpush1.msra.mxu0 0.0
      %675 = vmatprep.subr.mxu0 0.0
      %676 = vmatpush1.msra.mxu0 0.0
      %677 = vmatprep.subr.mxu0 0.0
      %678 = vmatpush1.msra.mxu0 0.0
      %679 = vmatprep.subr.mxu0 0.0
      %680 = vmatpush1.msra.mxu0 0.0
      %681 = vmatprep.subr.mxu0 0.0
      %682 = vmatpush1.msra.mxu0 0.0
      %683 = vmatprep.subr.mxu0 0.0
      %684 = vmatpush1.msra.mxu0 0.0
      %685 = vmatprep.subr.mxu0 0.0
      %686 = vmatpush1.msra.mxu0 0.0
      %687 = vmatprep.subr.mxu0 0.0
      %688 = vmatpush1.msra.mxu0 0.0
      %689 = vmatprep.subr.mxu0 0.0
      %690 = vmatpush1.msra.mxu0 0.0
      %691 = vmatprep.subr.mxu0 0.0
      %692 = vmatpush1.msra.mxu0 0.0
      %693 = vmatprep.subr.mxu0 0.0
      %694 = vmatpush1.msra.mxu0 0.0
      %695 = vmatprep.subr.mxu0 0.0
      %696 = vmatpush1.msra.mxu0 0.0
      %697 = vmatprep.subr.mxu0 0.0
      %698 = vmatpush1.msra.mxu0 0.0
      %699 = vmatprep.subr.mxu0 0.0
      %700 = vmatpush1.msra.mxu0 0.0
      %701 = vmatprep.subr.mxu0 0.0
      %702 = vmatpush1.msra.mxu0 0.0
      %703 = vmatprep.subr.mxu0 0.0
      %704 = vmatpush1.msra.mxu0 0.0
      %705 = vmatprep.subr.mxu0 0.0
      %706 = vmatpush1.msra.mxu0 0.0
      %707 = vmatprep.subr.mxu0 0.0
      %708 = vmatpush1.msra.mxu0 0.0
      %709 = vmatprep.subr.mxu0 0.0
      %710 = vmatpush1.msra.mxu0 0.0
      %711 = vmatprep.mubr.f32.mxu0 0.0
      %712 = vmatmul.mubr.f32.gmra.mrb[0].mxu0 %v641
      %v713 = vpop.f32.mrb[0].mxu0
      %v714 = vadd.f32 0.0, %v713
      %v715 = vpop.f32.mrb[0].mxu0
      %v716 = vadd.f32 0.0, %v715
      %717 = vdwg.mxu0
      %v720 = vcombine.low %v714, %v716
      %722 = vst [vmem:[%s251] sm:$0xff] %v720
      %p723 = scmp.lt.s32.totalorder %s17, 1
      %s724 = scalar_select %p723, %s17, 1
      %s725 = smul.addr %s724, 2
      %s726 = smul.addr %s725, 4
      %s727 = scalar_lea.vmem %s6, %s726
      // Predicated region
      $region45: #{patch_attention_forward.2} parent=43 // pred_check
        %p728 = pneg %p166
      $region46: #{patch_attention_forward.2} parent=43 // pred_check_branch
        %730 = sbr.rel (%p728) target = $region48
      $region47: #{patch_attention_forward.2} parent=43 // pred_region
        _
      $region48: #{patch_attention_forward.2} parent=43 // pred_fallthru
        _
    $region44: #{patch_attention_forward.2} parent=5 // pred_fallthru
      _
    %p731 = scmp.le.s32.totalorder 2, %s12
    // Predicated region
    $region49: #{patch_attention_forward.2} parent=5 // pred_check
      %p732 = pneg %p731
    $region50: #{patch_attention_forward.2} parent=5 // pred_check_branch
      %734 = sbr.rel (%p732) target = $region52
    $region51: #{patch_attention_forward.2} parent=5 // pred_region
      %s735 = ssub.s32 %s12, 2
      // Predicated region
      $region53: #{patch_attention_forward.2} parent=51 // pred_check
        %p736 = pneg %p172
      $region54: #{patch_attention_forward.2} parent=51 // pred_check_branch
        %738 = sbr.rel (%p736) target = $region56
      $region55: #{patch_attention_forward.2} parent=51 // pred_region
        %p739 = scmp.lt.s32.totalorder %s18, 1
        %s740 = scalar_select %p739, %s18, 1
        %s741 = smul.addr %s740, 2
        %s742 = smul.addr %s741, 4
        %s743 = scalar_lea.vmem %s6, %s742
      $region56: #{patch_attention_forward.2} parent=51 // pred_fallthru
        _
    $region52: #{patch_attention_forward.2} parent=5 // pred_fallthru
      _
  $region6: #{patch_attention_forward.2} parent=0 // loop_footer
    %s16 = sadd.s32 1, %s12
  $region7: #{patch_attention_forward.2} parent=0 // loop_footer_branch
    %11 = sbr.rel target = $region3
  $region8: #{patch_attention_forward.2} parent=0 // loop_exit
    _

// kernel: patch_attention_forward.3
$region0: #{patch_attention_forward.3}
  #allocation0 [shape = 'u32[]', space=smem, size = 0x4, offset = 0x4, fixed_abs, tag = 'smem constant byte address 0x4 - core index']
  #allocation1 [shape = 'u32[144,128]{1,0:T(1,128)}', space=vmem, size = 0x12000, scoped, tag = 'internal scratch']
  #allocation2 [shape = 'f32[18,18,4]{2,1,0:T(8,128)}', space=vmem, size = 0x36000, scoped, tag = 'scratch operand']
  %s0 = inlined_call_operand.vmem [shape: f32[2,18,18,4], index: 0, kind: input, shape index: {}, may-alias: {0,1,2}]
  %s1 = inlined_call_operand.vmem [shape: f32[2,18,18,4], index: 1, kind: input, shape index: {}, may-alias: {0,1,2}]
  %s2 = inlined_call_operand.vmem [shape: f32[2,18,18,4], index: 2, kind: input, shape index: {}, may-alias: {0,1,2}]
  %s3 = inlined_call_operand.vmem [shape: f32[3,3,4,128], index: 3, kind: input, shape index: {}]
  %s4 = inlined_call_operand.vmem [shape: f32[1,128], index: 4, kind: input, shape index: {}]
  %s5 = inlined_call_operand.vmem [shape: f32[2,16,16,128], index: 5, kind: output, shape index: {}]
  %s6 = sld [smem:[#allocation0]]
  $region53: #{patch_attention_forward.3} parent=0
    _
  %s8 = ssub.s32 1, %s6
  %s9 = scalar_select 0, %s8, %s6
  loop: start=0, step=1, limit=4
  $region2: #{patch_attention_forward.3} parent=0 // loop_pre_header
    _
  $region3: #{patch_attention_forward.3} parent=0 // loop_header
    %s11 = sphi 0, %s15
    %p12 = scmp.ge.s32.totalorder %s11, 4
    %s18 = sphi 0, %s30
    %s19 = sphi 0, %s26
    %s20 = sphi 0, %s18
    %s21 = sphi 0, %s19
    %s22 = sphi 0, %s20
    %s23 = sphi 0, %s21
    %s35 = sphi 0, %s37
    %s38 = sphi 0, %s35
    %s39 = sphi 0, %s38
    %s55 = sphi 0, %s39
    %s67 = sphi 0, %s69
    %s70 = sphi 0, %s67
    %s71 = sphi 0, %s70
    %s87 = sphi 0, %s71
    %s99 = sphi 0, %s101
    %s102 = sphi 0, %s99
    %s103 = sphi 0, %s102
    %s119 = sphi 0, %s103
    %s123 = sphi 0, %s123
    %s125 = sphi 0, %s123
    %s126 = sphi 0, %s125
    %s140 = sphi 0, %s126
    %s144 = sphi 0, %s144
    %s146 = sphi 0, %s144
    %s147 = sphi 0, %s146
    %s161 = sphi 0, %s147
    %s169 = sphi 0, %s171
    %s172 = sphi 0, %s169
    %s173 = sphi 0, %s172
    %s189 = sphi 0, %s173
  $region4: #{patch_attention_forward.3} parent=0 // loop_header_branch
    %14 = sbr.rel (%p12) target = $region8
  $region5: #{patch_attention_forward.3} parent=0 // loop_body
    %s16 = ssub.s32 %s11, 1
    %s17 = ssub.s32 %s11, 2
    %s24 = sadd.s32 1, %s19
    %p25 = scmp.ge.s32.totalorder %s24, 1
    %s26 = scalar_select %p25, 0, %s24
    %s27 = sadd.s32 1, %s18
    %s28 = scalar_select %p25, %s27, %s18
    %p29 = scmp.ge.s32.totalorder %s28, 2
    %s30 = scalar_select %p29, 0, %s28
    %s31 = ssub.s32 %s18, %s30
    %s32 = ssub.s32 %s19, %s26
    %s33 = sor.u32 %s31, %s32
    %p34 = scmp.eq.s32.totalorder %s33, 0
    %s36 = sadd.s32 %s35, 1
    %s37 = scalar_select %p34, %s35, %s36
    %p40 = pneg %p34
    %p41 = scmp.eq.s32.totalorder %s11, 1
    %p42 = por %p40, %p41
    %p43 = scmp.ne.s32.totalorder %s35, %s38
    %p44 = scmp.eq.s32.totalorder %s11, 0
    %p45 = por %p43, %p44
    %p46 = scmp.ne.s32.totalorder %s35, %s38
    %p47 = scmp.eq.s32.totalorder %s16, 1
    %p48 = por %p46, %p47
    %p49 = scmp.ne.s32.totalorder %s38, %s39
    %p50 = scmp.eq.s32.totalorder %s16, 0
    %p51 = por %p49, %p50
    %p52 = scmp.ne.s32.totalorder %s38, %s39
    %p53 = scmp.eq.s32.totalorder %s17, 1
    %p54 = por %p52, %p53
    %p56 = scmp.ne.s32.totalorder %s39, %s55
    %p57 = scmp.eq.s32.totalorder %s17, 0
    %p58 = por %p56, %p57
    %s59 = smul.u32 %s19, 16
    %s60 = sadd.s32 %s59, 16
    %s61 = smul.u32 %s26, 16
    %s62 = sadd.s32 %s61, 16
    %s63 = ssub.s32 %s18, %s30
    %s64 = ssub.s32 %s60, %s62
    %s65 = sor.u32 %s63, %s64
    %p66 = scmp.eq.s32.totalorder %s65, 0
    %s68 = sadd.s32 %s67, 1
    %s69 = scalar_select %p66, %s67, %s68
    %p72 = pneg %p66
    %p73 = scmp.eq.s32.totalorder %s11, 1
    %p74 = por %p72, %p73
    %p75 = scmp.ne.s32.totalorder %s67, %s70
    %p76 = scmp.eq.s32.totalorder %s11, 0
    %p77 = por %p75, %p76
    %p78 = scmp.ne.s32.totalorder %s67, %s70
    %p79 = scmp.eq.s32.totalorder %s16, 1
    %p80 = por %p78, %p79
    %p81 = scmp.ne.s32.totalorder %s70, %s71
    %p82 = scmp.eq.s32.totalorder %s16, 0
    %p83 = por %p81, %p82
    %p84 = scmp.ne.s32.totalorder %s70, %s71
    %p85 = scmp.eq.s32.totalorder %s17, 1
    %p86 = por %p84, %p85
    %p88 = scmp.ne.s32.totalorder %s71, %s87
    %p89 = scmp.eq.s32.totalorder %s17, 0
    %p90 = por %p88, %p89
    %s91 = smul.u32 %s19, 16
    %s92 = sadd.s32 %s91, 17
    %s93 = smul.u32 %s26, 16
    %s94 = sadd.s32 %s93, 17
    %s95 = ssub.s32 %s18, %s30
    %s96 = ssub.s32 %s92, %s94
    %s97 = sor.u32 %s95, %s96
    %p98 = scmp.eq.s32.totalorder %s97, 0
    %s100 = sadd.s32 %s99, 1
    %s101 = scalar_select %p98, %s99, %s100
    %p104 = pneg %p98
    %p105 = scmp.eq.s32.totalorder %s11, 1
    %p106 = por %p104, %p105
    %p107 = scmp.ne.s32.totalorder %s99, %s102
    %p108 = scmp.eq.s32.totalorder %s11, 0
    %p109 = por %p107, %p108
    %p110 = scmp.ne.s32.totalorder %s99, %s102
    %p111 = scmp.eq.s32.totalorder %s16, 1
    %p112 = por %p110, %p111
    %p113 = scmp.ne.s32.totalorder %s102, %s103
    %p114 = scmp.eq.s32.totalorder %s16, 0
    %p115 = por %p113, %p114
    %p116 = scmp.ne.s32.totalorder %s102, %s103
    %p117 = scmp.eq.s32.totalorder %s17, 1
    %p118 = por %p116, %p117
    %p120 = scmp.ne.s32.totalorder %s103, %s119
    %p121 = scmp.eq.s32.totalorder %s17, 0
    %p122 = por %p120, %p121
    %s124 = sadd.s32 %s123, 1
    %p127 = scmp.eq.s32.totalorder %s11, 1
    %p128 = scmp.ne.s32.totalorder %s123, %s125
    %p129 = scmp.eq.s32.totalorder %s11, 0
    %p130 = por %p128, %p129
    %p131 = scmp.ne.s32.totalorder %s123, %s125
    %p132 = scmp.eq.s32.totalorder %s16, 1
    %p133 = por %p131, %p132
    %p134 = scmp.ne.s32.totalorder %s125, %s126
    %p135 = scmp.eq.s32.totalorder %s16, 0
    %p136 = por %p134, %p135
    %p137 = scmp.ne.s32.totalorder %s125, %s126
    %p138 = scmp.eq.s32.totalorder %s17, 1
    %p139 = por %p137, %p138
    %p141 = scmp.ne.s32.totalorder %s126, %s140
    %p142 = scmp.eq.s32.totalorder %s17, 0
    %p143 = por %p141, %p142
    %s145 = sadd.s32 %s144, 1
    %p148 = scmp.eq.s32.totalorder %s11, 1
    %p149 = scmp.ne.s32.totalorder %s144, %s146
    %p150 = scmp.eq.s32.totalorder %s11, 0
    %p151 = por %p149, %p150
    %p152 = scmp.ne.s32.totalorder %s144, %s146
    %p153 = scmp.eq.s32.totalorder %s16, 1
    %p154 = por %p152, %p153
    %p155 = scmp.ne.s32.totalorder %s146, %s147
    %p156 = scmp.eq.s32.totalorder %s16, 0
    %p157 = por %p155, %p156
    %p158 = scmp.ne.s32.totalorder %s146, %s147
    %p159 = scmp.eq.s32.totalorder %s17, 1
    %p160 = por %p158, %p159
    %p162 = scmp.ne.s32.totalorder %s147, %s161
    %p163 = scmp.eq.s32.totalorder %s17, 0
    %p164 = por %p162, %p163
    %s165 = ssub.s32 %s18, %s30
    %s166 = ssub.s32 %s19, %s26
    %s167 = sor.u32 %s165, %s166
    %p168 = scmp.eq.s32.totalorder %s167, 0
    %s170 = sadd.s32 %s169, 1
    %s171 = scalar_select %p168, %s169, %s170
    %p174 = pneg %p168
    %p175 = scmp.eq.s32.totalorder %s11, 1
    %p176 = por %p174, %p175
    %p177 = scmp.ne.s32.totalorder %s169, %s172
    %p178 = scmp.eq.s32.totalorder %s11, 0
    %p179 = por %p177, %p178
    %p180 = scmp.ne.s32.totalorder %s169, %s172
    %p181 = scmp.eq.s32.totalorder %s16, 1
    %p182 = por %p180, %p181
    %p183 = scmp.ne.s32.totalorder %s172, %s173
    %p184 = scmp.eq.s32.totalorder %s16, 0
    %p185 = por %p183, %p184
    %p186 = scmp.ne.s32.totalorder %s172, %s173
    %p187 = scmp.eq.s32.totalorder %s17, 1
    %p188 = por %p186, %p187
    %p190 = scmp.ne.s32.totalorder %s173, %s189
    %p191 = scmp.eq.s32.totalorder %s17, 0
    %p192 = por %p190, %p191
    %p193 = scmp.le.s32.totalorder 1, %s11
    %p194 = scmp.lt.s32.totalorder %s11, 3
    %p195 = pnand %p193, %p194
    %p196 = pneg %p195
    // Predicated region
    $region9: #{patch_attention_forward.3} parent=5 // pred_check
      _
    $region10: #{patch_attention_forward.3} parent=5 // pred_check_branch
      %198 = sbr.rel (%p195) target = $region12
    $region11: #{patch_attention_forward.3} parent=5 // pred_region
      %s199 = ssub.s32 %s11, 1
      // Predicated region
      $region13: #{patch_attention_forward.3} parent=11 // pred_check
        %p200 = pneg %p136
      $region14: #{patch_attention_forward.3} parent=11 // pred_check_branch
        %202 = sbr.rel (%p200) target = $region16
      $region15: #{patch_attention_forward.3} parent=11 // pred_region
        _
      $region16: #{patch_attention_forward.3} parent=11 // pred_fallthru
        _
      // Predicated region
      $region17: #{patch_attention_forward.3} parent=11 // pred_check
        %p203 = pneg %p157
      $region18: #{patch_attention_forward.3} parent=11 // pred_check_branch
        %205 = sbr.rel (%p203) target = $region20
      $region19: #{patch_attention_forward.3} parent=11 // pred_region
        _
      $region20: #{patch_attention_forward.3} parent=11 // pred_fallthru
        _
    $region12: #{patch_attention_forward.3} parent=5 // pred_fallthru
      _
    %p206 = scmp.lt.s32.totalorder %s11, 2
    // Predicated region
    $region21: #{patch_attention_forward.3} parent=5 // pred_check
      %p207 = pneg %p206
    $region22: #{patch_attention_forward.3} parent=5 // pred_check_branch
      %209 = sbr.rel (%p207) target = $region24
    $region23: #{patch_attention_forward.3} parent=5 // pred_region
      // Predicated region
      $region25: #{patch_attention_forward.3} parent=23 // pred_check
        %p210 = pneg %p45
      $region26: #{patch_attention_forward.3} parent=23 // pred_check_branch
        %212 = sbr.rel (%p210) target = $region28
      $region27: #{patch_attention_forward.3} parent=23 // pred_region
        %s213 = smul.u32 16, %s19
        %s214 = ssub.s32 18, %s213
        %p215 = scmp.lt.s32.totalorder %s214, 16
        %s216 = scalar_select %p215, %s214, 16
        %s217 = smul.u32 128, %s216
        %s218 = smul.u32 %s217, 3
        %p219 = scmp.lt.s32.totalorder %s18, 1
        %s220 = scalar_select %p219, %s18, 1
        %p221 = scmp.lt.s32.totalorder %s213, 17
        %s222 = scalar_select %p221, %s213, 17
        %s223 = smul.addr %s222, 3
        %s224 = smul.addr %s220, 54
        %s225 = sadd.s32 %s223, %s224
        %s226 = smul.addr %s225, 8
        %s227 = scalar_lea.vmem %s0, %s226
        %s228 = smul.u32 16, %s19
        %s229 = ssub.s32 18, %s228
        %p230 = scmp.lt.s32.totalorder %s229, 16
        %s231 = scalar_select %p230, %s229, 16
        %s232 = smul.u32 128, %s231
        %s233 = smul.u32 %s232, 3
      $region28: #{patch_attention_forward.3} parent=23 // pred_fallthru
        _
      // Predicated region
      $region29: #{patch_attention_forward.3} parent=23 // pred_check
        %p234 = pneg %p77
      $region30: #{patch_attention_forward.3} parent=23 // pred_check_branch
        %236 = sbr.rel (%p234) target = $region32
      $region31: #{patch_attention_forward.3} parent=23 // pred_region
        %s237 = smul.u32 %s19, 16
        %s238 = sadd.s32 %s237, 16
        %p239 = scmp.lt.s32.totalorder %s18, 1
        %s240 = scalar_select %p239, %s18, 1
        %p241 = scmp.lt.s32.totalorder %s238, 17
        %s242 = scalar_select %p241, %s238, 17
        %s243 = smul.addr %s242, 3
        %s244 = smul.addr %s240, 54
        %s245 = sadd.s32 %s243, %s244
        %s246 = smul.addr %s245, 8
        %s247 = scalar_lea.vmem %s1, %s246
        %s248 = smul.u32 %s19, 16
        %s249 = sadd.s32 %s248, 16
      $region32: #{patch_attention_forward.3} parent=23 // pred_fallthru
        _
      // Predicated region
      $region33: #{patch_attention_forward.3} parent=23 // pred_check
        %p250 = pneg %p109
      $region34: #{patch_attention_forward.3} parent=23 // pred_check_branch
        %252 = sbr.rel (%p250) target = $region36
      $region35: #{patch_attention_forward.3} parent=23 // pred_region
        %s253 = smul.u32 %s19, 16
        %s254 = sadd.s32 %s253, 17
        %p255 = scmp.lt.s32.totalorder %s18, 1
        %s256 = scalar_select %p255, %s18, 1
        %p257 = scmp.lt.s32.totalorder %s254, 17
        %s258 = scalar_select %p257, %s254, 17
        %s259 = smul.addr %s258, 3
        %s260 = smul.addr %s256, 54
        %s261 = sadd.s32 %s259, %s260
        %s262 = smul.addr %s261, 8
        %s263 = scalar_lea.vmem %s2, %s262
        %s264 = smul.u32 %s19, 16
        %s265 = sadd.s32 %s264, 17
      $region36: #{patch_attention_forward.3} parent=23 // pred_fallthru
        _
    $region24: #{patch_attention_forward.3} parent=5 // pred_fallthru
      _
    %p266 = scmp.le.s32.totalorder 1, %s11
    %p267 = scmp.lt.s32.totalorder %s11, 3
    %p268 = pnand %p266, %p267
    %p269 = pneg %p268
    // Predicated region
    $region37: #{patch_attention_forward.3} parent=5 // pred_check
      _
    $region38: #{patch_attention_forward.3} parent=5 // pred_check_branch
      %271 = sbr.rel (%p268) target = $region40
    $region39: #{patch_attention_forward.3} parent=5 // pred_region
      %s272 = ssub.s32 %s11, 1
      %s273 = smul.u32 16, %s21
      %s274 = ssub.s32 18, %s273
      %p275 = scmp.lt.s32.totalorder %s274, 16
      %s276 = scalar_select %p275, %s274, 16
      %s277 = smul.u32 128, %s276
      %s278 = smul.u32 %s277, 3
      %p279 = scmp.lt.s32.totalorder %s20, 1
      %s280 = scalar_select %p279, %s20, 1
      %p281 = scmp.lt.s32.totalorder %s273, 17
      %s282 = scalar_select %p281, %s273, 17
      %s283 = smul.addr %s282, 3
      %s284 = smul.addr %s280, 54
      %s285 = sadd.s32 %s283, %s284
      %s286 = smul.addr %s285, 8
      %s287 = scalar_lea.vmem %s0, %s286
      %p288 = pneg %p51
      %p289 = pneg %p48
      %s290 = smul.u32 %s21, 16
      %s291 = sadd.s32 %s290, 16
      %p292 = scmp.lt.s32.totalorder %s20, 1
      %s293 = scalar_select %p292, %s20, 1
      %p294 = scmp.lt.s32.totalorder %s291, 17
      %s295 = scalar_select %p294, %s291, 17
      %s296 = smul.addr %s295, 3
      %s297 = smul.addr %s293, 54
      %s298 = sadd.s32 %s296, %s297
      %s299 = smul.addr %s298, 8
      %s300 = scalar_lea.vmem %s1, %s299
      %p301 = pneg %p83
      %p302 = pneg %p80
      %s303 = smul.u32 %s21, 16
      %s304 = sadd.s32 %s303, 17
      %p305 = scmp.lt.s32.totalorder %s20, 1
      %s306 = scalar_select %p305, %s20, 1
      %p307 = scmp.lt.s32.totalorder %s304, 17
      %s308 = scalar_select %p307, %s304, 17
      %s309 = smul.addr %s308, 3
      %s310 = smul.addr %s306, 54
      %s311 = sadd.s32 %s309, %s310
      %s312 = smul.addr %s311, 8
      %s313 = scalar_lea.vmem %s2, %s312
      %p314 = pneg %p115
      %p315 = pneg %p112
      %p316 = pneg %p136
      %p317 = pneg %p133
      %p318 = pneg %p157
      %p319 = pneg %p154
      %p320 = pneg %p185
      %p321 = pneg %p182
      %s322 = smul.u32 16, %s21
      %p323 = scmp.lt.s32.totalorder %s20, 1
      %s324 = scalar_select %p323, %s20, 1
      %p325 = scmp.lt.s32.totalorder %s322, 15
      %s326 = scalar_select %p325, %s322, 15
      %s327 = smul.addr %s326, 2
      %s328 = smul.addr %s324, 32
      %s329 = sadd.s32 %s327, %s328
      %s330 = smul.addr %s329, 8
      %s331 = scalar_lea.vmem %s5, %s330
      %s332 = smul.u32 16, %s21
      %s333 = ssub.s32 18, %s332
      %p334 = scmp.lt.s32.totalorder %s333, 16
      %s335 = scalar_select %p334, %s333, 16
      %s336 = smul.u32 128, %s335
      %s337 = smul.u32 %s336, 3
      %p338 = scmp.lt.s32.totalorder %s20, 1
      %s339 = scalar_select %p338, %s20, 1
      %p340 = scmp.lt.s32.totalorder %s332, 17
      %s341 = scalar_select %p340, %s332, 17
      %s342 = smul.addr %s341, 3
      %s343 = smul.addr %s339, 54
      %s344 = sadd.s32 %s342, %s343
      %s345 = smul.addr %s344, 8
      %s346 = scalar_lea.vmem %s0, %s345
      %s347 = smul.u32 16, %s21
      %s348 = ssub.s32 18, %s347
      %p349 = scmp.lt.s32.totalorder %s348, 16
      %s350 = scalar_select %p349, %s348, 16
      %s351 = smul.u32 128, %s350
      %s352 = smul.u32 %s351, 3
      %s353 = smul.u32 %s21, 16
      %s354 = sadd.s32 %s353, 16
      %p355 = scmp.lt.s32.totalorder %s20, 1
      %s356 = scalar_select %p355, %s20, 1
      %p357 = scmp.lt.s32.totalorder %s354, 17
      %s358 = scalar_select %p357, %s354, 17
      %s359 = smul.addr %s358, 3
      %s360 = smul.addr %s356, 54
      %s361 = sadd.s32 %s359, %s360
      %s362 = smul.addr %s361, 8
      %s363 = scalar_lea.vmem %s1, %s362
      %s364 = smul.u32 %s21, 16
      %s365 = sadd.s32 %s364, 16
      %s366 = smul.u32 %s21, 16
      %s367 = sadd.s32 %s366, 17
      %p368 = scmp.lt.s32.totalorder %s20, 1
      %s369 = scalar_select %p368, %s20, 1
      %p370 = scmp.lt.s32.totalorder %s367, 17
      %s371 = scalar_select %p370, %s367, 17
      %s372 = smul.addr %s371, 3
      %s373 = smul.addr %s369, 54
      %s374 = sadd.s32 %s372, %s373
      %s375 = smul.addr %s374, 8
      %s376 = scalar_lea.vmem %s2, %s375
      %s377 = smul.u32 %s21, 16
      %s378 = sadd.s32 %s377, 17
      %s379 = smul.u32 16, %s21
      %p380 = scmp.lt.s32.totalorder %s20, 1
      %s381 = scalar_select %p380, %s20, 1
      %p382 = scmp.lt.s32.totalorder %s379, 15
      %s383 = scalar_select %p382, %s379, 15
      %s384 = smul.addr %s383, 2
      %s385 = smul.addr %s381, 32
      %s386 = sadd.s32 %s384, %s385
      %s387 = smul.addr %s386, 8
      %s388 = scalar_lea.vmem %s5, %s387
      %s389 = smul.u32 16, %s21
      %v390 = vld [vmem:[%s346] sm:$0xff]
      %v391 = vld [vmem:[%s346 + $0x8] sm:$0xff]
      %v392 = vld [vmem:[%s346 + $0x10] sm:$0x3]
      %v393 = vld [vmem:[%s346 + $0x18] sm:$0xff]
      %v394 = vld [vmem:[%s346 + $0x20] sm:$0xff]
      %v395 = vld [vmem:[%s346 + $0x28] sm:$0x3]
      %v396 = vld [vmem:[%s346 + $0x30] sm:$0xff]
      %v397 = vld [vmem:[%s346 + $0x38] sm:$0xff]
      %v398 = vld [vmem:[%s346 + $0x40] sm:$0x3]
      %v399 = vld [vmem:[%s346 + $0x48] sm:$0xff]
      %v400 = vld [vmem:[%s346 + $0x50] sm:$0xff]
      %v401 = vld [vmem:[%s346 + $0x58] sm:$0x3]
      %v402 = vld [vmem:[%s346 + $0x60] sm:$0xff]
      %v403 = vld [vmem:[%s346 + $0x68] sm:$0xff]
      %v404 = vld [vmem:[%s346 + $0x70] sm:$0x3]
      %v405 = vld [vmem:[%s346 + $0x78] sm:$0xff]
      %v406 = vld [vmem:[%s346 + $0x80] sm:$0xff]
      %v407 = vld [vmem:[%s346 + $0x88] sm:$0x3]
      %v408 = vld [vmem:[%s346 + $0x90] sm:$0xff]
      %v409 = vld [vmem:[%s346 + $0x98] sm:$0xff]
      %v410 = vld [vmem:[%s346 + $0xa0] sm:$0x3]
      %v411 = vld [vmem:[%s346 + $0xa8] sm:$0xff]
      %v412 = vld [vmem:[%s346 + $0xb0] sm:$0xff]
      %v413 = vld [vmem:[%s346 + $0xb8] sm:$0x3]
      %v414 = vld [vmem:[%s346 + $0xc0] sm:$0xff]
      %v415 = vld [vmem:[%s346 + $0xc8] sm:$0xff]
      %v416 = vld [vmem:[%s346 + $0xd0] sm:$0x3]
      %v417 = vld [vmem:[%s346 + $0xd8] sm:$0xff]
      %v418 = vld [vmem:[%s346 + $0xe0] sm:$0xff]
      %v419 = vld [vmem:[%s346 + $0xe8] sm:$0x3]
      %v420 = vld [vmem:[%s346 + $0xf0] sm:$0xff]
      %v421 = vld [vmem:[%s346 + $0xf8] sm:$0xff]
      %v422 = vld [vmem:[%s346 + $0x100] sm:$0x3]
      %v423 = vld [vmem:[%s346 + $0x108] sm:$0xff]
      %v424 = vld [vmem:[%s346 + $0x110] sm:$0xff]
      %v425 = vld [vmem:[%s346 + $0x118] sm:$0x3]
      %v426 = vld [vmem:[%s346 + $0x120] sm:$0xff]
      %v427 = vld [vmem:[%s346 + $0x128] sm:$0xff]
      %v428 = vld [vmem:[%s346 + $0x130] sm:$0x3]
      %v429 = vld [vmem:[%s346 + $0x138] sm:$0xff]
      %v430 = vld [vmem:[%s346 + $0x140] sm:$0xff]
      %v431 = vld [vmem:[%s346 + $0x148] sm:$0x3]
      %v432 = vld [vmem:[%s346 + $0x150] sm:$0xff]
      %v433 = vld [vmem:[%s346 + $0x158] sm:$0xff]
      %v434 = vld [vmem:[%s346 + $0x160] sm:$0x3]
      %v435 = vld [vmem:[%s346 + $0x168] sm:$0xff]
      %v436 = vld [vmem:[%s346 + $0x170] sm:$0xff]
      %v437 = vld [vmem:[%s346 + $0x178] sm:$0x3]
      %vm438 = vcmask 31744
      %439 = vst.msk [vmem:[#allocation2] sm:$0xff] %vm438, %v390
      %440 = vst.msk [vmem:[#allocation2 + $0x8] sm:$0xff] %vm438, %v391
      %vm441 = vcmask 25600
      %442 = vst.msk [vmem:[#allocation2 + $0x10] sm:$0x3] %vm441, %v392
      %443 = vst.msk [vmem:[#allocation2 + $0x18] sm:$0xff] %vm438, %v393
      %444 = vst.msk [vmem:[#allocation2 + $0x20] sm:$0xff] %vm438, %v394
      %445 = vst.msk [vmem:[#allocation2 + $0x28] sm:$0x3] %vm441, %v395
      %446 = vst.msk [vmem:[#allocation2 + $0x30] sm:$0xff] %vm438, %v396
      %447 = vst.msk [vmem:[#allocation2 + $0x38] sm:$0xff] %vm438, %v397
      %448 = vst.msk [vmem:[#allocation2 + $0x40] sm:$0x3] %vm441, %v398
      %449 = vst.msk [vmem:[#allocation2 + $0x48] sm:$0xff] %vm438, %v399
      %450 = vst.msk [vmem:[#allocation2 + $0x50] sm:$0xff] %vm438, %v400
      %451 = vst.msk [vmem:[#allocation2 + $0x58] sm:$0x3] %vm441, %v401
      %452 = vst.msk [vmem:[#allocation2 + $0x60] sm:$0xff] %vm438, %v402
      %453 = vst.msk [vmem:[#allocation2 + $0x68] sm:$0xff] %vm438, %v403
      %454 = vst.msk [vmem:[#allocation2 + $0x70] sm:$0x3] %vm441, %v404
      %455 = vst.msk [vmem:[#allocation2 + $0x78] sm:$0xff] %vm438, %v405
      %456 = vst.msk [vmem:[#allocation2 + $0x80] sm:$0xff] %vm438, %v406
      %457 = vst.msk [vmem:[#allocation2 + $0x88] sm:$0x3] %vm441, %v407
      %458 = vst.msk [vmem:[#allocation2 + $0x90] sm:$0xff] %vm438, %v408
      %459 = vst.msk [vmem:[#allocation2 + $0x98] sm:$0xff] %vm438, %v409
      %460 = vst.msk [vmem:[#allocation2 + $0xa0] sm:$0x3] %vm441, %v410
      %461 = vst.msk [vmem:[#allocation2 + $0xa8] sm:$0xff] %vm438, %v411
      %462 = vst.msk [vmem:[#allocation2 + $0xb0] sm:$0xff] %vm438, %v412
      %463 = vst.msk [vmem:[#allocation2 + $0xb8] sm:$0x3] %vm441, %v413
      %464 = vst.msk [vmem:[#allocation2 + $0xc0] sm:$0xff] %vm438, %v414
      %465 = vst.msk [vmem:[#allocation2 + $0xc8] sm:$0xff] %vm438, %v415
      %466 = vst.msk [vmem:[#allocation2 + $0xd0] sm:$0x3] %vm441, %v416
      %467 = vst.msk [vmem:[#allocation2 + $0xd8] sm:$0xff] %vm438, %v417
      %468 = vst.msk [vmem:[#allocation2 + $0xe0] sm:$0xff] %vm438, %v418
      %469 = vst.msk [vmem:[#allocation2 + $0xe8] sm:$0x3] %vm441, %v419
      %470 = vst.msk [vmem:[#allocation2 + $0xf0] sm:$0xff] %vm438, %v420
      %471 = vst.msk [vmem:[#allocation2 + $0xf8] sm:$0xff] %vm438, %v421
      %472 = vst.msk [vmem:[#allocation2 + $0x100] sm:$0x3] %vm441, %v422
      %473 = vst.msk [vmem:[#allocation2 + $0x108] sm:$0xff] %vm438, %v423
      %474 = vst.msk [vmem:[#allocation2 + $0x110] sm:$0xff] %vm438, %v424
      %475 = vst.msk [vmem:[#allocation2 + $0x118] sm:$0x3] %vm441, %v425
      %476 = vst.msk [vmem:[#allocation2 + $0x120] sm:$0xff] %vm438, %v426
      %477 = vst.msk [vmem:[#allocation2 + $0x128] sm:$0xff] %vm438, %v427
      %478 = vst.msk [vmem:[#allocation2 + $0x130] sm:$0x3] %vm441, %v428
      %479 = vst.msk [vmem:[#allocation2 + $0x138] sm:$0xff] %vm438, %v429
      %480 = vst.msk [vmem:[#allocation2 + $0x140] sm:$0xff] %vm438, %v430
      %481 = vst.msk [vmem:[#allocation2 + $0x148] sm:$0x3] %vm441, %v431
      %482 = vst.msk [vmem:[#allocation2 + $0x150] sm:$0xff] %vm438, %v432
      %483 = vst.msk [vmem:[#allocation2 + $0x158] sm:$0xff] %vm438, %v433
      %484 = vst.msk [vmem:[#allocation2 + $0x160] sm:$0x3] %vm441, %v434
      %485 = vst.msk [vmem:[#allocation2 + $0x168] sm:$0xff] %vm438, %v435
      %486 = vst.msk [vmem:[#allocation2 + $0x170] sm:$0xff] %vm438, %v436
      %487 = vst.msk [vmem:[#allocation2 + $0x178] sm:$0x3] %vm441, %v437
      %v488 = vld [vmem:[%s363] sm:$0xff]
      %v489 = vld [vmem:[%s363 + $0x8] sm:$0xff]
      %v490 = vld [vmem:[%s363 + $0x10] sm:$0x3]
      %s491 = scalar_lea.vmem [#allocation2], 384
      %492 = vst.msk [vmem:[%s491] sm:$0xff] %vm438, %v488
      %493 = vst.msk [vmem:[%s491 + $0x8] sm:$0xff] %vm438, %v489
      %494 = vst.msk [vmem:[%s491 + $0x10] sm:$0x3] %vm441, %v490
      %v495 = vld [vmem:[%s376] sm:$0xff]
      %v496 = vld [vmem:[%s376 + $0x8] sm:$0xff]
      %v497 = vld [vmem:[%s376 + $0x10] sm:$0x3]
      %s498 = scalar_lea.vmem [#allocation2], 408
      %499 = vst.msk [vmem:[%s498] sm:$0xff] %vm438, %v495
      %500 = vst.msk [vmem:[%s498 + $0x8] sm:$0xff] %vm438, %v496
      %501 = vst.msk [vmem:[%s498 + $0x10] sm:$0x3] %vm441, %v497
      %v502 = vld [vmem:[#allocation2] sm:$0xff]
      %v503 = vld [vmem:[#allocation2 + $0x8] sm:$0xff]
      %v504 = vld [vmem:[#allocation2 + $0x18] sm:$0xff]
      %v505 = vld [vmem:[#allocation2 + $0x20] sm:$0xff]
      %v506 = vld [vmem:[#allocation2 + $0x30] sm:$0xff]
      %v507 = vld [vmem:[#allocation2 + $0x38] sm:$0xff]
      %v508 = vld [vmem:[#allocation2 + $0x48] sm:$0xff]
      %v509 = vld [vmem:[#allocation2 + $0x50] sm:$0xff]
      %v510 = vld [vmem:[#allocation2 + $0x60] sm:$0xff]
      %v511 = vld [vmem:[#allocation2 + $0x68] sm:$0xff]
      %v512 = vld [vmem:[#allocation2 + $0x78] sm:$0xff]
      %v513 = vld [vmem:[#allocation2 + $0x80] sm:$0xff]
      %v514 = vld [vmem:[#allocation2 + $0x90] sm:$0xff]
      %v515 = vld [vmem:[#allocation2 + $0x98] sm:$0xff]
      %v516 = vld [vmem:[#allocation2 + $0xa8] sm:$0xff]
      %v517 = vld [vmem:[#allocation2 + $0xb0] sm:$0xff]
      %v518 = vld [vmem:[#allocation2 + $0xc0] sm:$0xff]
      %v519 = vld [vmem:[#allocation2 + $0xc8] sm:$0xff]
      %v520 = vld [vmem:[#allocation2 + $0xd8] sm:$0xff]
      %v521 = vld [vmem:[#allocation2 + $0xe0] sm:$0xff]
      %v522 = vld [vmem:[#allocation2 + $0xf0] sm:$0xff]
      %v523 = vld [vmem:[#allocation2 + $0xf8] sm:$0xff]
      %v524 = vld [vmem:[#allocation2 + $0x108] sm:$0xff]
      %v525 = vld [vmem:[#allocation2 + $0x110] sm:$0xff]
      %v526 = vld [vmem:[#allocation2 + $0x120] sm:$0xff]
      %v527 = vld [vmem:[#allocation2 + $0x128] sm:$0xff]
      %v528 = vld [vmem:[#allocation2 + $0x138] sm:$0xff]
      %v529 = vld [vmem:[#allocation2 + $0x140] sm:$0xff]
      %v530 = vld [vmem:[#allocation2 + $0x150] sm:$0xff]
      %v531 = vld [vmem:[#allocation2 + $0x158] sm:$0xff]
      %v532 = vld [vmem:[#allocation2 + $0x168] sm:$0xff]
      %v533 = vld [vmem:[#allocation2 + $0x170] sm:$0xff]
      %v534 = vld [vmem:[%s3] sm:$0xf]
      %v535 = vld [vmem:[#allocation2 + $0x1] sm:$0xff]
      %v536 = vld [vmem:[#allocation2 + $0x9] sm:$0xff]
      %v537 = vld [vmem:[#allocation2 + $0x19] sm:$0xff]
      %v538 = vld [vmem:[#allocation2 + $0x21] sm:$0xff]
      %v539 = vld [vmem:[#allocation2 + $0x31] sm:$0xff]
      %v540 = vld [vmem:[#allocation2 + $0x39] sm:$0xff]
      %v541 = vld [vmem:[#allocation2 + $0x49] sm:$0xff]
      %v542 = vld [vmem:[#allocation2 + $0x51] sm:$0xff]
      %v543 = vld [vmem:[#allocation2 + $0x61] sm:$0xff]
      %v544 = vld [vmem:[#allocation2 + $0x69] sm:$0xff]
      %v545 = vld [vmem:[#allocation2 + $0x79] sm:$0xff]
      %v546 = vld [vmem:[#allocation2 + $0x81] sm:$0xff]
      %v547 = vld [vmem:[#allocation2 + $0x91] sm:$0xff]
      %v548 = vld [vmem:[#allocation2 + $0x99] sm:$0xff]
      %v549 = vld [vmem:[#allocation2 + $0xa9] sm:$0xff]
      %v550 = vld [vmem:[#allocation2 + $0xb1] sm:$0xff]
      %v551 = vld [vmem:[#allocation2 + $0xc1] sm:$0xff]
      %v552 = vld [vmem:[#allocation2 + $0xc9] sm:$0xff]
      %v553 = vld [vmem:[#allocation2 + $0xd9] sm:$0xff]
      %v554 = vld [vmem:[#allocation2 + $0xe1] sm:$0xff]
      %v555 = vld [vmem:[#allocation2 + $0xf1] sm:$0xff]
      %v556 = vld [vmem:[#allocation2 + $0xf9] sm:$0xff]
      %v557 = vld [vmem:[#allocation2 + $0x109] sm:$0xff]
      %v558 = vld [vmem:[#allocation2 + $0x111] sm:$0xff]
      %v559 = vld [vmem:[#allocation2 + $0x121] sm:$0xff]
      %v560 = vld [vmem:[#allocation2 + $0x129] sm:$0xff]
      %v561 = vld [vmem:[#allocation2 + $0x139] sm:$0xff]
      %v562 = vld [vmem:[#allocation2 + $0x141] sm:$0xff]
      %v563 = vld [vmem:[#allocation2 + $0x151] sm:$0xff]
      %v564 = vld [vmem:[#allocation2 + $0x159] sm:$0xff]
      %v565 = vld [vmem:[#allocation2 + $0x169] sm:$0xff]
      %v566 = vld [vmem:[#allocation2 + $0x171] sm:$0xff]
      %s567 = scalar_lea.vmem %s3, 4
      %v568 = vld [vmem:[%s567] sm:$0xf]
      %v570 = vsel %vm438, %v535, 0
      %v573 = vsel %vm438, %v536, 0
      %v576 = vsel %vm438, %v537, 0
      %v579 = vsel %vm438, %v538, 0
      %v582 = vsel %vm438, %v539, 0
      %v585 = vsel %vm438, %v540, 0
      %v588 = vsel %vm438, %v541, 0
      %v591 = vsel %vm438, %v542, 0
      %v594 = vsel %vm438, %v543, 0
      %v597 = vsel %vm438, %v544, 0
      %v600 = vsel %vm438, %v545, 0
      %v603 = vsel %vm438, %v546, 0
      %v606 = vsel %vm438, %v547, 0
      %v609 = vsel %vm438, %v548, 0
      %v612 = vsel %vm438, %v549, 0
      %v615 = vsel %vm438, %v550, 0
      %v618 = vsel %vm438, %v551, 0
      %v621 = vsel %vm438, %v552, 0
      %v624 = vsel %vm438, %v553, 0
      %v627 = vsel %vm438, %v554, 0
      %v630 = vsel %vm438, %v555, 0
      %v633 = vsel %vm438, %v556, 0
      %v636 = vsel %vm438, %v557, 0
      %v639 = vsel %vm438, %v558, 0
      %v642 = vsel %vm438, %v559, 0
      %v645 = vsel %vm438, %v560, 0
      %v648 = vsel %vm438, %v561, 0
      %v651 = vsel %vm438, %v562, 0
      %v654 = vsel %vm438, %v563, 0
      %v657 = vsel %vm438, %v564, 0
      %v660 = vsel %vm438, %v565, 0
      %v663 = vsel %vm438, %v566, 0
      %vm665 = vcmask 1043456
      %v667 = vsel %vm665, %v568, 0
      %669 = vmatprep.subr.mxu0 0.0
      %670 = vmatpush1.msra.mxu0 %v667
      %671 = vmatprep.subr.mxu0 0.0
      %672 = vmatpush1.msra.mxu0 0.0
      %673 = vmatprep.subr.mxu0 0.0
      %674 = vmatpush1.msra.mxu0 0.0
      %675 = vmatprep.subr.mxu0 0.0
      %676 = vmatpush1.msra.mxu0 0.0
      %677 = vmatprep.subr.mxu0 0.0
      %678 = vmatpush1.msra.mxu0 0.0
      %679 = vmatprep.subr.mxu0 0.0
      %680 = vmatpush1.msra.mxu0 0.0
      %681 = vmatprep.subr.mxu0 0.0
      %682 = vmatpush1.msra.mxu0 0.0
      %683 = vmatprep.subr.mxu0 0.0
      %684 = vmatpush1.msra.mxu0 0.0
      %685 = vmatprep.subr.mxu0 0.0
      %686 = vmatpush1.msra.mxu0 0.0
      %687 = vmatprep.subr.mxu0 0.0
      %688 = vmatpush1.msra.mxu0 0.0
      %689 = vmatprep.subr.mxu0 0.0
      %690 = vmatpush1.msra.mxu0 0.0
      %691 = vmatprep.subr.mxu0 0.0
      %692 = vmatpush1.msra.mxu0 0.0
      %693 = vmatprep.subr.mxu0 0.0
      %694 = vmatpush1.msra.mxu0 0.0
      %695 = vmatprep.subr.mxu0 0.0
      %696 = vmatpush1.msra.mxu0 0.0
      %697 = vmatprep.subr.mxu0 0.0
      %698 = vmatpush1.msra.mxu0 0.0
      %699 = vmatprep.subr.mxu0 0.0
      %700 = vmatpush1.msra.mxu0 0.0
      %701 = vmatprep.subr.mxu0 0.0
      %702 = vmatpush1.msra.mxu0 0.0
      %703 = vmatprep.subr.mxu0 0.0
      %704 = vmatpush1.msra.mxu0 0.0
      %705 = vmatprep.subr.mxu0 0.0
      %706 = vmatpush1.msra.mxu0 0.0
      %707 = vmatprep.subr.mxu0 0.0
      %708 = vmatpush1.msra.mxu0 0.0
      %709 = vmatprep.subr.mxu0 0.0
      %710 = vmatpush1.msra.mxu0 0.0
      %711 = vmatprep.subr.mxu0 0.0
      %712 = vmatpush1.msra.mxu0 0.0
      %713 = vmatprep.subr.mxu0 0.0
      %714 = vmatpush1.msra.mxu0 0.0
      %715 = vmatprep.subr.mxu0 0.0
      %716 = vmatpush1.msra.mxu0 0.0
      %717 = vmatprep.subr.mxu0 0.0
      %718 = vmatpush1.msra.mxu0 0.0
      %719 = vmatprep.subr.mxu0 0.0
      %720 = vmatpush1.msra.mxu0 0.0
      %721 = vmatprep.subr.mxu0 0.0
      %722 = vmatpush1.msra.mxu0 0.0
      %723 = vmatprep.subr.mxu0 0.0
      %724 = vmatpush1.msra.mxu0 0.0
      %725 = vmatprep.subr.mxu0 0.0
      %726 = vmatpush1.msra.mxu0 0.0
      %727 = vmatprep.subr.mxu0 0.0
      %728 = vmatpush1.msra.mxu0 0.0
      %729 = vmatprep.subr.mxu0 0.0
      %730 = vmatpush1.msra.mxu0 0.0
      %731 = vmatprep.subr.mxu0 0.0
      %732 = vmatpush1.msra.mxu0 0.0
      %733 = vmatprep.mubr.f32.mxu0 0.0
      %734 = vmatmul.mubr.f32.gmra.mrb[0].mxu0 %v570
      %v735 = vpop.f32.mrb[0].mxu0
      %v736 = vadd.f32 0.0, %v735
      %v737 = vpop.f32.mrb[0].mxu0
      %738 = vmatprep.mubr.f32.mxu0 0.0
      %739 = vmatmul.mubr.f32.gmra.mrb[0].mxu0 %v573
      %v740 = vpop.f32.mrb[0].mxu0
      %v741 = vadd.f32 0.0, %v740
      %v742 = vpop.f32.mrb[0].mxu0
      %743 = vmatprep.mubr.f32.mxu0 0.0
      %744 = vmatmul.mubr.f32.gmra.mrb[0].mxu0 %v576
      %v745 = vpop.f32.mrb[0].mxu0
      %v746 = vadd.f32 0.0, %v745
      %v747 = vpop.f32.mrb[0].mxu0
      %748 = vmatprep.mubr.f32.mxu0 0.0
      %749 = vmatmul.mubr.f32.gmra.mrb[0].mxu0 %v579
      %v750 = vpop.f32.mrb[0].mxu0
      %v751 = vadd.f32 0.0, %v750
      %v752 = vpop.f32.mrb[0].mxu0
      %753 = vmatprep.mubr.f32.mxu0 0.0
      %754 = vmatmul.mubr.f32.gmra.mrb[0].mxu0 %v582
      %v755 = vpop.f32.mrb[0].mxu0
      %v756 = vadd.f32 0.0, %v755
      %v757 = vpop.f32.mrb[0].mxu0
      %758 = vmatprep.mubr.f32.mxu0 0.0
      %759 = vmatmul.mubr.f32.gmra.mrb[0].mxu0 %v585
      %v760 = vpop.f32.mrb[0].mxu0
      %v761 = vadd.f32 0.0, %v760
      %v762 = vpop.f32.mrb[0].mxu0
      %763 = vmatprep.mubr.f32.mxu0 0.0
      %764 = vmatmul.mubr.f32.gmra.mrb[0].mxu0 %v588
      %v765 = vpop.f32.mrb[0].mxu0
      %v766 = vadd.f32 0.0, %v765
      %v767 = vpop.f32.mrb[0].mxu0
      %768 = vmatprep.mubr.f32.mxu0 0.0
      %769 = vmatmul.mubr.f32.gmra.mrb[0].mxu0 %v591
      %v770 = vpop.f32.mrb[0].mxu0
      %v771 = vadd.f32 0.0, %v770
      %v772 = vpop.f32.mrb[0].mxu0
      %773 = vmatprep.mubr.f32.mxu0 0.0
      %774 = vmatmul.mubr.f32.gmra.mrb[0].mxu0 %v594
      %v775 = vpop.f32.mrb[0].mxu0
      %v776 = vadd.f32 0.0, %v775
      %v777 = vpop.f32.mrb[0].mxu0
      %778 = vmatprep.mubr.f32.mxu0 0.0
      %779 = vmatmul.mubr.f32.gmra.mrb[0].mxu0 %v597
      %v780 = vpop.f32.mrb[0].mxu0
      %v781 = vadd.f32 0.0, %v780
      %v782 = vpop.f32.mrb[0].mxu0
      %783 = vmatprep.mubr.f32.mxu0 0.0
      %784 = vmatmul.mubr.f32.gmra.mrb[0].mxu0 %v600
      %v785 = vpop.f32.mrb[0].mxu0
      %v786 = vadd.f32 0.0, %v785
      %v787 = vpop.f32.mrb[0].mxu0
      %788 = vmatprep.mubr.f32.mxu0 0.0
      %789 = vmatmul.mubr.f32.gmra.mrb[0].mxu0 %v603
      %v790 = vpop.f32.mrb[0].mxu0
      %v791 = vadd.f32 0.0, %v790
      %v792 = vpop.f32.mrb[0].mxu0
      %793 = vmatprep.mubr.f32.mxu0 0.0
      %794 = vmatmul.mubr.f32.gmra.mrb[0].mxu0 %v606
      %v795 = vpop.f32.mrb[0].mxu0
      %v796 = vadd.f32 0.0, %v795
      %v797 = vpop.f32.mrb[0].mxu0
      %798 = vmatprep.mubr.f32.mxu0 0.0
      %799 = vmatmul.mubr.f32.gmra.mrb[0].mxu0 %v609
      %v800 = vpop.f32.mrb[0].mxu0
      %v801 = vadd.f32 0.0, %v800
      %v802 = vpop.f32.mrb[0].mxu0
      %803 = vmatprep.mubr.f32.mxu0 0.0
      %804 = vmatmul.mubr.f32.gmra.mrb[0].mxu0 %v612
      %v805 = vpop.f32.mrb[0].mxu0
      %v806 = vadd.f32 0.0, %v805
      %v807 = vpop.f32.mrb[0].mxu0
      %808 = vmatprep.mubr.f32.mxu0 0.0
      %809 = vmatmul.mubr.f32.gmra.mrb[0].mxu0 %v615
      %v810 = vpop.f32.mrb[0].mxu0
      %v811 = vadd.f32 0.0, %v810
      %v812 = vpop.f32.mrb[0].mxu0
      %813 = vmatprep.mubr.f32.mxu0 0.0
      %814 = vmatmul.mubr.f32.gmra.mrb[0].mxu0 %v618
      %v815 = vpop.f32.mrb[0].mxu0
      %v816 = vadd.f32 0.0, %v815
      %v817 = vpop.f32.mrb[0].mxu0
      %818 = vmatprep.mubr.f32.mxu0 0.0
      %819 = vmatmul.mubr.f32.gmra.mrb[0].mxu0 %v621
      %v820 = vpop.f32.mrb[0].mxu0
      %v821 = vadd.f32 0.0, %v820
      %v822 = vpop.f32.mrb[0].mxu0
      %823 = vmatprep.mubr.f32.mxu0 0.0
      %824 = vmatmul.mubr.f32.gmra.mrb[0].mxu0 %v624
      %v825 = vpop.f32.mrb[0].mxu0
      %v826 = vadd.f32 0.0, %v825
      %v827 = vpop.f32.mrb[0].mxu0
      %828 = vmatprep.mubr.f32.mxu0 0.0
      %829 = vmatmul.mubr.f32.gmra.mrb[0].mxu0 %v627
      %v830 = vpop.f32.mrb[0].mxu0
      %v831 = vadd.f32 0.0, %v830
      %v832 = vpop.f32.mrb[0].mxu0
      %833 = vmatprep.mubr.f32.mxu0 0.0
      %834 = vmatmul.mubr.f32.gmra.mrb[0].mxu0 %v630
      %v835 = vpop.f32.mrb[0].mxu0
      %v836 = vadd.f32 0.0, %v835
      %v837 = vpop.f32.mrb[0].mxu0
      %838 = vmatprep.mubr.f32.mxu0 0.0
      %839 = vmatmul.mubr.f32.gmra.mrb[0].mxu0 %v633
      %v840 = vpop.f32.mrb[0].mxu0
      %v841 = vadd.f32 0.0, %v840
      %v842 = vpop.f32.mrb[0].mxu0
      %843 = vmatprep.mubr.f32.mxu0 0.0
      %844 = vmatmul.mubr.f32.gmra.mrb[0].mxu0 %v636
      %v845 = vpop.f32.mrb[0].mxu0
      %v846 = vadd.f32 0.0, %v845
      %v847 = vpop.f32.mrb[0].mxu0
      %848 = vmatprep.mubr.f32.mxu0 0.0
      %849 = vmatmul.mubr.f32.gmra.mrb[0].mxu0 %v639
      %v850 = vpop.f32.mrb[0].mxu0
      %v851 = vadd.f32 0.0, %v850
      %v852 = vpop.f32.mrb[0].mxu0
      %853 = vmatprep.mubr.f32.mxu0 0.0
      %854 = vmatmul.mubr.f32.gmra.mrb[0].mxu0 %v642
      %v855 = vpop.f32.mrb[0].mxu0
      %v856 = vadd.f32 0.0, %v855
      %v857 = vpop.f32.mrb[0].mxu0
      %858 = vmatprep.mubr.f32.mxu0 0.0
      %859 = vmatmul.mubr.f32.gmra.mrb[0].mxu0 %v645
      %v860 = vpop.f32.mrb[0].mxu0
      %v861 = vadd.f32 0.0, %v860
      %v862 = vpop.f32.mrb[0].mxu0
      %863 = vmatprep.mubr.f32.mxu0 0.0
      %864 = vmatmul.mubr.f32.gmra.mrb[0].mxu0 %v648
      %v865 = vpop.f32.mrb[0].mxu0
      %v866 = vadd.f32 0.0, %v865
      %v867 = vpop.f32.mrb[0].mxu0
      %868 = vmatprep.mubr.f32.mxu0 0.0
      %869 = vmatmul.mubr.f32.gmra.mrb[0].mxu0 %v651
      %v870 = vpop.f32.mrb[0].mxu0
      %v871 = vadd.f32 0.0, %v870
      %v872 = vpop.f32.mrb[0].mxu0
      %873 = vmatprep.mubr.f32.mxu0 0.0
      %874 = vmatmul.mubr.f32.gmra.mrb[0].mxu0 %v654
      %v875 = vpop.f32.mrb[0].mxu0
      %v876 = vadd.f32 0.0, %v875
      %v877 = vpop.f32.mrb[0].mxu0
      %878 = vmatprep.mubr.f32.mxu0 0.0
      %879 = vmatmul.mubr.f32.gmra.mrb[0].mxu0 %v657
      %v880 = vpop.f32.mrb[0].mxu0
      %v881 = vadd.f32 0.0, %v880
      %v882 = vpop.f32.mrb[0].mxu0
      %883 = vmatprep.mubr.f32.mxu0 0.0
      %884 = vmatmul.mubr.f32.gmra.mrb[0].mxu0 %v660
      %v885 = vpop.f32.mrb[0].mxu0
      %v886 = vadd.f32 0.0, %v885
      %v887 = vpop.f32.mrb[0].mxu0
      %888 = vmatprep.mubr.f32.mxu0 0.0
      %889 = vmatmul.mubr.f32.gmra.mrb[0].mxu0 %v663
      %v890 = vpop.f32.mrb[0].mxu0
      %v891 = vadd.f32 0.0, %v890
      %v892 = vpop.f32.mrb[0].mxu0
      %893 = vdwg.mxu0
      %v895 = vsel %vm438, %v502, 0
      %v898 = vsel %vm438, %v503, 0
      %v901 = vsel %vm438, %v504, 0
      %v904 = vsel %vm438, %v505, 0
      %v907 = vsel %vm438, %v506, 0
      %v910 = vsel %vm438, %v507, 0
      %v913 = vsel %vm438, %v508, 0
      %v916 = vsel %vm438, %v509, 0
      %v919 = vsel %vm438, %v510, 0
      %v922 = vsel %vm438, %v511, 0
      %v925 = vsel %vm438, %v512, 0
      %v928 = vsel %vm438, %v513, 0
      %v931 = vsel %vm438, %v514, 0
      %v934 = vsel %vm438, %v515, 0
      %v937 = vsel %vm438, %v516, 0
      %v940 = vsel %vm438, %v517, 0
      %v943 = vsel %vm438, %v518, 0
      %v946 = vsel %vm438, %v519, 0
      %v949 = vsel %vm438, %v520, 0
      %v952 = vsel %vm438, %v521, 0
      %v955 = vsel %vm438, %v522, 0
      %v958 = vsel %vm438, %v523, 0
      %v961 = vsel %vm438, %v524, 0
      %v964 = vsel %vm438, %v525, 0
      %v967 = vsel %vm438, %v526, 0
      %v970 = vsel %vm438, %v527, 0
      %v973 = vsel %vm438, %v528, 0
      %v976 = vsel %vm438, %v529, 0
      %v979 = vsel %vm438, %v530, 0
      %v982 = vsel %vm438, %v531, 0
      %v985 = vsel %vm438, %v532, 0
      %v988 = vsel %vm438, %v533, 0
      %v991 = vsel %vm665, %v534, 0
      %993 = vmatprep.subr.mxu0 0.0
      %994 = vmatpush1.msra.mxu0 %v991
      %995 = vmatprep.subr.mxu0 0.0
      %996 = vmatpush1.msra.mxu0 0.0
      %997 = vmatprep.subr.mxu0 0.0
      %998 = vmatpush1.msra.mxu0 0.0
      %999 = vmatprep.subr.mxu0 0.0
      %1000 = vmatpush1.msra.mxu0 0.0
      %1001 = vmatprep.subr.mxu0 0.0
      %1002 = vmatpush1.msra.mxu0 0.0
      %1003 = vmatprep.subr.mxu0 0.0
      %1004 = vmatpush1.msra.mxu0 0.0
      %1005 = vmatprep.subr.mxu0 0.0
      %1006 = vmatpush1.msra.mxu0 0.0
      %1007 = vmatprep.subr.mxu0 0.0
      %1008 = vmatpush1.msra.mxu0 0.0
      %1009 = vmatprep.subr.mxu0 0.0
      %1010 = vmatpush1.msra.mxu0 0.0
      %1011 = vmatprep.subr.mxu0 0.0
      %1012 = vmatpush1.msra.mxu0 0.0
      %1013 = vmatprep.subr.mxu0 0.0
      %1014 = vmatpush1.msra.mxu0 0.0
      %1015 = vmatprep.subr.mxu0 0.0
      %1016 = vmatpush1.msra.mxu0 0.0
      %1017 = vmatprep.subr.mxu0 0.0
      %1018 = vmatpush1.msra.mxu0 0.0
      %1019 = vmatprep.subr.mxu0 0.0
      %1020 = vmatpush1.msra.mxu0 0.0
      %1021 = vmatprep.subr.mxu0 0.0
      %1022 = vmatpush1.msra.mxu0 0.0
      %1023 = vmatprep.subr.mxu0 0.0
      %1024 = vmatpush1.msra.mxu0 0.0
      %1025 = vmatprep.subr.mxu0 0.0
      %1026 = vmatpush1.msra.mxu0 0.0
      %1027 = vmatprep.subr.mxu0 0.0
      %1028 = vmatpush1.msra.mxu0 0.0
      %1029 = vmatprep.subr.mxu0 0.0
      %1030 = vmatpush1.msra.mxu0 0.0
      %1031 = vmatprep.subr.mxu0 0.0
      %1032 = vmatpush1.msra.mxu0 0.0
      %1033 = vmatprep.subr.mxu0 0.0
      %1034 = vmatpush1.msra.mxu0 0.0
      %1035 = vmatprep.subr.mxu0 0.0
      %1036 = vmatpush1.msra.mxu0 0.0
      %1037 = vmatprep.subr.mxu0 0.0
      %1038 = vmatpush1.msra.mxu0 0.0
      %1039 = vmatprep.subr.mxu0 0.0
      %1040 = vmatpush1.msra.mxu0 0.0
      %1041 = vmatprep.subr.mxu0 0.0
      %1042 = vmatpush1.msra.mxu0 0.0
      %1043 = vmatprep.subr.mxu0 0.0
      %1044 = vmatpush1.msra.mxu0 0.0
      %1045 = vmatprep.subr.mxu0 0.0
      %1046 = vmatpush1.msra.mxu0 0.0
      %1047 = vmatprep.subr.mxu0 0.0
      %1048 = vmatpush1.msra.mxu0 0.0
      %1049 = vmatprep.subr.mxu0 0.0
      %1050 = vmatpush1.msra.mxu0 0.0
      %1051 = vmatprep.subr.mxu0 0.0
      %1052 = vmatpush1.msra.mxu0 0.0
      %1053 = vmatprep.subr.mxu0 0.0
      %1054 = vmatpush1.msra.mxu0 0.0
      %1055 = vmatprep.subr.mxu0 0.0
      %1056 = vmatpush1.msra.mxu0 0.0
      %1057 = vmatprep.mubr.f32.mxu0 0.0
      %1058 = vmatmul.mubr.f32.gmra.mrb[0].mxu0 %v895
      %v1059 = vpop.f32.mrb[0].mxu0
      %v1060 = vadd.f32 %v736, %v1059
      %v1061 = vpop.f32.mrb[0].mxu0
      %1062 = vmatprep.mubr.f32.mxu0 0.0
      %1063 = vmatmul.mubr.f32.gmra.mrb[0].mxu0 %v898
      %v1064 = vpop.f32.mrb[0].mxu0
      %v1065 = vadd.f32 %v741, %v1064
      %v1066 = vpop.f32.mrb[0].mxu0
      %1067 = vmatprep.mubr.f32.mxu0 0.0
      %1068 = vmatmul.mubr.f32.gmra.mrb[0].mxu0 %v901
      %v1069 = vpop.f32.mrb[0].mxu0
      %v1070 = vadd.f32 %v746, %v1069
      %v1071 = vpop.f32.mrb[0].mxu0
      %1072 = vmatprep.mubr.f32.mxu0 0.0
      %1073 = vmatmul.mubr.f32.gmra.mrb[0].mxu0 %v904
      %v1074 = vpop.f32.mrb[0].mxu0
      %v1075 = vadd.f32 %v751, %v1074
      %v1076 = vpop.f32.mrb[0].mxu0
      %1077 = vmatprep.mubr.f32.mxu0 0.0
      %1078 = vmatmul.mubr.f32.gmra.mrb[0].mxu0 %v907
      %v1079 = vpop.f32.mrb[0].mxu0
      %v1080 = vadd.f32 %v756, %v1079
      %v1081 = vpop.f32.mrb[0].mxu0
      %1082 = vmatprep.mubr.f32.mxu0 0.0
      %1083 = vmatmul.mubr.f32.gmra.mrb[0].mxu0 %v910
      %v1084 = vpop.f32.mrb[0].mxu0
      %v1085 = vadd.f32 %v761, %v1084
      %v1086 = vpop.f32.mrb[0].mxu0
      %1087 = vmatprep.mubr.f32.mxu0 0.0
      %1088 = vmatmul.mubr.f32.gmra.mrb[0].mxu0 %v913
      %v1089 = vpop.f32.mrb[0].mxu0
      %v1090 = vadd.f32 %v766, %v1089
      %v1091 = vpop.f32.mrb[0].mxu0
      %1092 = vmatprep.mubr.f32.mxu0 0.0
      %1093 = vmatmul.mubr.f32.gmra.mrb[0].mxu0 %v916
      %v1094 = vpop.f32.mrb[0].mxu0
      %v1095 = vadd.f32 %v771, %v1094
      %v1096 = vpop.f32.mrb[0].mxu0
      %1097 = vmatprep.mubr.f32.mxu0 0.0
      %1098 = vmatmul.mubr.f32.gmra.mrb[0].mxu0 %v919
      %v1099 = vpop.f32.mrb[0].mxu0
      %v1100 = vadd.f32 %v776, %v1099
      %v1101 = vpop.f32.mrb[0].mxu0
      %1102 = vmatprep.mubr.f32.mxu0 0.0
      %1103 = vmatmul.mubr.f32.gmra.mrb[0].mxu0 %v922
      %v1104 = vpop.f32.mrb[0].mxu0
      %v1105 = vadd.f32 %v781, %v1104
      %v1106 = vpop.f32.mrb[0].mxu0
      %1107 = vmatprep.mubr.f32.mxu0 0.0
      %1108 = vmatmul.mubr.f32.gmra.mrb[0].mxu0 %v925
      %v1109 = vpop.f32.mrb[0].mxu0
      %v1110 = vadd.f32 %v786, %v1109
      %v1111 = vpop.f32.mrb[0].mxu0
      %1112 = vmatprep.mubr.f32.mxu0 0.0
      %1113 = vmatmul.mubr.f32.gmra.mrb[0].mxu0 %v928
      %v1114 = vpop.f32.mrb[0].mxu0
      %v1115 = vadd.f32 %v791, %v1114
      %v1116 = vpop.f32.mrb[0].mxu0
      %1117 = vmatprep.mubr.f32.mxu0 0.0
      %1118 = vmatmul.mubr.f32.gmra.mrb[0].mxu0 %v931
      %v1119 = vpop.f32.mrb[0].mxu0
      %v1120 = vadd.f32 %v796, %v1119
      %v1121 = vpop.f32.mrb[0].mxu0
      %1122 = vmatprep.mubr.f32.mxu0 0.0
      %1123 = vmatmul.mubr.f32.gmra.mrb[0].mxu0 %v934
      %v1124 = vpop.f32.mrb[0].mxu0
      %v1125 = vadd.f32 %v801, %v1124
      %v1126 = vpop.f32.mrb[0].mxu0
      %1127 = vmatprep.mubr.f32.mxu0 0.0
      %1128 = vmatmul.mubr.f32.gmra.mrb[0].mxu0 %v937
      %v1129 = vpop.f32.mrb[0].mxu0
      %v1130 = vadd.f32 %v806, %v1129
      %v1131 = vpop.f32.mrb[0].mxu0
      %1132 = vmatprep.mubr.f32.mxu0 0.0
      %1133 = vmatmul.mubr.f32.gmra.mrb[0].mxu0 %v940
      %v1134 = vpop.f32.mrb[0].mxu0
      %v1135 = vadd.f32 %v811, %v1134
      %v1136 = vpop.f32.mrb[0].mxu0
      %1137 = vmatprep.mubr.f32.mxu0 0.0
      %1138 = vmatmul.mubr.f32.gmra.mrb[0].mxu0 %v943
      %v1139 = vpop.f32.mrb[0].mxu0
      %v1140 = vadd.f32 %v816, %v1139
      %v1141 = vpop.f32.mrb[0].mxu0
      %1142 = vmatprep.mubr.f32.mxu0 0.0
      %1143 = vmatmul.mubr.f32.gmra.mrb[0].mxu0 %v946
      %v1144 = vpop.f32.mrb[0].mxu0
      %v1145 = vadd.f32 %v821, %v1144
      %v1146 = vpop.f32.mrb[0].mxu0
      %1147 = vmatprep.mubr.f32.mxu0 0.0
      %1148 = vmatmul.mubr.f32.gmra.mrb[0].mxu0 %v949
      %v1149 = vpop.f32.mrb[0].mxu0
      %v1150 = vadd.f32 %v826, %v1149
      %v1151 = vpop.f32.mrb[0].mxu0
      %1152 = vmatprep.mubr.f32.mxu0 0.0
      %1153 = vmatmul.mubr.f32.gmra.mrb[0].mxu0 %v952
      %v1154 = vpop.f32.mrb[0].mxu0
      %v1155 = vadd.f32 %v831, %v1154
      %v1156 = vpop.f32.mrb[0].mxu0
      %1157 = vmatprep.mubr.f32.mxu0 0.0
      %1158 = vmatmul.mubr.f32.gmra.mrb[0].mxu0 %v955
      %v1159 = vpop.f32.mrb[0].mxu0
      %v1160 = vadd.f32 %v836, %v1159
      %v1161 = vpop.f32.mrb[0].mxu0
      %1162 = vmatprep.mubr.f32.mxu0 0.0
      %1163 = vmatmul.mubr.f32.gmra.mrb[0].mxu0 %v958
      %v1164 = vpop.f32.mrb[0].mxu0
      %v1165 = vadd.f32 %v841, %v1164
      %v1166 = vpop.f32.mrb[0].mxu0
      %1167 = vmatprep.mubr.f32.mxu0 0.0
      %1168 = vmatmul.mubr.f32.gmra.mrb[0].mxu0 %v961
      %v1169 = vpop.f32.mrb[0].mxu0
      %v1170 = vadd.f32 %v846, %v1169
      %v1171 = vpop.f32.mrb[0].mxu0
      %1172 = vmatprep.mubr.f32.mxu0 0.0
      %1173 = vmatmul.mubr.f32.gmra.mrb[0].mxu0 %v964
      %v1174 = vpop.f32.mrb[0].mxu0
      %v1175 = vadd.f32 %v851, %v1174
      %v1176 = vpop.f32.mrb[0].mxu0
      %1177 = vmatprep.mubr.f32.mxu0 0.0
      %1178 = vmatmul.mubr.f32.gmra.mrb[0].mxu0 %v967
      %v1179 = vpop.f32.mrb[0].mxu0
      %v1180 = vadd.f32 %v856, %v1179
      %v1181 = vpop.f32.mrb[0].mxu0
      %1182 = vmatprep.mubr.f32.mxu0 0.0
      %1183 = vmatmul.mubr.f32.gmra.mrb[0].mxu0 %v970
      %v1184 = vpop.f32.mrb[0].mxu0
      %v1185 = vadd.f32 %v861, %v1184
      %v1186 = vpop.f32.mrb[0].mxu0
      %1187 = vmatprep.mubr.f32.mxu0 0.0
      %1188 = vmatmul.mubr.f32.gmra.mrb[0].mxu0 %v973
      %v1189 = vpop.f32.mrb[0].mxu0
      %v1190 = vadd.f32 %v866, %v1189
      %v1191 = vpop.f32.mrb[0].mxu0
      %1192 = vmatprep.mubr.f32.mxu0 0.0
      %1193 = vmatmul.mubr.f32.gmra.mrb[0].mxu0 %v976
      %v1194 = vpop.f32.mrb[0].mxu0
      %v1195 = vadd.f32 %v871, %v1194
      %v1196 = vpop.f32.mrb[0].mxu0
      %1197 = vmatprep.mubr.f32.mxu0 0.0
      %1198 = vmatmul.mubr.f32.gmra.mrb[0].mxu0 %v979
      %v1199 = vpop.f32.mrb[0].mxu0
      %v1200 = vadd.f32 %v876, %v1199
      %v1201 = vpop.f32.mrb[0].mxu0
      %1202 = vmatprep.mubr.f32.mxu0 0.0
      %1203 = vmatmul.mubr.f32.gmra.mrb[0].mxu0 %v982
      %v1204 = vpop.f32.mrb[0].mxu0
      %v1205 = vadd.f32 %v881, %v1204
      %v1206 = vpop.f32.mrb[0].mxu0
      %1207 = vmatprep.mubr.f32.mxu0 0.0
      %1208 = vmatmul.mubr.f32.gmra.mrb[0].mxu0 %v985
      %v1209 = vpop.f32.mrb[0].mxu0
      %v1210 = vadd.f32 %v886, %v1209
      %v1211 = vpop.f32.mrb[0].mxu0
      %1212 = vmatprep.mubr.f32.mxu0 0.0
      %1213 = vmatmul.mubr.f32.gmra.mrb[0].mxu0 %v988
      %v1214 = vpop.f32.mrb[0].mxu0
      %v1215 = vadd.f32 %v891, %v1214
      %v1216 = vpop.f32.mrb[0].mxu0
      %1217 = vdwg.mxu0
      %v1218 = vld [vmem:[#allocation2 + $0x2] sm:$0xff]
      %v1219 = vld [vmem:[#allocation2 + $0xa] sm:$0xff]
      %v1220 = vld [vmem:[#allocation2 + $0x1a] sm:$0xff]
      %v1221 = vld [vmem:[#allocation2 + $0x22] sm:$0xff]
      %v1222 = vld [vmem:[#allocation2 + $0x32] sm:$0xff]
      %v1223 = vld [vmem:[#allocation2 + $0x3a] sm:$0xff]
      %v1224 = vld [vmem:[#allocation2 + $0x4a] sm:$0xff]
      %v1225 = vld [vmem:[#allocation2 + $0x52] sm:$0xff]
      %v1226 = vld [vmem:[#allocation2 + $0x62] sm:$0xff]
      %v1227 = vld [vmem:[#allocation2 + $0x6a] sm:$0xff]
      %v1228 = vld [vmem:[#allocation2 + $0x7a] sm:$0xff]
      %v1229 = vld [vmem:[#allocation2 + $0x82] sm:$0xff]
      %v1230 = vld [vmem:[#allocation2 + $0x92] sm:$0xff]
      %v1231 = vld [vmem:[#allocation2 + $0x9a] sm:$0xff]
      %v1232 = vld [vmem:[#allocation2 + $0xaa] sm:$0xff]
      %v1233 = vld [vmem:[#allocation2 + $0xb2] sm:$0xff]
      %v1234 = vld [vmem:[#allocation2 + $0xc2] sm:$0xff]
      %v1235 = vld [vmem:[#allocation2 + $0xca] sm:$0xff]
      %v1236 = vld [vmem:[#allocation2 + $0xda] sm:$0xff]
      %v1237 = vld [vmem:[#allocation2 + $0xe2] sm:$0xff]
      %v1238 = vld [vmem:[#allocation2 + $0xf2] sm:$0xff]
      %v1239 = vld [vmem:[#allocation2 + $0xfa] sm:$0xff]
      %v1240 = vld [vmem:[#allocation2 + $0x10a] sm:$0xff]
      %v1241 = vld [vmem:[#allocation2 + $0x112] sm:$0xff]
      %v1242 = vld [vmem:[#allocation2 + $0x122] sm:$0xff]
      %v1243 = vld [vmem:[#allocation2 + $0x12a] sm:$0xff]
      %v1244 = vld [vmem:[#allocation2 + $0x13a] sm:$0xff]
      %v1245 = vld [vmem:[#allocation2 + $0x142] sm:$0xff]
      %v1246 = vld [vmem:[#allocation2 + $0x152] sm:$0xff]
      %v1247 = vld [vmem:[#allocation2 + $0x15a] sm:$0xff]
      %v1248 = vld [vmem:[#allocation2 + $0x16a] sm:$0xff]
      %v1249 = vld [vmem:[#allocation2 + $0x172] sm:$0xff]
      %s1250 = scalar_lea.vmem %s3, 8
      %v1251 = vld [vmem:[%s1250] sm:$0xf]
      %v1253 = vsel %vm438, %v1218, 0
      %v1256 = vsel %vm438, %v1219, 0
      %v1259 = vsel %vm438, %v1220, 0
      %v1262 = vsel %vm438, %v1221, 0
      %v1265 = vsel %vm438, %v1222, 0
      %v1268 = vsel %vm438, %v1223, 0
      %v1271 = vsel %vm438, %v1224, 0
      %v1274 = vsel %vm438, %v1225, 0
      %v1277 = vsel %vm438, %v1226, 0
      %v1280 = vsel %vm438, %v1227, 0
      %v1283 = vsel %vm438, %v1228, 0
      %v1286 = vsel %vm438, %v1229, 0
      %v1289 = vsel %vm438, %v1230, 0
      %v1292 = vsel %vm438, %v1231, 0
      %v1295 = vsel %vm438, %v1232, 0
      %v1298 = vsel %vm438, %v1233, 0
      %v1301 = vsel %vm438, %v1234, 0
      %v1304 = vsel %vm438, %v1235, 0
      %v1307 = vsel %vm438, %v1236, 0
      %v1310 = vsel %vm438, %v1237, 0
      %v1313 = vsel %vm438, %v1238, 0
      %v1316 = vsel %vm438, %v1239, 0
      %v1319 = vsel %vm438, %v1240, 0
      %v1322 = vsel %vm438, %v1241, 0
      %v1325 = vsel %vm438, %v1242, 0
      %v1328 = vsel %vm438, %v1243, 0
      %v1331 = vsel %vm438, %v1244, 0
      %v1334 = vsel %vm438, %v1245, 0
      %v1337 = vsel %vm438, %v1246, 0
      %v1340 = vsel %vm438, %v1247, 0
      %v1343 = vsel %vm438, %v1248, 0
      %v1346 = vsel %vm438, %v1249, 0
      %v1349 = vsel %vm665, %v1251, 0
      %1351 = vmatprep.subr.mxu0 0.0
      %1352 = vmatpush1.msra.mxu0 %v1349
      %1353 = vmatprep.subr.mxu0 0.0
      %1354 = vmatpush1.msra.mxu0 0.0
      %1355 = vmatprep.subr.mxu0 0.0
      %1356 = vmatpush1.msra.mxu0 0.0
      %1357 = vmatprep.subr.mxu0 0.0
      %1358 = vmatpush1.msra.mxu0 0.0
      %1359 = vmatprep.subr.mxu0 0.0
      %1360 = vmatpush1.msra.mxu0 0.0
      %1361 = vmatprep.subr.mxu0 0.0
      %1362 = vmatpush1.msra.mxu0 0.0
      %1363 = vmatprep.subr.mxu0 0.0
      %1364 = vmatpush1.msra.mxu0 0.0
      %1365 = vmatprep.subr.mxu0 0.0
      %1366 = vmatpush1.msra.mxu0 0.0
      %1367 = vmatprep.subr.mxu0 0.0
      %1368 = vmatpush1.msra.mxu0 0.0
      %1369 = vmatprep.subr.mxu0 0.0
      %1370 = vmatpush1.msra.mxu0 0.0
      %1371 = vmatprep.subr.mxu0 0.0
      %1372 = vmatpush1.msra.mxu0 0.0
      %1373 = vmatprep.subr.mxu0 0.0
      %1374 = vmatpush1.msra.mxu0 0.0
      %1375 = vmatprep.subr.mxu0 0.0
      %1376 = vmatpush1.msra.mxu0 0.0
      %1377 = vmatprep.subr.mxu0 0.0
      %1378 = vmatpush1.msra.mxu0 0.0
      %1379 = vmatprep.subr.mxu0 0.0
      %1380 = vmatpush1.msra.mxu0 0.0
      %1381 = vmatprep.subr.mxu0 0.0
      %1382 = vmatpush1.msra.mxu0 0.0
      %1383 = vmatprep.subr.mxu0 0.0
      %1384 = vmatpush1.msra.mxu0 0.0
      %1385 = vmatprep.subr.mxu0 0.0
      %1386 = vmatpush1.msra.mxu0 0.0
      %1387 = vmatprep.subr.mxu0 0.0
      %1388 = vmatpush1.msra.mxu0 0.0
      %1389 = vmatprep.subr.mxu0 0.0
      %1390 = vmatpush1.msra.mxu0 0.0
      %1391 = vmatprep.subr.mxu0 0.0
      %1392 = vmatpush1.msra.mxu0 0.0
      %1393 = vmatprep.subr.mxu0 0.0
      %1394 = vmatpush1.msra.mxu0 0.0
      %1395 = vmatprep.subr.mxu0 0.0
      %1396 = vmatpush1.msra.mxu0 0.0
      %1397 = vmatprep.subr.mxu0 0.0
      %1398 = vmatpush1.msra.mxu0 0.0
      %1399 = vmatprep.subr.mxu0 0.0
      %1400 = vmatpush1.msra.mxu0 0.0
      %1401 = vmatprep.subr.mxu0 0.0
      %1402 = vmatpush1.msra.mxu0 0.0
      %1403 = vmatprep.subr.mxu0 0.0
      %1404 = vmatpush1.msra.mxu0 0.0
      %1405 = vmatprep.subr.mxu0 0.0
      %1406 = vmatpush1.msra.mxu0 0.0
      %1407 = vmatprep.subr.mxu0 0.0
      %1408 = vmatpush1.msra.mxu0 0.0
      %1409 = vmatprep.subr.mxu0 0.0
      %1410 = vmatpush1.msra.mxu0 0.0
      %1411 = vmatprep.subr.mxu0 0.0
      %1412 = vmatpush1.msra.mxu0 0.0
      %1413 = vmatprep.subr.mxu0 0.0
      %1414 = vmatpush1.msra.mxu0 0.0
      %1415 = vmatprep.mubr.f32.mxu0 0.0
      %1416 = vmatmul.mubr.f32.gmra.mrb[0].mxu0 %v1253
      %v1417 = vpop.f32.mrb[0].mxu0
      %v1418 = vadd.f32 0.0, %v1417
      %v1419 = vpop.f32.mrb[0].mxu0
      %1420 = vmatprep.mubr.f32.mxu0 0.0
      %1421 = vmatmul.mubr.f32.gmra.mrb[0].mxu0 %v1256
      %v1422 = vpop.f32.mrb[0].mxu0
      %v1423 = vadd.f32 0.0, %v1422
      %v1424 = vpop.f32.mrb[0].mxu0
      %1425 = vmatprep.mubr.f32.mxu0 0.0
      %1426 = vmatmul.mubr.f32.gmra.mrb[0].mxu0 %v1259
      %v1427 = vpop.f32.mrb[0].mxu0
      %v1428 = vadd.f32 0.0, %v1427
      %v1429 = vpop.f32.mrb[0].mxu0
      %1430 = vmatprep.mubr.f32.mxu0 0.0
      %1431 = vmatmul.mubr.f32.gmra.mrb[0].mxu0 %v1262
      %v1432 = vpop.f32.mrb[0].mxu0
      %v1433 = vadd.f32 0.0, %v1432
      %v1434 = vpop.f32.mrb[0].mxu0
      %1435 = vmatprep.mubr.f32.mxu0 0.0
      %1436 = vmatmul.mubr.f32.gmra.mrb[0].mxu0 %v1265
      %v1437 = vpop.f32.mrb[0].mxu0
      %v1438 = vadd.f32 0.0, %v1437
      %v1439 = vpop.f32.mrb[0].mxu0
      %1440 = vmatprep.mubr.f32.mxu0 0.0
      %1441 = vmatmul.mubr.f32.gmra.mrb[0].mxu0 %v1268
      %v1442 = vpop.f32.mrb[0].mxu0
      %v1443 = vadd.f32 0.0, %v1442
      %v1444 = vpop.f32.mrb[0].mxu0
      %1445 = vmatprep.mubr.f32.mxu0 0.0
      %1446 = vmatmul.mubr.f32.gmra.mrb[0].mxu0 %v1271
      %v1447 = vpop.f32.mrb[0].mxu0
      %v1448 = vadd.f32 0.0, %v1447
      %v1449 = vpop.f32.mrb[0].mxu0
      %1450 = vmatprep.mubr.f32.mxu0 0.0
      %1451 = vmatmul.mubr.f32.gmra.mrb[0].mxu0 %v1274
      %v1452 = vpop.f32.mrb[0].mxu0
      %v1453 = vadd.f32 0.0, %v1452
      %v1454 = vpop.f32.mrb[0].mxu0
      %1455 = vmatprep.mubr.f32.mxu0 0.0
      %1456 = vmatmul.mubr.f32.gmra.mrb[0].mxu0 %v1277
      %v1457 = vpop.f32.mrb[0].mxu0
      %v1458 = vadd.f32 0.0, %v1457
      %v1459 = vpop.f32.mrb[0].mxu0
      %1460 = vmatprep.mubr.f32.mxu0 0.0
      %1461 = vmatmul.mubr.f32.gmra.mrb[0].mxu0 %v1280
      %v1462 = vpop.f32.mrb[0].mxu0
      %v1463 = vadd.f32 0.0, %v1462
      %v1464 = vpop.f32.mrb[0].mxu0
      %1465 = vmatprep.mubr.f32.mxu0 0.0
      %1466 = vmatmul.mubr.f32.gmra.mrb[0].mxu0 %v1283
      %v1467 = vpop.f32.mrb[0].mxu0
      %v1468 = vadd.f32 0.0, %v1467
      %v1469 = vpop.f32.mrb[0].mxu0
      %1470 = vmatprep.mubr.f32.mxu0 0.0
      %1471 = vmatmul.mubr.f32.gmra.mrb[0].mxu0 %v1286
      %v1472 = vpop.f32.mrb[0].mxu0
      %v1473 = vadd.f32 0.0, %v1472
      %v1474 = vpop.f32.mrb[0].mxu0
      %1475 = vmatprep.mubr.f32.mxu0 0.0
      %1476 = vmatmul.mubr.f32.gmra.mrb[0].mxu0 %v1289
      %v1477 = vpop.f32.mrb[0].mxu0
      %v1478 = vadd.f32 0.0, %v1477
      %v1479 = vpop.f32.mrb[0].mxu0
      %1480 = vmatprep.mubr.f32.mxu0 0.0
      %1481 = vmatmul.mubr.f32.gmra.mrb[0].mxu0 %v1292
      %v1482 = vpop.f32.mrb[0].mxu0
      %v1483 = vadd.f32 0.0, %v1482
      %v1484 = vpop.f32.mrb[0].mxu0
      %1485 = vmatprep.mubr.f32.mxu0 0.0
      %1486 = vmatmul.mubr.f32.gmra.mrb[0].mxu0 %v1295
      %v1487 = vpop.f32.mrb[0].mxu0
      %v1488 = vadd.f32 0.0, %v1487
      %v1489 = vpop.f32.mrb[0].mxu0
      %1490 = vmatprep.mubr.f32.mxu0 0.0
      %1491 = vmatmul.mubr.f32.gmra.mrb[0].mxu0 %v1298
      %v1492 = vpop.f32.mrb[0].mxu0
      %v1493 = vadd.f32 0.0, %v1492
      %v1494 = vpop.f32.mrb[0].mxu0
      %1495 = vmatprep.mubr.f32.mxu0 0.0
      %1496 = vmatmul.mubr.f32.gmra.mrb[0].mxu0 %v1301
      %v1497 = vpop.f32.mrb[0].mxu0
      %v1498 = vadd.f32 0.0, %v1497
      %v1499 = vpop.f32.mrb[0].mxu0
      %1500 = vmatprep.mubr.f32.mxu0 0.0
      %1501 = vmatmul.mubr.f32.gmra.mrb[0].mxu0 %v1304
      %v1502 = vpop.f32.mrb[0].mxu0
      %v1503 = vadd.f32 0.0, %v1502
      %v1504 = vpop.f32.mrb[0].mxu0
      %1505 = vmatprep.mubr.f32.mxu0 0.0
      %1506 = vmatmul.mubr.f32.gmra.mrb[0].mxu0 %v1307
      %v1507 = vpop.f32.mrb[0].mxu0
      %v1508 = vadd.f32 0.0, %v1507
      %v1509 = vpop.f32.mrb[0].mxu0
      %1510 = vmatprep.mubr.f32.mxu0 0.0
      %1511 = vmatmul.mubr.f32.gmra.mrb[0].mxu0 %v1310
      %v1512 = vpop.f32.mrb[0].mxu0
      %v1513 = vadd.f32 0.0, %v1512
      %v1514 = vpop.f32.mrb[0].mxu0
      %1515 = vmatprep.mubr.f32.mxu0 0.0
      %1516 = vmatmul.mubr.f32.gmra.mrb[0].mxu0 %v1313
      %v1517 = vpop.f32.mrb[0].mxu0
      %v1518 = vadd.f32 0.0, %v1517
      %v1519 = vpop.f32.mrb[0].mxu0
      %1520 = vmatprep.mubr.f32.mxu0 0.0
      %1521 = vmatmul.mubr.f32.gmra.mrb[0].mxu0 %v1316
      %v1522 = vpop.f32.mrb[0].mxu0
      %v1523 = vadd.f32 0.0, %v1522
      %v1524 = vpop.f32.mrb[0].mxu0
      %1525 = vmatprep.mubr.f32.mxu0 0.0
      %1526 = vmatmul.mubr.f32.gmra.mrb[0].mxu0 %v1319
      %v1527 = vpop.f32.mrb[0].mxu0
      %v1528 = vadd.f32 0.0, %v1527
      %v1529 = vpop.f32.mrb[0].mxu0
      %1530 = vmatprep.mubr.f32.mxu0 0.0
      %1531 = vmatmul.mubr.f32.gmra.mrb[0].mxu0 %v1322
      %v1532 = vpop.f32.mrb[0].mxu0
      %v1533 = vadd.f32 0.0, %v1532
      %v1534 = vpop.f32.mrb[0].mxu0
      %1535 = vmatprep.mubr.f32.mxu0 0.0
      %1536 = vmatmul.mubr.f32.gmra.mrb[0].mxu0 %v1325
      %v1537 = vpop.f32.mrb[0].mxu0
      %v1538 = vadd.f32 0.0, %v1537
      %v1539 = vpop.f32.mrb[0].mxu0
      %1540 = vmatprep.mubr.f32.mxu0 0.0
      %1541 = vmatmul.mubr.f32.gmra.mrb[0].mxu0 %v1328
      %v1542 = vpop.f32.mrb[0].mxu0
      %v1543 = vadd.f32 0.0, %v1542
      %v1544 = vpop.f32.mrb[0].mxu0
      %1545 = vmatprep.mubr.f32.mxu0 0.0
      %1546 = vmatmul.mubr.f32.gmra.mrb[0].mxu0 %v1331
      %v1547 = vpop.f32.mrb[0].mxu0
      %v1548 = vadd.f32 0.0, %v1547
      %v1549 = vpop.f32.mrb[0].mxu0
      %1550 = vmatprep.mubr.f32.mxu0 0.0
      %1551 = vmatmul.mubr.f32.gmra.mrb[0].mxu0 %v1334
      %v1552 = vpop.f32.mrb[0].mxu0
      %v1553 = vadd.f32 0.0, %v1552
      %v1554 = vpop.f32.mrb[0].mxu0
      %1555 = vmatprep.mubr.f32.mxu0 0.0
      %1556 = vmatmul.mubr.f32.gmra.mrb[0].mxu0 %v1337
      %v1557 = vpop.f32.mrb[0].mxu0
      %v1558 = vadd.f32 0.0, %v1557
      %v1559 = vpop.f32.mrb[0].mxu0
      %1560 = vmatprep.mubr.f32.mxu0 0.0
      %1561 = vmatmul.mubr.f32.gmra.mrb[0].mxu0 %v1340
      %v1562 = vpop.f32.mrb[0].mxu0
      %v1563 = vadd.f32 0.0, %v1562
      %v1564 = vpop.f32.mrb[0].mxu0
      %1565 = vmatprep.mubr.f32.mxu0 0.0
      %1566 = vmatmul.mubr.f32.gmra.mrb[0].mxu0 %v1343
      %v1567 = vpop.f32.mrb[0].mxu0
      %v1568 = vadd.f32 0.0, %v1567
      %v1569 = vpop.f32.mrb[0].mxu0
      %1570 = vmatprep.mubr.f32.mxu0 0.0
      %1571 = vmatmul.mubr.f32.gmra.mrb[0].mxu0 %v1346
      %v1572 = vpop.f32.mrb[0].mxu0
      %v1573 = vadd.f32 0.0, %v1572
      %v1574 = vpop.f32.mrb[0].mxu0
      %1575 = vdwg.mxu0
      %v1576 = vadd.f32 %v1060, %v1418
      %v1577 = vadd.f32 %v1065, %v1423
      %v1578 = vadd.f32 %v1070, %v1428
      %v1579 = vadd.f32 %v1075, %v1433
      %v1580 = vadd.f32 %v1080, %v1438
      %v1581 = vadd.f32 %v1085, %v1443
      %v1582 = vadd.f32 %v1090, %v1448
      %v1583 = vadd.f32 %v1095, %v1453
      %v1584 = vadd.f32 %v1100, %v1458
      %v1585 = vadd.f32 %v1105, %v1463
      %v1586 = vadd.f32 %v1110, %v1468
      %v1587 = vadd.f32 %v1115, %v1473
      %v1588 = vadd.f32 %v1120, %v1478
      %v1589 = vadd.f32 %v1125, %v1483
      %v1590 = vadd.f32 %v1130, %v1488
      %v1591 = vadd.f32 %v1135, %v1493
      %v1592 = vadd.f32 %v1140, %v1498
      %v1593 = vadd.f32 %v1145, %v1503
      %v1594 = vadd.f32 %v1150, %v1508
      %v1595 = vadd.f32 %v1155, %v1513
      %v1596 = vadd.f32 %v1160, %v1518
      %v1597 = vadd.f32 %v1165, %v1523
      %v1598 = vadd.f32 %v1170, %v1528
      %v1599 = vadd.f32 %v1175, %v1533
      %v1600 = vadd.f32 %v1180, %v1538
      %v1601 = vadd.f32 %v1185, %v1543
      %v1602 = vadd.f32 %v1190, %v1548
      %v1603 = vadd.f32 %v1195, %v1553
      %v1604 = vadd.f32 %v1200, %v1558
      %v1605 = vadd.f32 %v1205, %v1563
      %v1606 = vadd.f32 %v1210, %v1568
      %v1607 = vadd.f32 %v1215, %v1573
      %s1608 = scalar_lea.vmem [#allocation2], 24
      %v1609 = vld [vmem:[%s1608] sm:$0xff]
      %v1610 = vld [vmem:[%s1608 + $0x8] sm:$0xff]
      %v1611 = vld [vmem:[%s1608 + $0x18] sm:$0xff]
      %v1612 = vld [vmem:[%s1608 + $0x20] sm:$0xff]
      %v1613 = vld [vmem:[%s1608 + $0x30] sm:$0xff]
      %v1614 = vld [vmem:[%s1608 + $0x38] sm:$0xff]
      %v1615 = vld [vmem:[%s1608 + $0x48] sm:$0xff]
      %v1616 = vld [vmem:[%s1608 + $0x50] sm:$0xff]
      %v1617 = vld [vmem:[%s1608 + $0x60] sm:$0xff]
      %v1618 = vld [vmem:[%s1608 + $0x68] sm:$0xff]
      %v1619 = vld [vmem:[%s1608 + $0x78] sm:$0xff]
      %v1620 = vld [vmem:[%s1608 + $0x80] sm:$0xff]
      %v1621 = vld [vmem:[%s1608 + $0x90] sm:$0xff]
      %v1622 = vld [vmem:[%s1608 + $0x98] sm:$0xff]
      %v1623 = vld [vmem:[%s1608 + $0xa8] sm:$0xff]
      %v1624 = vld [vmem:[%s1608 + $0xb0] sm:$0xff]
      %v1625 = vld [vmem:[%s1608 + $0xc0] sm:$0xff]
      %v1626 = vld [vmem:[%s1608 + $0xc8] sm:$0xff]
      %v1627 = vld [vmem:[%s1608 + $0xd8] sm:$0xff]
      %v1628 = vld [vmem:[%s1608 + $0xe0] sm:$0xff]
      %v1629 = vld [vmem:[%s1608 + $0xf0] sm:$0xff]
      %v1630 = vld [vmem:[%s1608 + $0xf8] sm:$0xff]
      %v1631 = vld [vmem:[%s1608 + $0x108] sm:$0xff]
      %v1632 = vld [vmem:[%s1608 + $0x110] sm:$0xff]
      %v1633 = vld [vmem:[%s1608 + $0x120] sm:$0xff]
      %v1634 = vld [vmem:[%s1608 + $0x128] sm:$0xff]
      %v1635 = vld [vmem:[%s1608 + $0x138] sm:$0xff]
      %v1636 = vld [vmem:[%s1608 + $0x140] sm:$0xff]
      %v1637 = vld [vmem:[%s1608 + $0x150] sm:$0xff]
      %v1638 = vld [vmem:[%s1608 + $0x158] sm:$0xff]
      %v1639 = vld [vmem:[%s1608 + $0x168] sm:$0xff]
      %v1640 = vld [vmem:[%s1608 + $0x170] sm:$0xff]
      %s1641 = scalar_lea.vmem %s3, 12
      %v1642 = vld [vmem:[%s1641] sm:$0xf]
      %v1644 = vsel %vm438, %v1609, 0
      %v1647 = vsel %vm438, %v1610, 0
      %v1650 = vsel %vm438, %v1611, 0
      %v1653 = vsel %vm438, %v1612, 0
      %v1656 = vsel %vm438, %v1613, 0
      %v1659 = vsel %vm438, %v1614, 0
      %v1662 = vsel %vm438, %v1615, 0
      %v1665 = vsel %vm438, %v1616, 0
      %v1668 = vsel %vm438, %v1617, 0
      %v1671 = vsel %vm438, %v1618, 0
      %v1674 = vsel %vm438, %v1619, 0
      %v1677 = vsel %vm438, %v1620, 0
      %v1680 = vsel %vm438, %v1621, 0
      %v1683 = vsel %vm438, %v1622, 0
      %v1686 = vsel %vm438, %v1623, 0
      %v1689 = vsel %vm438, %v1624, 0
      %v1692 = vsel %vm438, %v1625, 0
      %v1695 = vsel %vm438, %v1626, 0
      %v1698 = vsel %vm438, %v1627, 0
      %v1701 = vsel %vm438, %v1628, 0
      %v1704 = vsel %vm438, %v1629, 0
      %v1707 = vsel %vm438, %v1630, 0
      %v1710 = vsel %vm438, %v1631, 0
      %v1713 = vsel %vm438, %v1632, 0
      %v1716 = vsel %vm438, %v1633, 0
      %v1719 = vsel %vm438, %v1634, 0
      %v1722 = vsel %vm438, %v1635, 0
      %v1725 = vsel %vm438, %v1636, 0
      %v1728 = vsel %vm438, %v1637, 0
      %v1731 = vsel %vm438, %v1638, 0
      %v1734 = vsel %vm438, %v1639, 0
      %v1737 = vsel %vm438, %v1640, 0
      %v1740 = vsel %vm665, %v1642, 0
      %1742 = vmatprep.subr.mxu0 0.0
      %1743 = vmatpush1.msra.mxu0 %v1740
      %1744 = vmatprep.subr.mxu0 0.0
      %1745 = vmatpush1.msra.mxu0 0.0
      %1746 = vmatprep.subr.mxu0 0.0
      %1747 = vmatpush1.msra.mxu0 0.0
      %1748 = vmatprep.subr.mxu0 0.0
      %1749 = vmatpush1.msra.mxu0 0.0
      %1750 = vmatprep.subr.mxu0 0.0
      %1751 = vmatpush1.msra.mxu0 0.0
      %1752 = vmatprep.subr.mxu0 0.0
      %1753 = vmatpush1.msra.mxu0 0.0
      %1754 = vmatprep.subr.mxu0 0.0
      %1755 = vmatpush1.msra.mxu0 0.0
      %1756 = vmatprep.subr.mxu0 0.0
      %1757 = vmatpush1.msra.mxu0 0.0
      %1758 = vmatprep.subr.mxu0 0.0
      %1759 = vmatpush1.msra.mxu0 0.0
      %1760 = vmatprep.subr.mxu0 0.0
      %1761 = vmatpush1.msra.mxu0 0.0
      %1762 = vmatprep.subr.mxu0 0.0
      %1763 = vmatpush1.msra.mxu0 0.0
      %1764 = vmatprep.subr.mxu0 0.0
      %1765 = vmatpush1.msra.mxu0 0.0
      %1766 = vmatprep.subr.mxu0 0.0
      %1767 = vmatpush1.msra.mxu0 0.0
      %1768 = vmatprep.subr.mxu0 0.0
      %1769 = vmatpush1.msra.mxu0 0.0
      %1770 = vmatprep.subr.mxu0 0.0
      %1771 = vmatpush1.msra.mxu0 0.0
      %1772 = vmatprep.subr.mxu0 0.0
      %1773 = vmatpush1.msra.mxu0 0.0
      %1774 = vmatprep.subr.mxu0 0.0
      %1775 = vmatpush1.msra.mxu0 0.0
      %1776 = vmatprep.subr.mxu0 0.0
      %1777 = vmatpush1.msra.mxu0 0.0
      %1778 = vmatprep.subr.mxu0 0.0
      %1779 = vmatpush1.msra.mxu0 0.0
      %1780 = vmatprep.subr.mxu0 0.0
      %1781 = vmatpush1.msra.mxu0 0.0
      %1782 = vmatprep.subr.mxu0 0.0
      %1783 = vmatpush1.msra.mxu0 0.0
      %1784 = vmatprep.subr.mxu0 0.0
      %1785 = vmatpush1.msra.mxu0 0.0
      %1786 = vmatprep.subr.mxu0 0.0
      %1787 = vmatpush1.msra.mxu0 0.0
      %1788 = vmatprep.subr.mxu0 0.0
      %1789 = vmatpush1.msra.mxu0 0.0
      %1790 = vmatprep.subr.mxu0 0.0
      %1791 = vmatpush1.msra.mxu0 0.0
      %1792 = vmatprep.subr.mxu0 0.0
      %1793 = vmatpush1.msra.mxu0 0.0
      %1794 = vmatprep.subr.mxu0 0.0
      %1795 = vmatpush1.msra.mxu0 0.0
      %1796 = vmatprep.subr.mxu0 0.0
      %1797 = vmatpush1.msra.mxu0 0.0
      %1798 = vmatprep.subr.mxu0 0.0
      %1799 = vmatpush1.msra.mxu0 0.0
      %1800 = vmatprep.subr.mxu0 0.0
      %1801 = vmatpush1.msra.mxu0 0.0
      %1802 = vmatprep.subr.mxu0 0.0
      %1803 = vmatpush1.msra.mxu0 0.0
      %1804 = vmatprep.subr.mxu0 0.0
      %1805 = vmatpush1.msra.mxu0 0.0
      %1806 = vmatprep.mubr.f32.mxu0 0.0
      %1807 = vmatmul.mubr.f32.gmra.mrb[0].mxu0 %v1644
      %v1808 = vpop.f32.mrb[0].mxu0
      %v1809 = vadd.f32 0.0, %v1808
      %v1810 = vpop.f32.mrb[0].mxu0
      %1811 = vmatprep.mubr.f32.mxu0 0.0
      %1812 = vmatmul.mubr.f32.gmra.mrb[0].mxu0 %v1647
      %v1813 = vpop.f32.mrb[0].mxu0
      %v1814 = vadd.f32 0.0, %v1813
      %v1815 = vpop.f32.mrb[0].mxu0
      %1816 = vmatprep.mubr.f32.mxu0 0.0
      %1817 = vmatmul.mubr.f32.gmra.mrb[0].mxu0 %v1650
      %v1818 = vpop.f32.mrb[0].mxu0
      %v1819 = vadd.f32 0.0, %v1818
      %v1820 = vpop.f32.mrb[0].mxu0
      %1821 = vmatprep.mubr.f32.mxu0 0.0
      %1822 = vmatmul.mubr.f32.gmra.mrb[0].mxu0 %v1653
      %v1823 = vpop.f32.mrb[0].mxu0
      %v1824 = vadd.f32 0.0, %v1823
      %v1825 = vpop.f32.mrb[0].mxu0
      %1826 = vmatprep.mubr.f32.mxu0 0.0
      %1827 = vmatmul.mubr.f32.gmra.mrb[0].mxu0 %v1656
      %v1828 = vpop.f32.mrb[0].mxu0
      %v1829 = vadd.f32 0.0, %v1828
      %v1830 = vpop.f32.mrb[0].mxu0
      %1831 = vmatprep.mubr.f32.mxu0 0.0
      %1832 = vmatmul.mubr.f32.gmra.mrb[0].mxu0 %v1659
      %v1833 = vpop.f32.mrb[0].mxu0
      %v1834 = vadd.f32 0.0, %v1833
      %v1835 = vpop.f32.mrb[0].mxu0
      %1836 = vmatprep.mubr.f32.mxu0 0.0
      %1837 = vmatmul.mubr.f32.gmra.mrb[0].mxu0 %v1662
      %v1838 = vpop.f32.mrb[0].mxu0
      %v1839 = vadd.f32 0.0, %v1838
      %v1840 = vpop.f32.mrb[0].mxu0
      %1841 = vmatprep.mubr.f32.mxu0 0.0
      %1842 = vmatmul.mubr.f32.gmra.mrb[0].mxu0 %v1665
      %v1843 = vpop.f32.mrb[0].mxu0
      %v1844 = vadd.f32 0.0, %v1843
      %v1845 = vpop.f32.mrb[0].mxu0
      %1846 = vmatprep.mubr.f32.mxu0 0.0
      %1847 = vmatmul.mubr.f32.gmra.mrb[0].mxu0 %v1668
      %v1848 = vpop.f32.mrb[0].mxu0
      %v1849 = vadd.f32 0.0, %v1848
      %v1850 = vpop.f32.mrb[0].mxu0
      %1851 = vmatprep.mubr.f32.mxu0 0.0
      %1852 = vmatmul.mubr.f32.gmra.mrb[0].mxu0 %v1671
      %v1853 = vpop.f32.mrb[0].mxu0
      %v1854 = vadd.f32 0.0, %v1853
      %v1855 = vpop.f32.mrb[0].mxu0
      %1856 = vmatprep.mubr.f32.mxu0 0.0
      %1857 = vmatmul.mubr.f32.gmra.mrb[0].mxu0 %v1674
      %v1858 = vpop.f32.mrb[0].mxu0
      %v1859 = vadd.f32 0.0, %v1858
      %v1860 = vpop.f32.mrb[0].mxu0
      %1861 = vmatprep.mubr.f32.mxu0 0.0
      %1862 = vmatmul.mubr.f32.gmra.mrb[0].mxu0 %v1677
      %v1863 = vpop.f32.mrb[0].mxu0
      %v1864 = vadd.f32 0.0, %v1863
      %v1865 = vpop.f32.mrb[0].mxu0
      %1866 = vmatprep.mubr.f32.mxu0 0.0
      %1867 = vmatmul.mubr.f32.gmra.mrb[0].mxu0 %v1680
      %v1868 = vpop.f32.mrb[0].mxu0
      %v1869 = vadd.f32 0.0, %v1868
      %v1870 = vpop.f32.mrb[0].mxu0
      %1871 = vmatprep.mubr.f32.mxu0 0.0
      %1872 = vmatmul.mubr.f32.gmra.mrb[0].mxu0 %v1683
      %v1873 = vpop.f32.mrb[0].mxu0
      %v1874 = vadd.f32 0.0, %v1873
      %v1875 = vpop.f32.mrb[0].mxu0
      %1876 = vmatprep.mubr.f32.mxu0 0.0
      %1877 = vmatmul.mubr.f32.gmra.mrb[0].mxu0 %v1686
      %v1878 = vpop.f32.mrb[0].mxu0
      %v1879 = vadd.f32 0.0, %v1878
      %v1880 = vpop.f32.mrb[0].mxu0
      %1881 = vmatprep.mubr.f32.mxu0 0.0
      %1882 = vmatmul.mubr.f32.gmra.mrb[0].mxu0 %v1689
      %v1883 = vpop.f32.mrb[0].mxu0
      %v1884 = vadd.f32 0.0, %v1883
      %v1885 = vpop.f32.mrb[0].mxu0
      %1886 = vmatprep.mubr.f32.mxu0 0.0
      %1887 = vmatmul.mubr.f32.gmra.mrb[0].mxu0 %v1692
      %v1888 = vpop.f32.mrb[0].mxu0
      %v1889 = vadd.f32 0.0, %v1888
      %v1890 = vpop.f32.mrb[0].mxu0
      %1891 = vmatprep.mubr.f32.mxu0 0.0
      %1892 = vmatmul.mubr.f32.gmra.mrb[0].mxu0 %v1695
      %v1893 = vpop.f32.mrb[0].mxu0
      %v1894 = vadd.f32 0.0, %v1893
      %v1895 = vpop.f32.mrb[0].mxu0
      %1896 = vmatprep.mubr.f32.mxu0 0.0
      %1897 = vmatmul.mubr.f32.gmra.mrb[0].mxu0 %v1698
      %v1898 = vpop.f32.mrb[0].mxu0
      %v1899 = vadd.f32 0.0, %v1898
      %v1900 = vpop.f32.mrb[0].mxu0
      %1901 = vmatprep.mubr.f32.mxu0 0.0
      %1902 = vmatmul.mubr.f32.gmra.mrb[0].mxu0 %v1701
      %v1903 = vpop.f32.mrb[0].mxu0
      %v1904 = vadd.f32 0.0, %v1903
      %v1905 = vpop.f32.mrb[0].mxu0
      %1906 = vmatprep.mubr.f32.mxu0 0.0
      %1907 = vmatmul.mubr.f32.gmra.mrb[0].mxu0 %v1704
      %v1908 = vpop.f32.mrb[0].mxu0
      %v1909 = vadd.f32 0.0, %v1908
      %v1910 = vpop.f32.mrb[0].mxu0
      %1911 = vmatprep.mubr.f32.mxu0 0.0
      %1912 = vmatmul.mubr.f32.gmra.mrb[0].mxu0 %v1707
      %v1913 = vpop.f32.mrb[0].mxu0
      %v1914 = vadd.f32 0.0, %v1913
      %v1915 = vpop.f32.mrb[0].mxu0
      %1916 = vmatprep.mubr.f32.mxu0 0.0
      %1917 = vmatmul.mubr.f32.gmra.mrb[0].mxu0 %v1710
      %v1918 = vpop.f32.mrb[0].mxu0
      %v1919 = vadd.f32 0.0, %v1918
      %v1920 = vpop.f32.mrb[0].mxu0
      %1921 = vmatprep.mubr.f32.mxu0 0.0
      %1922 = vmatmul.mubr.f32.gmra.mrb[0].mxu0 %v1713
      %v1923 = vpop.f32.mrb[0].mxu0
      %v1924 = vadd.f32 0.0, %v1923
      %v1925 = vpop.f32.mrb[0].mxu0
      %1926 = vmatprep.mubr.f32.mxu0 0.0
      %1927 = vmatmul.mubr.f32.gmra.mrb[0].mxu0 %v1716
      %v1928 = vpop.f32.mrb[0].mxu0
      %v1929 = vadd.f32 0.0, %v1928
      %v1930 = vpop.f32.mrb[0].mxu0
      %1931 = vmatprep.mubr.f32.mxu0 0.0
      %1932 = vmatmul.mubr.f32.gmra.mrb[0].mxu0 %v1719
      %v1933 = vpop.f32.mrb[0].mxu0
      %v1934 = vadd.f32 0.0, %v1933
      %v1935 = vpop.f32.mrb[0].mxu0
      %1936 = vmatprep.mubr.f32.mxu0 0.0
      %1937 = vmatmul.mubr.f32.gmra.mrb[0].mxu0 %v1722
      %v1938 = vpop.f32.mrb[0].mxu0
      %v1939 = vadd.f32 0.0, %v1938
      %v1940 = vpop.f32.mrb[0].mxu0
      %1941 = vmatprep.mubr.f32.mxu0 0.0
      %1942 = vmatmul.mubr.f32.gmra.mrb[0].mxu0 %v1725
      %v1943 = vpop.f32.mrb[0].mxu0
      %v1944 = vadd.f32 0.0, %v1943
      %v1945 = vpop.f32.mrb[0].mxu0
      %1946 = vmatprep.mubr.f32.mxu0 0.0
      %1947 = vmatmul.mubr.f32.gmra.mrb[0].mxu0 %v1728
      %v1948 = vpop.f32.mrb[0].mxu0
      %v1949 = vadd.f32 0.0, %v1948
      %v1950 = vpop.f32.mrb[0].mxu0
      %1951 = vmatprep.mubr.f32.mxu0 0.0
      %1952 = vmatmul.mubr.f32.gmra.mrb[0].mxu0 %v1731
      %v1953 = vpop.f32.mrb[0].mxu0
      %v1954 = vadd.f32 0.0, %v1953
      %v1955 = vpop.f32.mrb[0].mxu0
      %1956 = vmatprep.mubr.f32.mxu0 0.0
      %1957 = vmatmul.mubr.f32.gmra.mrb[0].mxu0 %v1734
      %v1958 = vpop.f32.mrb[0].mxu0
      %v1959 = vadd.f32 0.0, %v1958
      %v1960 = vpop.f32.mrb[0].mxu0
      %1961 = vmatprep.mubr.f32.mxu0 0.0
      %1962 = vmatmul.mubr.f32.gmra.mrb[0].mxu0 %v1737
      %v1963 = vpop.f32.mrb[0].mxu0
      %v1964 = vadd.f32 0.0, %v1963
      %v1965 = vpop.f32.mrb[0].mxu0
      %1966 = vdwg.mxu0
      %v1967 = vadd.f32 %v1576, %v1809
      %v1968 = vadd.f32 %v1577, %v1814
      %v1969 = vadd.f32 %v1578, %v1819
      %v1970 = vadd.f32 %v1579, %v1824
      %v1971 = vadd.f32 %v1580, %v1829
      %v1972 = vadd.f32 %v1581, %v1834
      %v1973 = vadd.f32 %v1582, %v1839
      %v1974 = vadd.f32 %v1583, %v1844
      %v1975 = vadd.f32 %v1584, %v1849
      %v1976 = vadd.f32 %v1585, %v1854
      %v1977 = vadd.f32 %v1586, %v1859
      %v1978 = vadd.f32 %v1587, %v1864
      %v1979 = vadd.f32 %v1588, %v1869
      %v1980 = vadd.f32 %v1589, %v1874
      %v1981 = vadd.f32 %v1590, %v1879
      %v1982 = vadd.f32 %v1591, %v1884
      %v1983 = vadd.f32 %v1592, %v1889
      %v1984 = vadd.f32 %v1593, %v1894
      %v1985 = vadd.f32 %v1594, %v1899
      %v1986 = vadd.f32 %v1595, %v1904
      %v1987 = vadd.f32 %v1596, %v1909
      %v1988 = vadd.f32 %v1597, %v1914
      %v1989 = vadd.f32 %v1598, %v1919
      %v1990 = vadd.f32 %v1599, %v1924
      %v1991 = vadd.f32 %v1600, %v1929
      %v1992 = vadd.f32 %v1601, %v1934
      %v1993 = vadd.f32 %v1602, %v1939
      %v1994 = vadd.f32 %v1603, %v1944
      %v1995 = vadd.f32 %v1604, %v1949
      %v1996 = vadd.f32 %v1605, %v1954
      %v1997 = vadd.f32 %v1606, %v1959
      %v1998 = vadd.f32 %v1607, %v1964
      %v1999 = vld [vmem:[%s1608 + $0x1] sm:$0xff]
      %v2000 = vld [vmem:[%s1608 + $0x9] sm:$0xff]
      %v2001 = vld [vmem:[%s1608 + $0x19] sm:$0xff]
      %v2002 = vld [vmem:[%s1608 + $0x21] sm:$0xff]
      %v2003 = vld [vmem:[%s1608 + $0x31] sm:$0xff]
      %v2004 = vld [vmem:[%s1608 + $0x39] sm:$0xff]
      %v2005 = vld [vmem:[%s1608 + $0x49] sm:$0xff]
      %v2006 = vld [vmem:[%s1608 + $0x51] sm:$0xff]
      %v2007 = vld [vmem:[%s1608 + $0x61] sm:$0xff]
      %v2008 = vld [vmem:[%s1608 + $0x69] sm:$0xff]
      %v2009 = vld [vmem:[%s1608 + $0x79] sm:$0xff]
      %v2010 = vld [vmem:[%s1608 + $0x81] sm:$0xff]
      %v2011 = vld [vmem:[%s1608 + $0x91] sm:$0xff]
      %v2012 = vld [vmem:[%s1608 + $0x99] sm:$0xff]
      %v2013 = vld [vmem:[%s1608 + $0xa9] sm:$0xff]
      %v2014 = vld [vmem:[%s1608 + $0xb1] sm:$0xff]
      %v2015 = vld [vmem:[%s1608 + $0xc1] sm:$0xff]
      %v2016 = vld [vmem:[%s1608 + $0xc9] sm:$0xff]
      %v2017 = vld [vmem:[%s1608 + $0xd9] sm:$0xff]
      %v2018 = vld [vmem:[%s1608 + $0xe1] sm:$0xff]
      %v2019 = vld [vmem:[%s1608 + $0xf1] sm:$0xff]
      %v2020 = vld [vmem:[%s1608 + $0xf9] sm:$0xff]
      %v2021 = vld [vmem:[%s1608 + $0x109] sm:$0xff]
      %v2022 = vld [vmem:[%s1608 + $0x111] sm:$0xff]
      %v2023 = vld [vmem:[%s1608 + $0x121] sm:$0xff]
      %v2024 = vld [vmem:[%s1608 + $0x129] sm:$0xff]
      %v2025 = vld [vmem:[%s1608 + $0x139] sm:$0xff]
      %v2026 = vld [vmem:[%s1608 + $0x141] sm:$0xff]
      %v2027 = vld [vmem:[%s1608 + $0x151] sm:$0xff]
      %v2028 = vld [vmem:[%s1608 + $0x159] sm:$0xff]
      %v2029 = vld [vmem:[%s1608 + $0x169] sm:$0xff]
      %v2030 = vld [vmem:[%s1608 + $0x171] sm:$0xff]
      %s2031 = scalar_lea.vmem %s3, 16
      %v2032 = vld [vmem:[%s2031] sm:$0xf]
      %v2034 = vsel %vm438, %v1999, 0
      %v2037 = vsel %vm438, %v2000, 0
      %v2040 = vsel %vm438, %v2001, 0
      %v2043 = vsel %vm438, %v2002, 0
      %v2046 = vsel %vm438, %v2003, 0
      %v2049 = vsel %vm438, %v2004, 0
      %v2052 = vsel %vm438, %v2005, 0
      %v2055 = vsel %vm438, %v2006, 0
      %v2058 = vsel %vm438, %v2007, 0
      %v2061 = vsel %vm438, %v2008, 0
      %v2064 = vsel %vm438, %v2009, 0
      %v2067 = vsel %vm438, %v2010, 0
      %v2070 = vsel %vm438, %v2011, 0
      %v2073 = vsel %vm438, %v2012, 0
      %v2076 = vsel %vm438, %v2013, 0
      %v2079 = vsel %vm438, %v2014, 0
      %v2082 = vsel %vm438, %v2015, 0
      %v2085 = vsel %vm438, %v2016, 0
      %v2088 = vsel %vm438, %v2017, 0
      %v2091 = vsel %vm438, %v2018, 0
      %v2094 = vsel %vm438, %v2019, 0
      %v2097 = vsel %vm438, %v2020, 0
      %v2100 = vsel %vm438, %v2021, 0
      %v2103 = vsel %vm438, %v2022, 0
      %v2106 = vsel %vm438, %v2023, 0
      %v2109 = vsel %vm438, %v2024, 0
      %v2112 = vsel %vm438, %v2025, 0
      %v2115 = vsel %vm438, %v2026, 0
      %v2118 = vsel %vm438, %v2027, 0
      %v2121 = vsel %vm438, %v2028, 0
      %v2124 = vsel %vm438, %v2029, 0
      %v2127 = vsel %vm438, %v2030, 0
      %v2130 = vsel %vm665, %v2032, 0
      %2132 = vmatprep.subr.mxu0 0.0
      %2133 = vmatpush1.msra.mxu0 %v2130
      %2134 = vmatprep.subr.mxu0 0.0
      %2135 = vmatpush1.msra.mxu0 0.0
      %2136 = vmatprep.subr.mxu0 0.0
      %2137 = vmatpush1.msra.mxu0 0.0
      %2138 = vmatprep.subr.mxu0 0.0
      %2139 = vmatpush1.msra.mxu0 0.0
      %2140 = vmatprep.subr.mxu0 0.0
      %2141 = vmatpush1.msra.mxu0 0.0
      %2142 = vmatprep.subr.mxu0 0.0
      %2143 = vmatpush1.msra.mxu0 0.0
      %2144 = vmatprep.subr.mxu0 0.0
      %2145 = vmatpush1.msra.mxu0 0.0
      %2146 = vmatprep.subr.mxu0 0.0
      %2147 = vmatpush1.msra.mxu0 0.0
      %2148 = vmatprep.subr.mxu0 0.0
      %2149 = vmatpush1.msra.mxu0 0.0
      %2150 = vmatprep.subr.mxu0 0.0
      %2151 = vmatpush1.msra.mxu0 0.0
      %2152 = vmatprep.subr.mxu0 0.0
      %2153 = vmatpush1.msra.mxu0 0.0
      %2154 = vmatprep.subr.mxu0 0.0
      %2155 = vmatpush1.msra.mxu0 0.0
      %2156 = vmatprep.subr.mxu0 0.0
      %2157 = vmatpush1.msra.mxu0 0.0
      %2158 = vmatprep.subr.mxu0 0.0
      %2159 = vmatpush1.msra.mxu0 0.0
      %2160 = vmatprep.subr.mxu0 0.0
      %2161 = vmatpush1.msra.mxu0 0.0
      %2162 = vmatprep.subr.mxu0 0.0
      %2163 = vmatpush1.msra.mxu0 0.0
      %2164 = vmatprep.subr.mxu0 0.0
      %2165 = vmatpush1.msra.mxu0 0.0
      %2166 = vmatprep.subr.mxu0 0.0
      %2167 = vmatpush1.msra.mxu0 0.0
      %2168 = vmatprep.subr.mxu0 0.0
      %2169 = vmatpush1.msra.mxu0 0.0
      %2170 = vmatprep.subr.mxu0 0.0
      %2171 = vmatpush1.msra.mxu0 0.0
      %2172 = vmatprep.subr.mxu0 0.0
      %2173 = vmatpush1.msra.mxu0 0.0
      %2174 = vmatprep.subr.mxu0 0.0
      %2175 = vmatpush1.msra.mxu0 0.0
      %2176 = vmatprep.subr.mxu0 0.0
      %2177 = vmatpush1.msra.mxu0 0.0
      %2178 = vmatprep.subr.mxu0 0.0
      %2179 = vmatpush1.msra.mxu0 0.0
      %2180 = vmatprep.subr.mxu0 0.0
      %2181 = vmatpush1.msra.mxu0 0.0
      %2182 = vmatprep.subr.mxu0 0.0
      %2183 = vmatpush1.msra.mxu0 0.0
      %2184 = vmatprep.subr.mxu0 0.0
      %2185 = vmatpush1.msra.mxu0 0.0
      %2186 = vmatprep.subr.mxu0 0.0
      %2187 = vmatpush1.msra.mxu0 0.0
      %2188 = vmatprep.subr.mxu0 0.0
      %2189 = vmatpush1.msra.mxu0 0.0
      %2190 = vmatprep.subr.mxu0 0.0
      %2191 = vmatpush1.msra.mxu0 0.0
      %2192 = vmatprep.subr.mxu0 0.0
      %2193 = vmatpush1.msra.mxu0 0.0
      %2194 = vmatprep.subr.mxu0 0.0
      %2195 = vmatpush1.msra.mxu0 0.0
      %2196 = vmatprep.mubr.f32.mxu0 0.0
      %2197 = vmatmul.mubr.f32.gmra.mrb[0].mxu0 %v2034
      %v2198 = vpop.f32.mrb[0].mxu0
      %v2199 = vadd.f32 0.0, %v2198
      %v2200 = vpop.f32.mrb[0].mxu0
      %2201 = vmatprep.mubr.f32.mxu0 0.0
      %2202 = vmatmul.mubr.f32.gmra.mrb[0].mxu0 %v2037
      %v2203 = vpop.f32.mrb[0].mxu0
      %v2204 = vadd.f32 0.0, %v2203
      %v2205 = vpop.f32.mrb[0].mxu0
      %2206 = vmatprep.mubr.f32.mxu0 0.0
      %2207 = vmatmul.mubr.f32.gmra.mrb[0].mxu0 %v2040
      %v2208 = vpop.f32.mrb[0].mxu0
      %v2209 = vadd.f32 0.0, %v2208
      %v2210 = vpop.f32.mrb[0].mxu0
      %2211 = vmatprep.mubr.f32.mxu0 0.0
      %2212 = vmatmul.mubr.f32.gmra.mrb[0].mxu0 %v2043
      %v2213 = vpop.f32.mrb[0].mxu0
      %v2214 = vadd.f32 0.0, %v2213
      %v2215 = vpop.f32.mrb[0].mxu0
      %2216 = vmatprep.mubr.f32.mxu0 0.0
      %2217 = vmatmul.mubr.f32.gmra.mrb[0].mxu0 %v2046
      %v2218 = vpop.f32.mrb[0].mxu0
      %v2219 = vadd.f32 0.0, %v2218
      %v2220 = vpop.f32.mrb[0].mxu0
      %2221 = vmatprep.mubr.f32.mxu0 0.0
      %2222 = vmatmul.mubr.f32.gmra.mrb[0].mxu0 %v2049
      %v2223 = vpop.f32.mrb[0].mxu0
      %v2224 = vadd.f32 0.0, %v2223
      %v2225 = vpop.f32.mrb[0].mxu0
      %2226 = vmatprep.mubr.f32.mxu0 0.0
      %2227 = vmatmul.mubr.f32.gmra.mrb[0].mxu0 %v2052
      %v2228 = vpop.f32.mrb[0].mxu0
      %v2229 = vadd.f32 0.0, %v2228
      %v2230 = vpop.f32.mrb[0].mxu0
      %2231 = vmatprep.mubr.f32.mxu0 0.0
      %2232 = vmatmul.mubr.f32.gmra.mrb[0].mxu0 %v2055
      %v2233 = vpop.f32.mrb[0].mxu0
      %v2234 = vadd.f32 0.0, %v2233
      %v2235 = vpop.f32.mrb[0].mxu0
      %2236 = vmatprep.mubr.f32.mxu0 0.0
      %2237 = vmatmul.mubr.f32.gmra.mrb[0].mxu0 %v2058
      %v2238 = vpop.f32.mrb[0].mxu0
      %v2239 = vadd.f32 0.0, %v2238
      %v2240 = vpop.f32.mrb[0].mxu0
      %2241 = vmatprep.mubr.f32.mxu0 0.0
      %2242 = vmatmul.mubr.f32.gmra.mrb[0].mxu0 %v2061
      %v2243 = vpop.f32.mrb[0].mxu0
      %v2244 = vadd.f32 0.0, %v2243
      %v2245 = vpop.f32.mrb[0].mxu0
      %2246 = vmatprep.mubr.f32.mxu0 0.0
      %2247 = vmatmul.mubr.f32.gmra.mrb[0].mxu0 %v2064
      %v2248 = vpop.f32.mrb[0].mxu0
      %v2249 = vadd.f32 0.0, %v2248
      %v2250 = vpop.f32.mrb[0].mxu0
      %2251 = vmatprep.mubr.f32.mxu0 0.0
      %2252 = vmatmul.mubr.f32.gmra.mrb[0].mxu0 %v2067
      %v2253 = vpop.f32.mrb[0].mxu0
      %v2254 = vadd.f32 0.0, %v2253
      %v2255 = vpop.f32.mrb[0].mxu0
      %2256 = vmatprep.mubr.f32.mxu0 0.0
      %2257 = vmatmul.mubr.f32.gmra.mrb[0].mxu0 %v2070
      %v2258 = vpop.f32.mrb[0].mxu0
      %v2259 = vadd.f32 0.0, %v2258
      %v2260 = vpop.f32.mrb[0].mxu0
      %2261 = vmatprep.mubr.f32.mxu0 0.0
      %2262 = vmatmul.mubr.f32.gmra.mrb[0].mxu0 %v2073
      %v2263 = vpop.f32.mrb[0].mxu0
      %v2264 = vadd.f32 0.0, %v2263
      %v2265 = vpop.f32.mrb[0].mxu0
      %2266 = vmatprep.mubr.f32.mxu0 0.0
      %2267 = vmatmul.mubr.f32.gmra.mrb[0].mxu0 %v2076
      %v2268 = vpop.f32.mrb[0].mxu0
      %v2269 = vadd.f32 0.0, %v2268
      %v2270 = vpop.f32.mrb[0].mxu0
      %2271 = vmatprep.mubr.f32.mxu0 0.0
      %2272 = vmatmul.mubr.f32.gmra.mrb[0].mxu0 %v2079
      %v2273 = vpop.f32.mrb[0].mxu0
      %v2274 = vadd.f32 0.0, %v2273
      %v2275 = vpop.f32.mrb[0].mxu0
      %2276 = vmatprep.mubr.f32.mxu0 0.0
      %2277 = vmatmul.mubr.f32.gmra.mrb[0].mxu0 %v2082
      %v2278 = vpop.f32.mrb[0].mxu0
      %v2279 = vadd.f32 0.0, %v2278
      %v2280 = vpop.f32.mrb[0].mxu0
      %2281 = vmatprep.mubr.f32.mxu0 0.0
      %2282 = vmatmul.mubr.f32.gmra.mrb[0].mxu0 %v2085
      %v2283 = vpop.f32.mrb[0].mxu0
      %v2284 = vadd.f32 0.0, %v2283
      %v2285 = vpop.f32.mrb[0].mxu0
      %2286 = vmatprep.mubr.f32.mxu0 0.0
      %2287 = vmatmul.mubr.f32.gmra.mrb[0].mxu0 %v2088
      %v2288 = vpop.f32.mrb[0].mxu0
      %v2289 = vadd.f32 0.0, %v2288
      %v2290 = vpop.f32.mrb[0].mxu0
      %2291 = vmatprep.mubr.f32.mxu0 0.0
      %2292 = vmatmul.mubr.f32.gmra.mrb[0].mxu0 %v2091
      %v2293 = vpop.f32.mrb[0].mxu0
      %v2294 = vadd.f32 0.0, %v2293
      %v2295 = vpop.f32.mrb[0].mxu0
      %2296 = vmatprep.mubr.f32.mxu0 0.0
      %2297 = vmatmul.mubr.f32.gmra.mrb[0].mxu0 %v2094
      %v2298 = vpop.f32.mrb[0].mxu0
      %v2299 = vadd.f32 0.0, %v2298
      %v2300 = vpop.f32.mrb[0].mxu0
      %2301 = vmatprep.mubr.f32.mxu0 0.0
      %2302 = vmatmul.mubr.f32.gmra.mrb[0].mxu0 %v2097
      %v2303 = vpop.f32.mrb[0].mxu0
      %v2304 = vadd.f32 0.0, %v2303
      %v2305 = vpop.f32.mrb[0].mxu0
      %2306 = vmatprep.mubr.f32.mxu0 0.0
      %2307 = vmatmul.mubr.f32.gmra.mrb[0].mxu0 %v2100
      %v2308 = vpop.f32.mrb[0].mxu0
      %v2309 = vadd.f32 0.0, %v2308
      %v2310 = vpop.f32.mrb[0].mxu0
      %2311 = vmatprep.mubr.f32.mxu0 0.0
      %2312 = vmatmul.mubr.f32.gmra.mrb[0].mxu0 %v2103
      %v2313 = vpop.f32.mrb[0].mxu0
      %v2314 = vadd.f32 0.0, %v2313
      %v2315 = vpop.f32.mrb[0].mxu0
      %2316 = vmatprep.mubr.f32.mxu0 0.0
      %2317 = vmatmul.mubr.f32.gmra.mrb[0].mxu0 %v2106
      %v2318 = vpop.f32.mrb[0].mxu0
      %v2319 = vadd.f32 0.0, %v2318
      %v2320 = vpop.f32.mrb[0].mxu0
      %2321 = vmatprep.mubr.f32.mxu0 0.0
      %2322 = vmatmul.mubr.f32.gmra.mrb[0].mxu0 %v2109
      %v2323 = vpop.f32.mrb[0].mxu0
      %v2324 = vadd.f32 0.0, %v2323
      %v2325 = vpop.f32.mrb[0].mxu0
      %2326 = vmatprep.mubr.f32.mxu0 0.0
      %2327 = vmatmul.mubr.f32.gmra.mrb[0].mxu0 %v2112
      %v2328 = vpop.f32.mrb[0].mxu0
      %v2329 = vadd.f32 0.0, %v2328
      %v2330 = vpop.f32.mrb[0].mxu0
      %2331 = vmatprep.mubr.f32.mxu0 0.0
      %2332 = vmatmul.mubr.f32.gmra.mrb[0].mxu0 %v2115
      %v2333 = vpop.f32.mrb[0].mxu0
      %v2334 = vadd.f32 0.0, %v2333
      %v2335 = vpop.f32.mrb[0].mxu0
      %2336 = vmatprep.mubr.f32.mxu0 0.0
      %2337 = vmatmul.mubr.f32.gmra.mrb[0].mxu0 %v2118
      %v2338 = vpop.f32.mrb[0].mxu0
      %v2339 = vadd.f32 0.0, %v2338
      %v2340 = vpop.f32.mrb[0].mxu0
      %2341 = vmatprep.mubr.f32.mxu0 0.0
      %2342 = vmatmul.mubr.f32.gmra.mrb[0].mxu0 %v2121
      %v2343 = vpop.f32.mrb[0].mxu0
      %v2344 = vadd.f32 0.0, %v2343
      %v2345 = vpop.f32.mrb[0].mxu0
      %2346 = vmatprep.mubr.f32.mxu0 0.0
      %2347 = vmatmul.mubr.f32.gmra.mrb[0].mxu0 %v2124
      %v2348 = vpop.f32.mrb[0].mxu0
      %v2349 = vadd.f32 0.0, %v2348
      %v2350 = vpop.f32.mrb[0].mxu0
      %2351 = vmatprep.mubr.f32.mxu0 0.0
      %2352 = vmatmul.mubr.f32.gmra.mrb[0].mxu0 %v2127
      %v2353 = vpop.f32.mrb[0].mxu0
      %v2354 = vadd.f32 0.0, %v2353
      %v2355 = vpop.f32.mrb[0].mxu0
      %2356 = vdwg.mxu0
      %v2357 = vadd.f32 %v1967, %v2199
      %v2358 = vadd.f32 %v1968, %v2204
      %v2359 = vadd.f32 %v1969, %v2209
      %v2360 = vadd.f32 %v1970, %v2214
      %v2361 = vadd.f32 %v1971, %v2219
      %v2362 = vadd.f32 %v1972, %v2224
      %v2363 = vadd.f32 %v1973, %v2229
      %v2364 = vadd.f32 %v1974, %v2234
      %v2365 = vadd.f32 %v1975, %v2239
      %v2366 = vadd.f32 %v1976, %v2244
      %v2367 = vadd.f32 %v1977, %v2249
      %v2368 = vadd.f32 %v1978, %v2254
      %v2369 = vadd.f32 %v1979, %v2259
      %v2370 = vadd.f32 %v1980, %v2264
      %v2371 = vadd.f32 %v1981, %v2269
      %v2372 = vadd.f32 %v1982, %v2274
      %v2373 = vadd.f32 %v1983, %v2279
      %v2374 = vadd.f32 %v1984, %v2284
      %v2375 = vadd.f32 %v1985, %v2289
      %v2376 = vadd.f32 %v1986, %v2294
      %v2377 = vadd.f32 %v1987, %v2299
      %v2378 = vadd.f32 %v1988, %v2304
      %v2379 = vadd.f32 %v1989, %v2309
      %v2380 = vadd.f32 %v1990, %v2314
      %v2381 = vadd.f32 %v1991, %v2319
      %v2382 = vadd.f32 %v1992, %v2324
      %v2383 = vadd.f32 %v1993, %v2329
      %v2384 = vadd.f32 %v1994, %v2334
      %v2385 = vadd.f32 %v1995, %v2339
      %v2386 = vadd.f32 %v1996, %v2344
      %v2387 = vadd.f32 %v1997, %v2349
      %v2388 = vadd.f32 %v1998, %v2354
      %v2389 = vld [vmem:[%s1608 + $0x2] sm:$0xff]
      %v2390 = vld [vmem:[%s1608 + $0xa] sm:$0xff]
      %v2391 = vld [vmem:[%s1608 + $0x1a] sm:$0xff]
      %v2392 = vld [vmem:[%s1608 + $0x22] sm:$0xff]
      %v2393 = vld [vmem:[%s1608 + $0x32] sm:$0xff]
      %v2394 = vld [vmem:[%s1608 + $0x3a] sm:$0xff]
      %v2395 = vld [vmem:[%s1608 + $0x4a] sm:$0xff]
      %v2396 = vld [vmem:[%s1608 + $0x52] sm:$0xff]
      %v2397 = vld [vmem:[%s1608 + $0x62] sm:$0xff]
      %v2398 = vld [vmem:[%s1608 + $0x6a] sm:$0xff]
      %v2399 = vld [vmem:[%s1608 + $0x7a] sm:$0xff]
      %v2400 = vld [vmem:[%s1608 + $0x82] sm:$0xff]
      %v2401 = vld [vmem:[%s1608 + $0x92] sm:$0xff]
      %v2402 = vld [vmem:[%s1608 + $0x9a] sm:$0xff]
      %v2403 = vld [vmem:[%s1608 + $0xaa] sm:$0xff]
      %v2404 = vld [vmem:[%s1608 + $0xb2] sm:$0xff]
      %v2405 = vld [vmem:[%s1608 + $0xc2] sm:$0xff]
      %v2406 = vld [vmem:[%s1608 + $0xca] sm:$0xff]
      %v2407 = vld [vmem:[%s1608 + $0xda] sm:$0xff]
      %v2408 = vld [vmem:[%s1608 + $0xe2] sm:$0xff]
      %v2409 = vld [vmem:[%s1608 + $0xf2] sm:$0xff]
      %v2410 = vld [vmem:[%s1608 + $0xfa] sm:$0xff]
      %v2411 = vld [vmem:[%s1608 + $0x10a] sm:$0xff]
      %v2412 = vld [vmem:[%s1608 + $0x112] sm:$0xff]
      %v2413 = vld [vmem:[%s1608 + $0x122] sm:$0xff]
      %v2414 = vld [vmem:[%s1608 + $0x12a] sm:$0xff]
      %v2415 = vld [vmem:[%s1608 + $0x13a] sm:$0xff]
      %v2416 = vld [vmem:[%s1608 + $0x142] sm:$0xff]
      %v2417 = vld [vmem:[%s1608 + $0x152] sm:$0xff]
      %v2418 = vld [vmem:[%s1608 + $0x15a] sm:$0xff]
      %v2419 = vld [vmem:[%s1608 + $0x16a] sm:$0xff]
      %v2420 = vld [vmem:[%s1608 + $0x172] sm:$0xff]
      %s2421 = scalar_lea.vmem %s3, 20
      %v2422 = vld [vmem:[%s2421] sm:$0xf]
      %v2424 = vsel %vm438, %v2389, 0
      %v2427 = vsel %vm438, %v2390, 0
      %v2430 = vsel %vm438, %v2391, 0
      %v2433 = vsel %vm438, %v2392, 0
      %v2436 = vsel %vm438, %v2393, 0
      %v2439 = vsel %vm438, %v2394, 0
      %v2442 = vsel %vm438, %v2395, 0
      %v2445 = vsel %vm438, %v2396, 0
      %v2448 = vsel %vm438, %v2397, 0
      %v2451 = vsel %vm438, %v2398, 0
      %v2454 = vsel %vm438, %v2399, 0
      %v2457 = vsel %vm438, %v2400, 0
      %v2460 = vsel %vm438, %v2401, 0
      %v2463 = vsel %vm438, %v2402, 0
      %v2466 = vsel %vm438, %v2403, 0
      %v2469 = vsel %vm438, %v2404, 0
      %v2472 = vsel %vm438, %v2405, 0
      %v2475 = vsel %vm438, %v2406, 0
      %v2478 = vsel %vm438, %v2407, 0
      %v2481 = vsel %vm438, %v2408, 0
      %v2484 = vsel %vm438, %v2409, 0
      %v2487 = vsel %vm438, %v2410, 0
      %v2490 = vsel %vm438, %v2411, 0
      %v2493 = vsel %vm438, %v2412, 0
      %v2496 = vsel %vm438, %v2413, 0
      %v2499 = vsel %vm438, %v2414, 0
      %v2502 = vsel %vm438, %v2415, 0
      %v2505 = vsel %vm438, %v2416, 0
      %v2508 = vsel %vm438, %v2417, 0
      %v2511 = vsel %vm438, %v2418, 0
      %v2514 = vsel %vm438, %v2419, 0
      %v2517 = vsel %vm438, %v2420, 0
      %v2520 = vsel %vm665, %v2422, 0
      %2522 = vmatprep.subr.mxu0 0.0
      %2523 = vmatpush1.msra.mxu0 %v2520
      %2524 = vmatprep.subr.mxu0 0.0
      %2525 = vmatpush1.msra.mxu0 0.0
      %2526 = vmatprep.subr.mxu0 0.0
      %2527 = vmatpush1.msra.mxu0 0.0
      %2528 = vmatprep.subr.mxu0 0.0
      %2529 = vmatpush1.msra.mxu0 0.0
      %2530 = vmatprep.subr.mxu0 0.0
      %2531 = vmatpush1.msra.mxu0 0.0
      %2532 = vmatprep.subr.mxu0 0.0
      %2533 = vmatpush1.msra.mxu0 0.0
      %2534 = vmatprep.subr.mxu0 0.0
      %2535 = vmatpush1.msra.mxu0 0.0
      %2536 = vmatprep.subr.mxu0 0.0
      %2537 = vmatpush1.msra.mxu0 0.0
      %2538 = vmatprep.subr.mxu0 0.0
      %2539 = vmatpush1.msra.mxu0 0.0
      %2540 = vmatprep.subr.mxu0 0.0
      %2541 = vmatpush1.msra.mxu0 0.0
      %2542 = vmatprep.subr.mxu0 0.0
      %2543 = vmatpush1.msra.mxu0 0.0
      %2544 = vmatprep.subr.mxu0 0.0
      %2545 = vmatpush1.msra.mxu0 0.0
      %2546 = vmatprep.subr.mxu0 0.0
      %2547 = vmatpush1.msra.mxu0 0.0
      %2548 = vmatprep.subr.mxu0 0.0
      %2549 = vmatpush1.msra.mxu0 0.0
      %2550 = vmatprep.subr.mxu0 0.0
      %2551 = vmatpush1.msra.mxu0 0.0
      %2552 = vmatprep.subr.mxu0 0.0
      %2553 = vmatpush1.msra.mxu0 0.0
      %2554 = vmatprep.subr.mxu0 0.0
      %2555 = vmatpush1.msra.mxu0 0.0
      %2556 = vmatprep.subr.mxu0 0.0
      %2557 = vmatpush1.msra.mxu0 0.0
      %2558 = vmatprep.subr.mxu0 0.0
      %2559 = vmatpush1.msra.mxu0 0.0
      %2560 = vmatprep.subr.mxu0 0.0
      %2561 = vmatpush1.msra.mxu0 0.0
      %2562 = vmatprep.subr.mxu0 0.0
      %2563 = vmatpush1.msra.mxu0 0.0
      %2564 = vmatprep.subr.mxu0 0.0
      %2565 = vmatpush1.msra.mxu0 0.0
      %2566 = vmatprep.subr.mxu0 0.0
      %2567 = vmatpush1.msra.mxu0 0.0
      %2568 = vmatprep.subr.mxu0 0.0
      %2569 = vmatpush1.msra.mxu0 0.0
      %2570 = vmatprep.subr.mxu0 0.0
      %2571 = vmatpush1.msra.mxu0 0.0
      %2572 = vmatprep.subr.mxu0 0.0
      %2573 = vmatpush1.msra.mxu0 0.0
      %2574 = vmatprep.subr.mxu0 0.0
      %2575 = vmatpush1.msra.mxu0 0.0
      %2576 = vmatprep.subr.mxu0 0.0
      %2577 = vmatpush1.msra.mxu0 0.0
      %2578 = vmatprep.subr.mxu0 0.0
      %2579 = vmatpush1.msra.mxu0 0.0
      %2580 = vmatprep.subr.mxu0 0.0
      %2581 = vmatpush1.msra.mxu0 0.0
      %2582 = vmatprep.subr.mxu0 0.0
      %2583 = vmatpush1.msra.mxu0 0.0
      %2584 = vmatprep.subr.mxu0 0.0
      %2585 = vmatpush1.msra.mxu0 0.0
      %2586 = vmatprep.mubr.f32.mxu0 0.0
      %2587 = vmatmul.mubr.f32.gmra.mrb[0].mxu0 %v2424
      %v2588 = vpop.f32.mrb[0].mxu0
      %v2589 = vadd.f32 0.0, %v2588
      %v2590 = vpop.f32.mrb[0].mxu0
      %2591 = vmatprep.mubr.f32.mxu0 0.0
      %2592 = vmatmul.mubr.f32.gmra.mrb[0].mxu0 %v2427
      %v2593 = vpop.f32.mrb[0].mxu0
      %v2594 = vadd.f32 0.0, %v2593
      %v2595 = vpop.f32.mrb[0].mxu0
      %2596 = vmatprep.mubr.f32.mxu0 0.0
      %2597 = vmatmul.mubr.f32.gmra.mrb[0].mxu0 %v2430
      %v2598 = vpop.f32.mrb[0].mxu0
      %v2599 = vadd.f32 0.0, %v2598
      %v2600 = vpop.f32.mrb[0].mxu0
      %2601 = vmatprep.mubr.f32.mxu0 0.0
      %2602 = vmatmul.mubr.f32.gmra.mrb[0].mxu0 %v2433
      %v2603 = vpop.f32.mrb[0].mxu0
      %v2604 = vadd.f32 0.0, %v2603
      %v2605 = vpop.f32.mrb[0].mxu0
      %2606 = vmatprep.mubr.f32.mxu0 0.0
      %2607 = vmatmul.mubr.f32.gmra.mrb[0].mxu0 %v2436
      %v2608 = vpop.f32.mrb[0].mxu0
      %v2609 = vadd.f32 0.0, %v2608
      %v2610 = vpop.f32.mrb[0].mxu0
      %2611 = vmatprep.mubr.f32.mxu0 0.0
      %2612 = vmatmul.mubr.f32.gmra.mrb[0].mxu0 %v2439
      %v2613 = vpop.f32.mrb[0].mxu0
      %v2614 = vadd.f32 0.0, %v2613
      %v2615 = vpop.f32.mrb[0].mxu0
      %2616 = vmatprep.mubr.f32.mxu0 0.0
      %2617 = vmatmul.mubr.f32.gmra.mrb[0].mxu0 %v2442
      %v2618 = vpop.f32.mrb[0].mxu0
      %v2619 = vadd.f32 0.0, %v2618
      %v2620 = vpop.f32.mrb[0].mxu0
      %2621 = vmatprep.mubr.f32.mxu0 0.0
      %2622 = vmatmul.mubr.f32.gmra.mrb[0].mxu0 %v2445
      %v2623 = vpop.f32.mrb[0].mxu0
      %v2624 = vadd.f32 0.0, %v2623
      %v2625 = vpop.f32.mrb[0].mxu0
      %2626 = vmatprep.mubr.f32.mxu0 0.0
      %2627 = vmatmul.mubr.f32.gmra.mrb[0].mxu0 %v2448
      %v2628 = vpop.f32.mrb[0].mxu0
      %v2629 = vadd.f32 0.0, %v2628
      %v2630 = vpop.f32.mrb[0].mxu0
      %2631 = vmatprep.mubr.f32.mxu0 0.0
      %2632 = vmatmul.mubr.f32.gmra.mrb[0].mxu0 %v2451
      %v2633 = vpop.f32.mrb[0].mxu0
      %v2634 = vadd.f32 0.0, %v2633
      %v2635 = vpop.f32.mrb[0].mxu0
      %2636 = vmatprep.mubr.f32.mxu0 0.0
      %2637 = vmatmul.mubr.f32.gmra.mrb[0].mxu0 %v2454
      %v2638 = vpop.f32.mrb[0].mxu0
      %v2639 = vadd.f32 0.0, %v2638
      %v2640 = vpop.f32.mrb[0].mxu0
      %2641 = vmatprep.mubr.f32.mxu0 0.0
      %2642 = vmatmul.mubr.f32.gmra.mrb[0].mxu0 %v2457
      %v2643 = vpop.f32.mrb[0].mxu0
      %v2644 = vadd.f32 0.0, %v2643
      %v2645 = vpop.f32.mrb[0].mxu0
      %2646 = vmatprep.mubr.f32.mxu0 0.0
      %2647 = vmatmul.mubr.f32.gmra.mrb[0].mxu0 %v2460
      %v2648 = vpop.f32.mrb[0].mxu0
      %v2649 = vadd.f32 0.0, %v2648
      %v2650 = vpop.f32.mrb[0].mxu0
      %2651 = vmatprep.mubr.f32.mxu0 0.0
      %2652 = vmatmul.mubr.f32.gmra.mrb[0].mxu0 %v2463
      %v2653 = vpop.f32.mrb[0].mxu0
      %v2654 = vadd.f32 0.0, %v2653
      %v2655 = vpop.f32.mrb[0].mxu0
      %2656 = vmatprep.mubr.f32.mxu0 0.0
      %2657 = vmatmul.mubr.f32.gmra.mrb[0].mxu0 %v2466
      %v2658 = vpop.f32.mrb[0].mxu0
      %v2659 = vadd.f32 0.0, %v2658
      %v2660 = vpop.f32.mrb[0].mxu0
      %2661 = vmatprep.mubr.f32.mxu0 0.0
      %2662 = vmatmul.mubr.f32.gmra.mrb[0].mxu0 %v2469
      %v2663 = vpop.f32.mrb[0].mxu0
      %v2664 = vadd.f32 0.0, %v2663
      %v2665 = vpop.f32.mrb[0].mxu0
      %2666 = vmatprep.mubr.f32.mxu0 0.0
      %2667 = vmatmul.mubr.f32.gmra.mrb[0].mxu0 %v2472
      %v2668 = vpop.f32.mrb[0].mxu0
      %v2669 = vadd.f32 0.0, %v2668
      %v2670 = vpop.f32.mrb[0].mxu0
      %2671 = vmatprep.mubr.f32.mxu0 0.0
      %2672 = vmatmul.mubr.f32.gmra.mrb[0].mxu0 %v2475
      %v2673 = vpop.f32.mrb[0].mxu0
      %v2674 = vadd.f32 0.0, %v2673
      %v2675 = vpop.f32.mrb[0].mxu0
      %2676 = vmatprep.mubr.f32.mxu0 0.0
      %2677 = vmatmul.mubr.f32.gmra.mrb[0].mxu0 %v2478
      %v2678 = vpop.f32.mrb[0].mxu0
      %v2679 = vadd.f32 0.0, %v2678
      %v2680 = vpop.f32.mrb[0].mxu0
      %2681 = vmatprep.mubr.f32.mxu0 0.0
      %2682 = vmatmul.mubr.f32.gmra.mrb[0].mxu0 %v2481
      %v2683 = vpop.f32.mrb[0].mxu0
      %v2684 = vadd.f32 0.0, %v2683
      %v2685 = vpop.f32.mrb[0].mxu0
      %2686 = vmatprep.mubr.f32.mxu0 0.0
      %2687 = vmatmul.mubr.f32.gmra.mrb[0].mxu0 %v2484
      %v2688 = vpop.f32.mrb[0].mxu0
      %v2689 = vadd.f32 0.0, %v2688
      %v2690 = vpop.f32.mrb[0].mxu0
      %2691 = vmatprep.mubr.f32.mxu0 0.0
      %2692 = vmatmul.mubr.f32.gmra.mrb[0].mxu0 %v2487
      %v2693 = vpop.f32.mrb[0].mxu0
      %v2694 = vadd.f32 0.0, %v2693
      %v2695 = vpop.f32.mrb[0].mxu0
      %2696 = vmatprep.mubr.f32.mxu0 0.0
      %2697 = vmatmul.mubr.f32.gmra.mrb[0].mxu0 %v2490
      %v2698 = vpop.f32.mrb[0].mxu0
      %v2699 = vadd.f32 0.0, %v2698
      %v2700 = vpop.f32.mrb[0].mxu0
      %2701 = vmatprep.mubr.f32.mxu0 0.0
      %2702 = vmatmul.mubr.f32.gmra.mrb[0].mxu0 %v2493
      %v2703 = vpop.f32.mrb[0].mxu0
      %v2704 = vadd.f32 0.0, %v2703
      %v2705 = vpop.f32.mrb[0].mxu0
      %2706 = vmatprep.mubr.f32.mxu0 0.0
      %2707 = vmatmul.mubr.f32.gmra.mrb[0].mxu0 %v2496
      %v2708 = vpop.f32.mrb[0].mxu0
      %v2709 = vadd.f32 0.0, %v2708
      %v2710 = vpop.f32.mrb[0].mxu0
      %2711 = vmatprep.mubr.f32.mxu0 0.0
      %2712 = vmatmul.mubr.f32.gmra.mrb[0].mxu0 %v2499
      %v2713 = vpop.f32.mrb[0].mxu0
      %v2714 = vadd.f32 0.0, %v2713
      %v2715 = vpop.f32.mrb[0].mxu0
      %2716 = vmatprep.mubr.f32.mxu0 0.0
      %2717 = vmatmul.mubr.f32.gmra.mrb[0].mxu0 %v2502
      %v2718 = vpop.f32.mrb[0].mxu0
      %v2719 = vadd.f32 0.0, %v2718
      %v2720 = vpop.f32.mrb[0].mxu0
      %2721 = vmatprep.mubr.f32.mxu0 0.0
      %2722 = vmatmul.mubr.f32.gmra.mrb[0].mxu0 %v2505
      %v2723 = vpop.f32.mrb[0].mxu0
      %v2724 = vadd.f32 0.0, %v2723
      %v2725 = vpop.f32.mrb[0].mxu0
      %2726 = vmatprep.mubr.f32.mxu0 0.0
      %2727 = vmatmul.mubr.f32.gmra.mrb[0].mxu0 %v2508
      %v2728 = vpop.f32.mrb[0].mxu0
      %v2729 = vadd.f32 0.0, %v2728
      %v2730 = vpop.f32.mrb[0].mxu0
      %2731 = vmatprep.mubr.f32.mxu0 0.0
      %2732 = vmatmul.mubr.f32.gmra.mrb[0].mxu0 %v2511
      %v2733 = vpop.f32.mrb[0].mxu0
      %v2734 = vadd.f32 0.0, %v2733
      %v2735 = vpop.f32.mrb[0].mxu0
      %2736 = vmatprep.mubr.f32.mxu0 0.0
      %2737 = vmatmul.mubr.f32.gmra.mrb[0].mxu0 %v2514
      %v2738 = vpop.f32.mrb[0].mxu0
      %v2739 = vadd.f32 0.0, %v2738
      %v2740 = vpop.f32.mrb[0].mxu0
      %2741 = vmatprep.mubr.f32.mxu0 0.0
      %2742 = vmatmul.mubr.f32.gmra.mrb[0].mxu0 %v2517
      %v2743 = vpop.f32.mrb[0].mxu0
      %v2744 = vadd.f32 0.0, %v2743
      %v2745 = vpop.f32.mrb[0].mxu0
      %2746 = vdwg.mxu0
      %v2747 = vadd.f32 %v2357, %v2589
      %v2748 = vadd.f32 %v2358, %v2594
      %v2749 = vadd.f32 %v2359, %v2599
      %v2750 = vadd.f32 %v2360, %v2604
      %v2751 = vadd.f32 %v2361, %v2609
      %v2752 = vadd.f32 %v2362, %v2614
      %v2753 = vadd.f32 %v2363, %v2619
      %v2754 = vadd.f32 %v2364, %v2624
      %v2755 = vadd.f32 %v2365, %v2629
      %v2756 = vadd.f32 %v2366, %v2634
      %v2757 = vadd.f32 %v2367, %v2639
      %v2758 = vadd.f32 %v2368, %v2644
      %v2759 = vadd.f32 %v2369, %v2649
      %v2760 = vadd.f32 %v2370, %v2654
      %v2761 = vadd.f32 %v2371, %v2659
      %v2762 = vadd.f32 %v2372, %v2664
      %v2763 = vadd.f32 %v2373, %v2669
      %v2764 = vadd.f32 %v2374, %v2674
      %v2765 = vadd.f32 %v2375, %v2679
      %v2766 = vadd.f32 %v2376, %v2684
      %v2767 = vadd.f32 %v2377, %v2689
      %v2768 = vadd.f32 %v2378, %v2694
      %v2769 = vadd.f32 %v2379, %v2699
      %v2770 = vadd.f32 %v2380, %v2704
      %v2771 = vadd.f32 %v2381, %v2709
      %v2772 = vadd.f32 %v2382, %v2714
      %v2773 = vadd.f32 %v2383, %v2719
      %v2774 = vadd.f32 %v2384, %v2724
      %v2775 = vadd.f32 %v2385, %v2729
      %v2776 = vadd.f32 %v2386, %v2734
      %v2777 = vadd.f32 %v2387, %v2739
      %v2778 = vadd.f32 %v2388, %v2744
      %s2779 = scalar_lea.vmem [#allocation2], 48
      %v2780 = vld [vmem:[%s2779] sm:$0xff]
      %v2781 = vld [vmem:[%s2779 + $0x8] sm:$0xff]
      %v2782 = vld [vmem:[%s2779 + $0x18] sm:$0xff]
      %v2783 = vld [vmem:[%s2779 + $0x20] sm:$0xff]
      %v2784 = vld [vmem:[%s2779 + $0x30] sm:$0xff]
      %v2785 = vld [vmem:[%s2779 + $0x38] sm:$0xff]
      %v2786 = vld [vmem:[%s2779 + $0x48] sm:$0xff]
      %v2787 = vld [vmem:[%s2779 + $0x50] sm:$0xff]
      %v2788 = vld [vmem:[%s2779 + $0x60] sm:$0xff]
      %v2789 = vld [vmem:[%s2779 + $0x68] sm:$0xff]
      %v2790 = vld [vmem:[%s2779 + $0x78] sm:$0xff]
      %v2791 = vld [vmem:[%s2779 + $0x80] sm:$0xff]
      %v2792 = vld [vmem:[%s2779 + $0x90] sm:$0xff]
      %v2793 = vld [vmem:[%s2779 + $0x98] sm:$0xff]
      %v2794 = vld [vmem:[%s2779 + $0xa8] sm:$0xff]
      %v2795 = vld [vmem:[%s2779 + $0xb0] sm:$0xff]
      %v2796 = vld [vmem:[%s2779 + $0xc0] sm:$0xff]
      %v2797 = vld [vmem:[%s2779 + $0xc8] sm:$0xff]
      %v2798 = vld [vmem:[%s2779 + $0xd8] sm:$0xff]
      %v2799 = vld [vmem:[%s2779 + $0xe0] sm:$0xff]
      %v2800 = vld [vmem:[%s2779 + $0xf0] sm:$0xff]
      %v2801 = vld [vmem:[%s2779 + $0xf8] sm:$0xff]
      %v2802 = vld [vmem:[%s2779 + $0x108] sm:$0xff]
      %v2803 = vld [vmem:[%s2779 + $0x110] sm:$0xff]
      %v2804 = vld [vmem:[%s2779 + $0x120] sm:$0xff]
      %v2805 = vld [vmem:[%s2779 + $0x128] sm:$0xff]
      %v2806 = vld [vmem:[%s2779 + $0x138] sm:$0xff]
      %v2807 = vld [vmem:[%s2779 + $0x140] sm:$0xff]
      %v2808 = vld [vmem:[%s2779 + $0x150] sm:$0xff]
      %v2809 = vld [vmem:[%s2779 + $0x158] sm:$0xff]
      %v2810 = vld [vmem:[%s2779 + $0x168] sm:$0xff]
      %v2811 = vld [vmem:[%s2779 + $0x170] sm:$0xff]
      %s2812 = scalar_lea.vmem %s3, 24
      %v2813 = vld [vmem:[%s2812] sm:$0xf]
      %v2815 = vsel %vm438, %v2780, 0
      %v2818 = vsel %vm438, %v2781, 0
      %v2821 = vsel %vm438, %v2782, 0
      %v2824 = vsel %vm438, %v2783, 0
      %v2827 = vsel %vm438, %v2784, 0
      %v2830 = vsel %vm438, %v2785, 0
      %v2833 = vsel %vm438, %v2786, 0
      %v2836 = vsel %vm438, %v2787, 0
      %v2839 = vsel %vm438, %v2788, 0
      %v2842 = vsel %vm438, %v2789, 0
      %v2845 = vsel %vm438, %v2790, 0
      %v2848 = vsel %vm438, %v2791, 0
      %v2851 = vsel %vm438, %v2792, 0
      %v2854 = vsel %vm438, %v2793, 0
      %v2857 = vsel %vm438, %v2794, 0
      %v2860 = vsel %vm438, %v2795, 0
      %v2863 = vsel %vm438, %v2796, 0
      %v2866 = vsel %vm438, %v2797, 0
      %v2869 = vsel %vm438, %v2798, 0
      %v2872 = vsel %vm438, %v2799, 0
      %v2875 = vsel %vm438, %v2800, 0
      %v2878 = vsel %vm438, %v2801, 0
      %v2881 = vsel %vm438, %v2802, 0
      %v2884 = vsel %vm438, %v2803, 0
      %v2887 = vsel %vm438, %v2804, 0
      %v2890 = vsel %vm438, %v2805, 0
      %v2893 = vsel %vm438, %v2806, 0
      %v2896 = vsel %vm438, %v2807, 0
      %v2899 = vsel %vm438, %v2808, 0
      %v2902 = vsel %vm438, %v2809, 0
      %v2905 = vsel %vm438, %v2810, 0
      %v2908 = vsel %vm438, %v2811, 0
      %v2911 = vsel %vm665, %v2813, 0
      %2913 = vmatprep.subr.mxu0 0.0
      %2914 = vmatpush1.msra.mxu0 %v2911
      %2915 = vmatprep.subr.mxu0 0.0
      %2916 = vmatpush1.msra.mxu0 0.0
      %2917 = vmatprep.subr.mxu0 0.0
      %2918 = vmatpush1.msra.mxu0 0.0
      %2919 = vmatprep.subr.mxu0 0.0
      %2920 = vmatpush1.msra.mxu0 0.0
      %2921 = vmatprep.subr.mxu0 0.0
      %2922 = vmatpush1.msra.mxu0 0.0
      %2923 = vmatprep.subr.mxu0 0.0
      %2924 = vmatpush1.msra.mxu0 0.0
      %2925 = vmatprep.subr.mxu0 0.0
      %2926 = vmatpush1.msra.mxu0 0.0
      %2927 = vmatprep.subr.mxu0 0.0
      %2928 = vmatpush1.msra.mxu0 0.0
      %2929 = vmatprep.subr.mxu0 0.0
      %2930 = vmatpush1.msra.mxu0 0.0
      %2931 = vmatprep.subr.mxu0 0.0
      %2932 = vmatpush1.msra.mxu0 0.0
      %2933 = vmatprep.subr.mxu0 0.0
      %2934 = vmatpush1.msra.mxu0 0.0
      %2935 = vmatprep.subr.mxu0 0.0
      %2936 = vmatpush1.msra.mxu0 0.0
      %2937 = vmatprep.subr.mxu0 0.0
      %2938 = vmatpush1.msra.mxu0 0.0
      %2939 = vmatprep.subr.mxu0 0.0
      %2940 = vmatpush1.msra.mxu0 0.0
      %2941 = vmatprep.subr.mxu0 0.0
      %2942 = vmatpush1.msra.mxu0 0.0
      %2943 = vmatprep.subr.mxu0 0.0
      %2944 = vmatpush1.msra.mxu0 0.0
      %2945 = vmatprep.subr.mxu0 0.0
      %2946 = vmatpush1.msra.mxu0 0.0
      %2947 = vmatprep.subr.mxu0 0.0
      %2948 = vmatpush1.msra.mxu0 0.0
      %2949 = vmatprep.subr.mxu0 0.0
      %2950 = vmatpush1.msra.mxu0 0.0
      %2951 = vmatprep.subr.mxu0 0.0
      %2952 = vmatpush1.msra.mxu0 0.0
      %2953 = vmatprep.subr.mxu0 0.0
      %2954 = vmatpush1.msra.mxu0 0.0
      %2955 = vmatprep.subr.mxu0 0.0
      %2956 = vmatpush1.msra.mxu0 0.0
      %2957 = vmatprep.subr.mxu0 0.0
      %2958 = vmatpush1.msra.mxu0 0.0
      %2959 = vmatprep.subr.mxu0 0.0
      %2960 = vmatpush1.msra.mxu0 0.0
      %2961 = vmatprep.subr.mxu0 0.0
      %2962 = vmatpush1.msra.mxu0 0.0
      %2963 = vmatprep.subr.mxu0 0.0
      %2964 = vmatpush1.msra.mxu0 0.0
      %2965 = vmatprep.subr.mxu0 0.0
      %2966 = vmatpush1.msra.mxu0 0.0
      %2967 = vmatprep.subr.mxu0 0.0
      %2968 = vmatpush1.msra.mxu0 0.0
      %2969 = vmatprep.subr.mxu0 0.0
      %2970 = vmatpush1.msra.mxu0 0.0
      %2971 = vmatprep.subr.mxu0 0.0
      %2972 = vmatpush1.msra.mxu0 0.0
      %2973 = vmatprep.subr.mxu0 0.0
      %2974 = vmatpush1.msra.mxu0 0.0
      %2975 = vmatprep.subr.mxu0 0.0
      %2976 = vmatpush1.msra.mxu0 0.0
      %2977 = vmatprep.mubr.f32.mxu0 0.0
      %2978 = vmatmul.mubr.f32.gmra.mrb[0].mxu0 %v2815
      %v2979 = vpop.f32.mrb[0].mxu0
      %v2980 = vadd.f32 0.0, %v2979
      %v2981 = vpop.f32.mrb[0].mxu0
      %2982 = vmatprep.mubr.f32.mxu0 0.0
      %2983 = vmatmul.mubr.f32.gmra.mrb[0].mxu0 %v2818
      %v2984 = vpop.f32.mrb[0].mxu0
      %v2985 = vadd.f32 0.0, %v2984
      %v2986 = vpop.f32.mrb[0].mxu0
      %2987 = vmatprep.mubr.f32.mxu0 0.0
      %2988 = vmatmul.mubr.f32.gmra.mrb[0].mxu0 %v2821
      %v2989 = vpop.f32.mrb[0].mxu0
      %v2990 = vadd.f32 0.0, %v2989
      %v2991 = vpop.f32.mrb[0].mxu0
      %2992 = vmatprep.mubr.f32.mxu0 0.0
      %2993 = vmatmul.mubr.f32.gmra.mrb[0].mxu0 %v2824
      %v2994 = vpop.f32.mrb[0].mxu0
      %v2995 = vadd.f32 0.0, %v2994
      %v2996 = vpop.f32.mrb[0].mxu0
      %2997 = vmatprep.mubr.f32.mxu0 0.0
      %2998 = vmatmul.mubr.f32.gmra.mrb[0].mxu0 %v2827
      %v2999 = vpop.f32.mrb[0].mxu0
      %v3000 = vadd.f32 0.0, %v2999
      %v3001 = vpop.f32.mrb[0].mxu0
      %3002 = vmatprep.mubr.f32.mxu0 0.0
      %3003 = vmatmul.mubr.f32.gmra.mrb[0].mxu0 %v2830
      %v3004 = vpop.f32.mrb[0].mxu0
      %v3005 = vadd.f32 0.0, %v3004
      %v3006 = vpop.f32.mrb[0].mxu0
      %3007 = vmatprep.mubr.f32.mxu0 0.0
      %3008 = vmatmul.mubr.f32.gmra.mrb[0].mxu0 %v2833
      %v3009 = vpop.f32.mrb[0].mxu0
      %v3010 = vadd.f32 0.0, %v3009
      %v3011 = vpop.f32.mrb[0].mxu0
      %3012 = vmatprep.mubr.f32.mxu0 0.0
      %3013 = vmatmul.mubr.f32.gmra.mrb[0].mxu0 %v2836
      %v3014 = vpop.f32.mrb[0].mxu0
      %v3015 = vadd.f32 0.0, %v3014
      %v3016 = vpop.f32.mrb[0].mxu0
      %3017 = vmatprep.mubr.f32.mxu0 0.0
      %3018 = vmatmul.mubr.f32.gmra.mrb[0].mxu0 %v2839
      %v3019 = vpop.f32.mrb[0].mxu0
      %v3020 = vadd.f32 0.0, %v3019
      %v3021 = vpop.f32.mrb[0].mxu0
      %3022 = vmatprep.mubr.f32.mxu0 0.0
      %3023 = vmatmul.mubr.f32.gmra.mrb[0].mxu0 %v2842
      %v3024 = vpop.f32.mrb[0].mxu0
      %v3025 = vadd.f32 0.0, %v3024
      %v3026 = vpop.f32.mrb[0].mxu0
      %3027 = vmatprep.mubr.f32.mxu0 0.0
      %3028 = vmatmul.mubr.f32.gmra.mrb[0].mxu0 %v2845
      %v3029 = vpop.f32.mrb[0].mxu0
      %v3030 = vadd.f32 0.0, %v3029
      %v3031 = vpop.f32.mrb[0].mxu0
      %3032 = vmatprep.mubr.f32.mxu0 0.0
      %3033 = vmatmul.mubr.f32.gmra.mrb[0].mxu0 %v2848
      %v3034 = vpop.f32.mrb[0].mxu0
      %v3035 = vadd.f32 0.0, %v3034
      %v3036 = vpop.f32.mrb[0].mxu0
      %3037 = vmatprep.mubr.f32.mxu0 0.0
      %3038 = vmatmul.mubr.f32.gmra.mrb[0].mxu0 %v2851
      %v3039 = vpop.f32.mrb[0].mxu0
      %v3040 = vadd.f32 0.0, %v3039
      %v3041 = vpop.f32.mrb[0].mxu0
      %3042 = vmatprep.mubr.f32.mxu0 0.0
      %3043 = vmatmul.mubr.f32.gmra.mrb[0].mxu0 %v2854
      %v3044 = vpop.f32.mrb[0].mxu0
      %v3045 = vadd.f32 0.0, %v3044
      %v3046 = vpop.f32.mrb[0].mxu0
      %3047 = vmatprep.mubr.f32.mxu0 0.0
      %3048 = vmatmul.mubr.f32.gmra.mrb[0].mxu0 %v2857
      %v3049 = vpop.f32.mrb[0].mxu0
      %v3050 = vadd.f32 0.0, %v3049
      %v3051 = vpop.f32.mrb[0].mxu0
      %3052 = vmatprep.mubr.f32.mxu0 0.0
      %3053 = vmatmul.mubr.f32.gmra.mrb[0].mxu0 %v2860
      %v3054 = vpop.f32.mrb[0].mxu0
      %v3055 = vadd.f32 0.0, %v3054
      %v3056 = vpop.f32.mrb[0].mxu0
      %3057 = vmatprep.mubr.f32.mxu0 0.0
      %3058 = vmatmul.mubr.f32.gmra.mrb[0].mxu0 %v2863
      %v3059 = vpop.f32.mrb[0].mxu0
      %v3060 = vadd.f32 0.0, %v3059
      %v3061 = vpop.f32.mrb[0].mxu0
      %3062 = vmatprep.mubr.f32.mxu0 0.0
      %3063 = vmatmul.mubr.f32.gmra.mrb[0].mxu0 %v2866
      %v3064 = vpop.f32.mrb[0].mxu0
      %v3065 = vadd.f32 0.0, %v3064
      %v3066 = vpop.f32.mrb[0].mxu0
      %3067 = vmatprep.mubr.f32.mxu0 0.0
      %3068 = vmatmul.mubr.f32.gmra.mrb[0].mxu0 %v2869
      %v3069 = vpop.f32.mrb[0].mxu0
      %v3070 = vadd.f32 0.0, %v3069
      %v3071 = vpop.f32.mrb[0].mxu0
      %3072 = vmatprep.mubr.f32.mxu0 0.0
      %3073 = vmatmul.mubr.f32.gmra.mrb[0].mxu0 %v2872
      %v3074 = vpop.f32.mrb[0].mxu0
      %v3075 = vadd.f32 0.0, %v3074
      %v3076 = vpop.f32.mrb[0].mxu0
      %3077 = vmatprep.mubr.f32.mxu0 0.0
      %3078 = vmatmul.mubr.f32.gmra.mrb[0].mxu0 %v2875
      %v3079 = vpop.f32.mrb[0].mxu0
      %v3080 = vadd.f32 0.0, %v3079
      %v3081 = vpop.f32.mrb[0].mxu0
      %3082 = vmatprep.mubr.f32.mxu0 0.0
      %3083 = vmatmul.mubr.f32.gmra.mrb[0].mxu0 %v2878
      %v3084 = vpop.f32.mrb[0].mxu0
      %v3085 = vadd.f32 0.0, %v3084
      %v3086 = vpop.f32.mrb[0].mxu0
      %3087 = vmatprep.mubr.f32.mxu0 0.0
      %3088 = vmatmul.mubr.f32.gmra.mrb[0].mxu0 %v2881
      %v3089 = vpop.f32.mrb[0].mxu0
      %v3090 = vadd.f32 0.0, %v3089
      %v3091 = vpop.f32.mrb[0].mxu0
      %3092 = vmatprep.mubr.f32.mxu0 0.0
      %3093 = vmatmul.mubr.f32.gmra.mrb[0].mxu0 %v2884
      %v3094 = vpop.f32.mrb[0].mxu0
      %v3095 = vadd.f32 0.0, %v3094
      %v3096 = vpop.f32.mrb[0].mxu0
      %3097 = vmatprep.mubr.f32.mxu0 0.0
      %3098 = vmatmul.mubr.f32.gmra.mrb[0].mxu0 %v2887
      %v3099 = vpop.f32.mrb[0].mxu0
      %v3100 = vadd.f32 0.0, %v3099
      %v3101 = vpop.f32.mrb[0].mxu0
      %3102 = vmatprep.mubr.f32.mxu0 0.0
      %3103 = vmatmul.mubr.f32.gmra.mrb[0].mxu0 %v2890
      %v3104 = vpop.f32.mrb[0].mxu0
      %v3105 = vadd.f32 0.0, %v3104
      %v3106 = vpop.f32.mrb[0].mxu0
      %3107 = vmatprep.mubr.f32.mxu0 0.0
      %3108 = vmatmul.mubr.f32.gmra.mrb[0].mxu0 %v2893
      %v3109 = vpop.f32.mrb[0].mxu0
      %v3110 = vadd.f32 0.0, %v3109
      %v3111 = vpop.f32.mrb[0].mxu0
      %3112 = vmatprep.mubr.f32.mxu0 0.0
      %3113 = vmatmul.mubr.f32.gmra.mrb[0].mxu0 %v2896
      %v3114 = vpop.f32.mrb[0].mxu0
      %v3115 = vadd.f32 0.0, %v3114
      %v3116 = vpop.f32.mrb[0].mxu0
      %3117 = vmatprep.mubr.f32.mxu0 0.0
      %3118 = vmatmul.mubr.f32.gmra.mrb[0].mxu0 %v2899
      %v3119 = vpop.f32.mrb[0].mxu0
      %v3120 = vadd.f32 0.0, %v3119
      %v3121 = vpop.f32.mrb[0].mxu0
      %3122 = vmatprep.mubr.f32.mxu0 0.0
      %3123 = vmatmul.mubr.f32.gmra.mrb[0].mxu0 %v2902
      %v3124 = vpop.f32.mrb[0].mxu0
      %v3125 = vadd.f32 0.0, %v3124
      %v3126 = vpop.f32.mrb[0].mxu0
      %3127 = vmatprep.mubr.f32.mxu0 0.0
      %3128 = vmatmul.mubr.f32.gmra.mrb[0].mxu0 %v2905
      %v3129 = vpop.f32.mrb[0].mxu0
      %v3130 = vadd.f32 0.0, %v3129
      %v3131 = vpop.f32.mrb[0].mxu0
      %3132 = vmatprep.mubr.f32.mxu0 0.0
      %3133 = vmatmul.mubr.f32.gmra.mrb[0].mxu0 %v2908
      %v3134 = vpop.f32.mrb[0].mxu0
      %v3135 = vadd.f32 0.0, %v3134
      %v3136 = vpop.f32.mrb[0].mxu0
      %3137 = vdwg.mxu0
      %v3138 = vadd.f32 %v2747, %v2980
      %v3139 = vadd.f32 %v2748, %v2985
      %v3140 = vadd.f32 %v2749, %v2990
      %v3141 = vadd.f32 %v2750, %v2995
      %v3142 = vadd.f32 %v2751, %v3000
      %v3143 = vadd.f32 %v2752, %v3005
      %v3144 = vadd.f32 %v2753, %v3010
      %v3145 = vadd.f32 %v2754, %v3015
      %v3146 = vadd.f32 %v2755, %v3020
      %v3147 = vadd.f32 %v2756, %v3025
      %v3148 = vadd.f32 %v2757, %v3030
      %v3149 = vadd.f32 %v2758, %v3035
      %v3150 = vadd.f32 %v2759, %v3040
      %v3151 = vadd.f32 %v2760, %v3045
      %v3152 = vadd.f32 %v2761, %v3050
      %v3153 = vadd.f32 %v2762, %v3055
      %v3154 = vadd.f32 %v2763, %v3060
      %v3155 = vadd.f32 %v2764, %v3065
      %v3156 = vadd.f32 %v2765, %v3070
      %v3157 = vadd.f32 %v2766, %v3075
      %v3158 = vadd.f32 %v2767, %v3080
      %v3159 = vadd.f32 %v2768, %v3085
      %v3160 = vadd.f32 %v2769, %v3090
      %v3161 = vadd.f32 %v2770, %v3095
      %v3162 = vadd.f32 %v2771, %v3100
      %v3163 = vadd.f32 %v2772, %v3105
      %v3164 = vadd.f32 %v2773, %v3110
      %v3165 = vadd.f32 %v2774, %v3115
      %v3166 = vadd.f32 %v2775, %v3120
      %v3167 = vadd.f32 %v2776, %v3125
      %v3168 = vadd.f32 %v2777, %v3130
      %v3169 = vadd.f32 %v2778, %v3135
      %v3170 = vld [vmem:[%s2779 + $0x1] sm:$0xff]
      %v3171 = vld [vmem:[%s2779 + $0x9] sm:$0xff]
      %v3172 = vld [vmem:[%s2779 + $0x19] sm:$0xff]
      %v3173 = vld [vmem:[%s2779 + $0x21] sm:$0xff]
      %v3174 = vld [vmem:[%s2779 + $0x31] sm:$0xff]
      %v3175 = vld [vmem:[%s2779 + $0x39] sm:$0xff]
      %v3176 = vld [vmem:[%s2779 + $0x49] sm:$0xff]
      %v3177 = vld [vmem:[%s2779 + $0x51] sm:$0xff]
      %v3178 = vld [vmem:[%s2779 + $0x61] sm:$0xff]
      %v3179 = vld [vmem:[%s2779 + $0x69] sm:$0xff]
      %v3180 = vld [vmem:[%s2779 + $0x79] sm:$0xff]
      %v3181 = vld [vmem:[%s2779 + $0x81] sm:$0xff]
      %v3182 = vld [vmem:[%s2779 + $0x91] sm:$0xff]
      %v3183 = vld [vmem:[%s2779 + $0x99] sm:$0xff]
      %v3184 = vld [vmem:[%s2779 + $0xa9] sm:$0xff]
      %v3185 = vld [vmem:[%s2779 + $0xb1] sm:$0xff]
      %v3186 = vld [vmem:[%s2779 + $0xc1] sm:$0xff]
      %v3187 = vld [vmem:[%s2779 + $0xc9] sm:$0xff]
      %v3188 = vld [vmem:[%s2779 + $0xd9] sm:$0xff]
      %v3189 = vld [vmem:[%s2779 + $0xe1] sm:$0xff]
      %v3190 = vld [vmem:[%s2779 + $0xf1] sm:$0xff]
      %v3191 = vld [vmem:[%s2779 + $0xf9] sm:$0xff]
      %v3192 = vld [vmem:[%s2779 + $0x109] sm:$0xff]
      %v3193 = vld [vmem:[%s2779 + $0x111] sm:$0xff]
      %v3194 = vld [vmem:[%s2779 + $0x121] sm:$0xff]
      %v3195 = vld [vmem:[%s2779 + $0x129] sm:$0xff]
      %v3196 = vld [vmem:[%s2779 + $0x139] sm:$0xff]
      %v3197 = vld [vmem:[%s2779 + $0x141] sm:$0xff]
      %v3198 = vld [vmem:[%s2779 + $0x151] sm:$0xff]
      %v3199 = vld [vmem:[%s2779 + $0x159] sm:$0xff]
      %v3200 = vld [vmem:[%s2779 + $0x169] sm:$0xff]
      %v3201 = vld [vmem:[%s2779 + $0x171] sm:$0xff]
      %s3202 = scalar_lea.vmem %s3, 28
      %v3203 = vld [vmem:[%s3202] sm:$0xf]
      %v3205 = vsel %vm438, %v3170, 0
      %v3208 = vsel %vm438, %v3171, 0
      %v3211 = vsel %vm438, %v3172, 0
      %v3214 = vsel %vm438, %v3173, 0
      %v3217 = vsel %vm438, %v3174, 0
      %v3220 = vsel %vm438, %v3175, 0
      %v3223 = vsel %vm438, %v3176, 0
      %v3226 = vsel %vm438, %v3177, 0
      %v3229 = vsel %vm438, %v3178, 0
      %v3232 = vsel %vm438, %v3179, 0
      %v3235 = vsel %vm438, %v3180, 0
      %v3238 = vsel %vm438, %v3181, 0
      %v3241 = vsel %vm438, %v3182, 0
      %v3244 = vsel %vm438, %v3183, 0
      %v3247 = vsel %vm438, %v3184, 0
      %v3250 = vsel %vm438, %v3185, 0
      %v3253 = vsel %vm438, %v3186, 0
      %v3256 = vsel %vm438, %v3187, 0
      %v3259 = vsel %vm438, %v3188, 0
      %v3262 = vsel %vm438, %v3189, 0
      %v3265 = vsel %vm438, %v3190, 0
      %v3268 = vsel %vm438, %v3191, 0
      %v3271 = vsel %vm438, %v3192, 0
      %v3274 = vsel %vm438, %v3193, 0
      %v3277 = vsel %vm438, %v3194, 0
      %v3280 = vsel %vm438, %v3195, 0
      %v3283 = vsel %vm438, %v3196, 0
      %v3286 = vsel %vm438, %v3197, 0
      %v3289 = vsel %vm438, %v3198, 0
      %v3292 = vsel %vm438, %v3199, 0
      %v3295 = vsel %vm438, %v3200, 0
      %v3298 = vsel %vm438, %v3201, 0
      %v3301 = vsel %vm665, %v3203, 0
      %3303 = vmatprep.subr.mxu0 0.0
      %3304 = vmatpush1.msra.mxu0 %v3301
      %3305 = vmatprep.subr.mxu0 0.0
      %3306 = vmatpush1.msra.mxu0 0.0
      %3307 = vmatprep.subr.mxu0 0.0
      %3308 = vmatpush1.msra.mxu0 0.0
      %3309 = vmatprep.subr.mxu0 0.0
      %3310 = vmatpush1.msra.mxu0 0.0
      %3311 = vmatprep.subr.mxu0 0.0
      %3312 = vmatpush1.msra.mxu0 0.0
      %3313 = vmatprep.subr.mxu0 0.0
      %3314 = vmatpush1.msra.mxu0 0.0
      %3315 = vmatprep.subr.mxu0 0.0
      %3316 = vmatpush1.msra.mxu0 0.0
      %3317 = vmatprep.subr.mxu0 0.0
      %3318 = vmatpush1.msra.mxu0 0.0
      %3319 = vmatprep.subr.mxu0 0.0
      %3320 = vmatpush1.msra.mxu0 0.0
      %3321 = vmatprep.subr.mxu0 0.0
      %3322 = vmatpush1.msra.mxu0 0.0
      %3323 = vmatprep.subr.mxu0 0.0
      %3324 = vmatpush1.msra.mxu0 0.0
      %3325 = vmatprep.subr.mxu0 0.0
      %3326 = vmatpush1.msra.mxu0 0.0
      %3327 = vmatprep.subr.mxu0 0.0
      %3328 = vmatpush1.msra.mxu0 0.0
      %3329 = vmatprep.subr.mxu0 0.0
      %3330 = vmatpush1.msra.mxu0 0.0
      %3331 = vmatprep.subr.mxu0 0.0
      %3332 = vmatpush1.msra.mxu0 0.0
      %3333 = vmatprep.subr.mxu0 0.0
      %3334 = vmatpush1.msra.mxu0 0.0
      %3335 = vmatprep.subr.mxu0 0.0
      %3336 = vmatpush1.msra.mxu0 0.0
      %3337 = vmatprep.subr.mxu0 0.0
      %3338 = vmatpush1.msra.mxu0 0.0
      %3339 = vmatprep.subr.mxu0 0.0
      %3340 = vmatpush1.msra.mxu0 0.0
      %3341 = vmatprep.subr.mxu0 0.0
      %3342 = vmatpush1.msra.mxu0 0.0
      %3343 = vmatprep.subr.mxu0 0.0
      %3344 = vmatpush1.msra.mxu0 0.0
      %3345 = vmatprep.subr.mxu0 0.0
      %3346 = vmatpush1.msra.mxu0 0.0
      %3347 = vmatprep.subr.mxu0 0.0
      %3348 = vmatpush1.msra.mxu0 0.0
      %3349 = vmatprep.subr.mxu0 0.0
      %3350 = vmatpush1.msra.mxu0 0.0
      %3351 = vmatprep.subr.mxu0 0.0
      %3352 = vmatpush1.msra.mxu0 0.0
      %3353 = vmatprep.subr.mxu0 0.0
      %3354 = vmatpush1.msra.mxu0 0.0
      %3355 = vmatprep.subr.mxu0 0.0
      %3356 = vmatpush1.msra.mxu0 0.0
      %3357 = vmatprep.subr.mxu0 0.0
      %3358 = vmatpush1.msra.mxu0 0.0
      %3359 = vmatprep.subr.mxu0 0.0
      %3360 = vmatpush1.msra.mxu0 0.0
      %3361 = vmatprep.subr.mxu0 0.0
      %3362 = vmatpush1.msra.mxu0 0.0
      %3363 = vmatprep.subr.mxu0 0.0
      %3364 = vmatpush1.msra.mxu0 0.0
      %3365 = vmatprep.subr.mxu0 0.0
      %3366 = vmatpush1.msra.mxu0 0.0
      %3367 = vmatprep.mubr.f32.mxu0 0.0
      %3368 = vmatmul.mubr.f32.gmra.mrb[0].mxu0 %v3205
      %v3369 = vpop.f32.mrb[0].mxu0
      %v3370 = vadd.f32 0.0, %v3369
      %v3371 = vpop.f32.mrb[0].mxu0
      %3372 = vmatprep.mubr.f32.mxu0 0.0
      %3373 = vmatmul.mubr.f32.gmra.mrb[0].mxu0 %v3208
      %v3374 = vpop.f32.mrb[0].mxu0
      %v3375 = vadd.f32 0.0, %v3374
      %v3376 = vpop.f32.mrb[0].mxu0
      %3377 = vmatprep.mubr.f32.mxu0 0.0
      %3378 = vmatmul.mubr.f32.gmra.mrb[0].mxu0 %v3211
      %v3379 = vpop.f32.mrb[0].mxu0
      %v3380 = vadd.f32 0.0, %v3379
      %v3381 = vpop.f32.mrb[0].mxu0
      %3382 = vmatprep.mubr.f32.mxu0 0.0
      %3383 = vmatmul.mubr.f32.gmra.mrb[0].mxu0 %v3214
      %v3384 = vpop.f32.mrb[0].mxu0
      %v3385 = vadd.f32 0.0, %v3384
      %v3386 = vpop.f32.mrb[0].mxu0
      %3387 = vmatprep.mubr.f32.mxu0 0.0
      %3388 = vmatmul.mubr.f32.gmra.mrb[0].mxu0 %v3217
      %v3389 = vpop.f32.mrb[0].mxu0
      %v3390 = vadd.f32 0.0, %v3389
      %v3391 = vpop.f32.mrb[0].mxu0
      %3392 = vmatprep.mubr.f32.mxu0 0.0
      %3393 = vmatmul.mubr.f32.gmra.mrb[0].mxu0 %v3220
      %v3394 = vpop.f32.mrb[0].mxu0
      %v3395 = vadd.f32 0.0, %v3394
      %v3396 = vpop.f32.mrb[0].mxu0
      %3397 = vmatprep.mubr.f32.mxu0 0.0
      %3398 = vmatmul.mubr.f32.gmra.mrb[0].mxu0 %v3223
      %v3399 = vpop.f32.mrb[0].mxu0
      %v3400 = vadd.f32 0.0, %v3399
      %v3401 = vpop.f32.mrb[0].mxu0
      %3402 = vmatprep.mubr.f32.mxu0 0.0
      %3403 = vmatmul.mubr.f32.gmra.mrb[0].mxu0 %v3226
      %v3404 = vpop.f32.mrb[0].mxu0
      %v3405 = vadd.f32 0.0, %v3404
      %v3406 = vpop.f32.mrb[0].mxu0
      %3407 = vmatprep.mubr.f32.mxu0 0.0
      %3408 = vmatmul.mubr.f32.gmra.mrb[0].mxu0 %v3229
      %v3409 = vpop.f32.mrb[0].mxu0
      %v3410 = vadd.f32 0.0, %v3409
      %v3411 = vpop.f32.mrb[0].mxu0
      %3412 = vmatprep.mubr.f32.mxu0 0.0
      %3413 = vmatmul.mubr.f32.gmra.mrb[0].mxu0 %v3232
      %v3414 = vpop.f32.mrb[0].mxu0
      %v3415 = vadd.f32 0.0, %v3414
      %v3416 = vpop.f32.mrb[0].mxu0
      %3417 = vmatprep.mubr.f32.mxu0 0.0
      %3418 = vmatmul.mubr.f32.gmra.mrb[0].mxu0 %v3235
      %v3419 = vpop.f32.mrb[0].mxu0
      %v3420 = vadd.f32 0.0, %v3419
      %v3421 = vpop.f32.mrb[0].mxu0
      %3422 = vmatprep.mubr.f32.mxu0 0.0
      %3423 = vmatmul.mubr.f32.gmra.mrb[0].mxu0 %v3238
      %v3424 = vpop.f32.mrb[0].mxu0
      %v3425 = vadd.f32 0.0, %v3424
      %v3426 = vpop.f32.mrb[0].mxu0
      %3427 = vmatprep.mubr.f32.mxu0 0.0
      %3428 = vmatmul.mubr.f32.gmra.mrb[0].mxu0 %v3241
      %v3429 = vpop.f32.mrb[0].mxu0
      %v3430 = vadd.f32 0.0, %v3429
      %v3431 = vpop.f32.mrb[0].mxu0
      %3432 = vmatprep.mubr.f32.mxu0 0.0
      %3433 = vmatmul.mubr.f32.gmra.mrb[0].mxu0 %v3244
      %v3434 = vpop.f32.mrb[0].mxu0
      %v3435 = vadd.f32 0.0, %v3434
      %v3436 = vpop.f32.mrb[0].mxu0
      %3437 = vmatprep.mubr.f32.mxu0 0.0
      %3438 = vmatmul.mubr.f32.gmra.mrb[0].mxu0 %v3247
      %v3439 = vpop.f32.mrb[0].mxu0
      %v3440 = vadd.f32 0.0, %v3439
      %v3441 = vpop.f32.mrb[0].mxu0
      %3442 = vmatprep.mubr.f32.mxu0 0.0
      %3443 = vmatmul.mubr.f32.gmra.mrb[0].mxu0 %v3250
      %v3444 = vpop.f32.mrb[0].mxu0
      %v3445 = vadd.f32 0.0, %v3444
      %v3446 = vpop.f32.mrb[0].mxu0
      %3447 = vmatprep.mubr.f32.mxu0 0.0
      %3448 = vmatmul.mubr.f32.gmra.mrb[0].mxu0 %v3253
      %v3449 = vpop.f32.mrb[0].mxu0
      %v3450 = vadd.f32 0.0, %v3449
      %v3451 = vpop.f32.mrb[0].mxu0
      %3452 = vmatprep.mubr.f32.mxu0 0.0
      %3453 = vmatmul.mubr.f32.gmra.mrb[0].mxu0 %v3256
      %v3454 = vpop.f32.mrb[0].mxu0
      %v3455 = vadd.f32 0.0, %v3454
      %v3456 = vpop.f32.mrb[0].mxu0
      %3457 = vmatprep.mubr.f32.mxu0 0.0
      %3458 = vmatmul.mubr.f32.gmra.mrb[0].mxu0 %v3259
      %v3459 = vpop.f32.mrb[0].mxu0
      %v3460 = vadd.f32 0.0, %v3459
      %v3461 = vpop.f32.mrb[0].mxu0
      %3462 = vmatprep.mubr.f32.mxu0 0.0
      %3463 = vmatmul.mubr.f32.gmra.mrb[0].mxu0 %v3262
      %v3464 = vpop.f32.mrb[0].mxu0
      %v3465 = vadd.f32 0.0, %v3464
      %v3466 = vpop.f32.mrb[0].mxu0
      %3467 = vmatprep.mubr.f32.mxu0 0.0
      %3468 = vmatmul.mubr.f32.gmra.mrb[0].mxu0 %v3265
      %v3469 = vpop.f32.mrb[0].mxu0
      %v3470 = vadd.f32 0.0, %v3469
      %v3471 = vpop.f32.mrb[0].mxu0
      %3472 = vmatprep.mubr.f32.mxu0 0.0
      %3473 = vmatmul.mubr.f32.gmra.mrb[0].mxu0 %v3268
      %v3474 = vpop.f32.mrb[0].mxu0
      %v3475 = vadd.f32 0.0, %v3474
      %v3476 = vpop.f32.mrb[0].mxu0
      %3477 = vmatprep.mubr.f32.mxu0 0.0
      %3478 = vmatmul.mubr.f32.gmra.mrb[0].mxu0 %v3271
      %v3479 = vpop.f32.mrb[0].mxu0
      %v3480 = vadd.f32 0.0, %v3479
      %v3481 = vpop.f32.mrb[0].mxu0
      %3482 = vmatprep.mubr.f32.mxu0 0.0
      %3483 = vmatmul.mubr.f32.gmra.mrb[0].mxu0 %v3274
      %v3484 = vpop.f32.mrb[0].mxu0
      %v3485 = vadd.f32 0.0, %v3484
      %v3486 = vpop.f32.mrb[0].mxu0
      %3487 = vmatprep.mubr.f32.mxu0 0.0
      %3488 = vmatmul.mubr.f32.gmra.mrb[0].mxu0 %v3277
      %v3489 = vpop.f32.mrb[0].mxu0
      %v3490 = vadd.f32 0.0, %v3489
      %v3491 = vpop.f32.mrb[0].mxu0
      %3492 = vmatprep.mubr.f32.mxu0 0.0
      %3493 = vmatmul.mubr.f32.gmra.mrb[0].mxu0 %v3280
      %v3494 = vpop.f32.mrb[0].mxu0
      %v3495 = vadd.f32 0.0, %v3494
      %v3496 = vpop.f32.mrb[0].mxu0
      %3497 = vmatprep.mubr.f32.mxu0 0.0
      %3498 = vmatmul.mubr.f32.gmra.mrb[0].mxu0 %v3283
      %v3499 = vpop.f32.mrb[0].mxu0
      %v3500 = vadd.f32 0.0, %v3499
      %v3501 = vpop.f32.mrb[0].mxu0
      %3502 = vmatprep.mubr.f32.mxu0 0.0
      %3503 = vmatmul.mubr.f32.gmra.mrb[0].mxu0 %v3286
      %v3504 = vpop.f32.mrb[0].mxu0
      %v3505 = vadd.f32 0.0, %v3504
      %v3506 = vpop.f32.mrb[0].mxu0
      %3507 = vmatprep.mubr.f32.mxu0 0.0
      %3508 = vmatmul.mubr.f32.gmra.mrb[0].mxu0 %v3289
      %v3509 = vpop.f32.mrb[0].mxu0
      %v3510 = vadd.f32 0.0, %v3509
      %v3511 = vpop.f32.mrb[0].mxu0
      %3512 = vmatprep.mubr.f32.mxu0 0.0
      %3513 = vmatmul.mubr.f32.gmra.mrb[0].mxu0 %v3292
      %v3514 = vpop.f32.mrb[0].mxu0
      %v3515 = vadd.f32 0.0, %v3514
      %v3516 = vpop.f32.mrb[0].mxu0
      %3517 = vmatprep.mubr.f32.mxu0 0.0
      %3518 = vmatmul.mubr.f32.gmra.mrb[0].mxu0 %v3295
      %v3519 = vpop.f32.mrb[0].mxu0
      %v3520 = vadd.f32 0.0, %v3519
      %v3521 = vpop.f32.mrb[0].mxu0
      %3522 = vmatprep.mubr.f32.mxu0 0.0
      %3523 = vmatmul.mubr.f32.gmra.mrb[0].mxu0 %v3298
      %v3524 = vpop.f32.mrb[0].mxu0
      %v3525 = vadd.f32 0.0, %v3524
      %v3526 = vpop.f32.mrb[0].mxu0
      %3527 = vdwg.mxu0
      %v3528 = vadd.f32 %v3138, %v3370
      %v3529 = vadd.f32 %v3139, %v3375
      %v3530 = vadd.f32 %v3140, %v3380
      %v3531 = vadd.f32 %v3141, %v3385
      %v3532 = vadd.f32 %v3142, %v3390
      %v3533 = vadd.f32 %v3143, %v3395
      %v3534 = vadd.f32 %v3144, %v3400
      %v3535 = vadd.f32 %v3145, %v3405
      %v3536 = vadd.f32 %v3146, %v3410
      %v3537 = vadd.f32 %v3147, %v3415
      %v3538 = vadd.f32 %v3148, %v3420
      %v3539 = vadd.f32 %v3149, %v3425
      %v3540 = vadd.f32 %v3150, %v3430
      %v3541 = vadd.f32 %v3151, %v3435
      %v3542 = vadd.f32 %v3152, %v3440
      %v3543 = vadd.f32 %v3153, %v3445
      %v3544 = vadd.f32 %v3154, %v3450
      %v3545 = vadd.f32 %v3155, %v3455
      %v3546 = vadd.f32 %v3156, %v3460
      %v3547 = vadd.f32 %v3157, %v3465
      %v3548 = vadd.f32 %v3158, %v3470
      %v3549 = vadd.f32 %v3159, %v3475
      %v3550 = vadd.f32 %v3160, %v3480
      %v3551 = vadd.f32 %v3161, %v3485
      %v3552 = vadd.f32 %v3162, %v3490
      %v3553 = vadd.f32 %v3163, %v3495
      %v3554 = vadd.f32 %v3164, %v3500
      %v3555 = vadd.f32 %v3165, %v3505
      %v3556 = vadd.f32 %v3166, %v3510
      %v3557 = vadd.f32 %v3167, %v3515
      %v3558 = vadd.f32 %v3168, %v3520
      %v3559 = vadd.f32 %v3169, %v3525
      %v3560 = vld [vmem:[%s2779 + $0x2] sm:$0xff]
      %v3561 = vld [vmem:[%s2779 + $0xa] sm:$0xff]
      %v3562 = vld [vmem:[%s2779 + $0x1a] sm:$0xff]
      %v3563 = vld [vmem:[%s2779 + $0x22] sm:$0xff]
      %v3564 = vld [vmem:[%s2779 + $0x32] sm:$0xff]
      %v3565 = vld [vmem:[%s2779 + $0x3a] sm:$0xff]
      %v3566 = vld [vmem:[%s2779 + $0x4a] sm:$0xff]
      %v3567 = vld [vmem:[%s2779 + $0x52] sm:$0xff]
      %v3568 = vld [vmem:[%s2779 + $0x62] sm:$0xff]
      %v3569 = vld [vmem:[%s2779 + $0x6a] sm:$0xff]
      %v3570 = vld [vmem:[%s2779 + $0x7a] sm:$0xff]
      %v3571 = vld [vmem:[%s2779 + $0x82] sm:$0xff]
      %v3572 = vld [vmem:[%s2779 + $0x92] sm:$0xff]
      %v3573 = vld [vmem:[%s2779 + $0x9a] sm:$0xff]
      %v3574 = vld [vmem:[%s2779 + $0xaa] sm:$0xff]
      %v3575 = vld [vmem:[%s2779 + $0xb2] sm:$0xff]
      %v3576 = vld [vmem:[%s2779 + $0xc2] sm:$0xff]
      %v3577 = vld [vmem:[%s2779 + $0xca] sm:$0xff]
      %v3578 = vld [vmem:[%s2779 + $0xda] sm:$0xff]
      %v3579 = vld [vmem:[%s2779 + $0xe2] sm:$0xff]
      %v3580 = vld [vmem:[%s2779 + $0xf2] sm:$0xff]
      %v3581 = vld [vmem:[%s2779 + $0xfa] sm:$0xff]
      %v3582 = vld [vmem:[%s2779 + $0x10a] sm:$0xff]
      %v3583 = vld [vmem:[%s2779 + $0x112] sm:$0xff]
      %v3584 = vld [vmem:[%s2779 + $0x122] sm:$0xff]
      %v3585 = vld [vmem:[%s2779 + $0x12a] sm:$0xff]
      %v3586 = vld [vmem:[%s2779 + $0x13a] sm:$0xff]
      %v3587 = vld [vmem:[%s2779 + $0x142] sm:$0xff]
      %v3588 = vld [vmem:[%s2779 + $0x152] sm:$0xff]
      %v3589 = vld [vmem:[%s2779 + $0x15a] sm:$0xff]
      %v3590 = vld [vmem:[%s2779 + $0x16a] sm:$0xff]
      %v3591 = vld [vmem:[%s2779 + $0x172] sm:$0xff]
      %s3592 = scalar_lea.vmem %s3, 32
      %v3593 = vld [vmem:[%s3592] sm:$0xf]
      %v3595 = vsel %vm438, %v3560, 0
      %v3598 = vsel %vm438, %v3561, 0
      %v3601 = vsel %vm438, %v3562, 0
      %v3604 = vsel %vm438, %v3563, 0
      %v3607 = vsel %vm438, %v3564, 0
      %v3610 = vsel %vm438, %v3565, 0
      %v3613 = vsel %vm438, %v3566, 0
      %v3616 = vsel %vm438, %v3567, 0
      %v3619 = vsel %vm438, %v3568, 0
      %v3622 = vsel %vm438, %v3569, 0
      %v3625 = vsel %vm438, %v3570, 0
      %v3628 = vsel %vm438, %v3571, 0
      %v3631 = vsel %vm438, %v3572, 0
      %v3634 = vsel %vm438, %v3573, 0
      %v3637 = vsel %vm438, %v3574, 0
      %v3640 = vsel %vm438, %v3575, 0
      %v3643 = vsel %vm438, %v3576, 0
      %v3646 = vsel %vm438, %v3577, 0
      %v3649 = vsel %vm438, %v3578, 0
      %v3652 = vsel %vm438, %v3579, 0
      %v3655 = vsel %vm438, %v3580, 0
      %v3658 = vsel %vm438, %v3581, 0
      %v3661 = vsel %vm438, %v3582, 0
      %v3664 = vsel %vm438, %v3583, 0
      %v3667 = vsel %vm438, %v3584, 0
      %v3670 = vsel %vm438, %v3585, 0
      %v3673 = vsel %vm438, %v3586, 0
      %v3676 = vsel %vm438, %v3587, 0
      %v3679 = vsel %vm438, %v3588, 0
      %v3682 = vsel %vm438, %v3589, 0
      %v3685 = vsel %vm438, %v3590, 0
      %v3688 = vsel %vm438, %v3591, 0
      %v3691 = vsel %vm665, %v3593, 0
      %3693 = vmatprep.subr.mxu0 0.0
      %3694 = vmatpush1.msra.mxu0 %v3691
      %3695 = vmatprep.subr.mxu0 0.0
      %3696 = vmatpush1.msra.mxu0 0.0
      %3697 = vmatprep.subr.mxu0 0.0
      %3698 = vmatpush1.msra.mxu0 0.0
      %3699 = vmatprep.subr.mxu0 0.0
      %3700 = vmatpush1.msra.mxu0 0.0
      %3701 = vmatprep.subr.mxu0 0.0
      %3702 = vmatpush1.msra.mxu0 0.0
      %3703 = vmatprep.subr.mxu0 0.0
      %3704 = vmatpush1.msra.mxu0 0.0
      %3705 = vmatprep.subr.mxu0 0.0
      %3706 = vmatpush1.msra.mxu0 0.0
      %3707 = vmatprep.subr.mxu0 0.0
      %3708 = vmatpush1.msra.mxu0 0.0
      %3709 = vmatprep.subr.mxu0 0.0
      %3710 = vmatpush1.msra.mxu0 0.0
      %3711 = vmatprep.subr.mxu0 0.0
      %3712 = vmatpush1.msra.mxu0 0.0
      %3713 = vmatprep.subr.mxu0 0.0
      %3714 = vmatpush1.msra.mxu0 0.0
      %3715 = vmatprep.subr.mxu0 0.0
      %3716 = vmatpush1.msra.mxu0 0.0
      %3717 = vmatprep.subr.mxu0 0.0
      %3718 = vmatpush1.msra.mxu0 0.0
      %3719 = vmatprep.subr.mxu0 0.0
      %3720 = vmatpush1.msra.mxu0 0.0
      %3721 = vmatprep.subr.mxu0 0.0
      %3722 = vmatpush1.msra.mxu0 0.0
      %3723 = vmatprep.subr.mxu0 0.0
      %3724 = vmatpush1.msra.mxu0 0.0
      %3725 = vmatprep.subr.mxu0 0.0
      %3726 = vmatpush1.msra.mxu0 0.0
      %3727 = vmatprep.subr.mxu0 0.0
      %3728 = vmatpush1.msra.mxu0 0.0
      %3729 = vmatprep.subr.mxu0 0.0
      %3730 = vmatpush1.msra.mxu0 0.0
      %3731 = vmatprep.subr.mxu0 0.0
      %3732 = vmatpush1.msra.mxu0 0.0
      %3733 = vmatprep.subr.mxu0 0.0
      %3734 = vmatpush1.msra.mxu0 0.0
      %3735 = vmatprep.subr.mxu0 0.0
      %3736 = vmatpush1.msra.mxu0 0.0
      %3737 = vmatprep.subr.mxu0 0.0
      %3738 = vmatpush1.msra.mxu0 0.0
      %3739 = vmatprep.subr.mxu0 0.0
      %3740 = vmatpush1.msra.mxu0 0.0
      %3741 = vmatprep.subr.mxu0 0.0
      %3742 = vmatpush1.msra.mxu0 0.0
      %3743 = vmatprep.subr.mxu0 0.0
      %3744 = vmatpush1.msra.mxu0 0.0
      %3745 = vmatprep.subr.mxu0 0.0
      %3746 = vmatpush1.msra.mxu0 0.0
      %3747 = vmatprep.subr.mxu0 0.0
      %3748 = vmatpush1.msra.mxu0 0.0
      %3749 = vmatprep.subr.mxu0 0.0
      %3750 = vmatpush1.msra.mxu0 0.0
      %3751 = vmatprep.subr.mxu0 0.0
      %3752 = vmatpush1.msra.mxu0 0.0
      %3753 = vmatprep.subr.mxu0 0.0
      %3754 = vmatpush1.msra.mxu0 0.0
      %3755 = vmatprep.subr.mxu0 0.0
      %3756 = vmatpush1.msra.mxu0 0.0
      %3757 = vmatprep.mubr.f32.mxu0 0.0
      %3758 = vmatmul.mubr.f32.gmra.mrb[0].mxu0 %v3595
      %v3759 = vpop.f32.mrb[0].mxu0
      %v3760 = vadd.f32 0.0, %v3759
      %v3761 = vpop.f32.mrb[0].mxu0
      %3762 = vmatprep.mubr.f32.mxu0 0.0
      %3763 = vmatmul.mubr.f32.gmra.mrb[0].mxu0 %v3598
      %v3764 = vpop.f32.mrb[0].mxu0
      %v3765 = vadd.f32 0.0, %v3764
      %v3766 = vpop.f32.mrb[0].mxu0
      %3767 = vmatprep.mubr.f32.mxu0 0.0
      %3768 = vmatmul.mubr.f32.gmra.mrb[0].mxu0 %v3601
      %v3769 = vpop.f32.mrb[0].mxu0
      %v3770 = vadd.f32 0.0, %v3769
      %v3771 = vpop.f32.mrb[0].mxu0
      %3772 = vmatprep.mubr.f32.mxu0 0.0
      %3773 = vmatmul.mubr.f32.gmra.mrb[0].mxu0 %v3604
      %v3774 = vpop.f32.mrb[0].mxu0
      %v3775 = vadd.f32 0.0, %v3774
      %v3776 = vpop.f32.mrb[0].mxu0
      %3777 = vmatprep.mubr.f32.mxu0 0.0
      %3778 = vmatmul.mubr.f32.gmra.mrb[0].mxu0 %v3607
      %v3779 = vpop.f32.mrb[0].mxu0
      %v3780 = vadd.f32 0.0, %v3779
      %v3781 = vpop.f32.mrb[0].mxu0
      %3782 = vmatprep.mubr.f32.mxu0 0.0
      %3783 = vmatmul.mubr.f32.gmra.mrb[0].mxu0 %v3610
      %v3784 = vpop.f32.mrb[0].mxu0
      %v3785 = vadd.f32 0.0, %v3784
      %v3786 = vpop.f32.mrb[0].mxu0
      %3787 = vmatprep.mubr.f32.mxu0 0.0
      %3788 = vmatmul.mubr.f32.gmra.mrb[0].mxu0 %v3613
      %v3789 = vpop.f32.mrb[0].mxu0
      %v3790 = vadd.f32 0.0, %v3789
      %v3791 = vpop.f32.mrb[0].mxu0
      %3792 = vmatprep.mubr.f32.mxu0 0.0
      %3793 = vmatmul.mubr.f32.gmra.mrb[0].mxu0 %v3616
      %v3794 = vpop.f32.mrb[0].mxu0
      %v3795 = vadd.f32 0.0, %v3794
      %v3796 = vpop.f32.mrb[0].mxu0
      %3797 = vmatprep.mubr.f32.mxu0 0.0
      %3798 = vmatmul.mubr.f32.gmra.mrb[0].mxu0 %v3619
      %v3799 = vpop.f32.mrb[0].mxu0
      %v3800 = vadd.f32 0.0, %v3799
      %v3801 = vpop.f32.mrb[0].mxu0
      %3802 = vmatprep.mubr.f32.mxu0 0.0
      %3803 = vmatmul.mubr.f32.gmra.mrb[0].mxu0 %v3622
      %v3804 = vpop.f32.mrb[0].mxu0
      %v3805 = vadd.f32 0.0, %v3804
      %v3806 = vpop.f32.mrb[0].mxu0
      %3807 = vmatprep.mubr.f32.mxu0 0.0
      %3808 = vmatmul.mubr.f32.gmra.mrb[0].mxu0 %v3625
      %v3809 = vpop.f32.mrb[0].mxu0
      %v3810 = vadd.f32 0.0, %v3809
      %v3811 = vpop.f32.mrb[0].mxu0
      %3812 = vmatprep.mubr.f32.mxu0 0.0
      %3813 = vmatmul.mubr.f32.gmra.mrb[0].mxu0 %v3628
      %v3814 = vpop.f32.mrb[0].mxu0
      %v3815 = vadd.f32 0.0, %v3814
      %v3816 = vpop.f32.mrb[0].mxu0
      %3817 = vmatprep.mubr.f32.mxu0 0.0
      %3818 = vmatmul.mubr.f32.gmra.mrb[0].mxu0 %v3631
      %v3819 = vpop.f32.mrb[0].mxu0
      %v3820 = vadd.f32 0.0, %v3819
      %v3821 = vpop.f32.mrb[0].mxu0
      %3822 = vmatprep.mubr.f32.mxu0 0.0
      %3823 = vmatmul.mubr.f32.gmra.mrb[0].mxu0 %v3634
      %v3824 = vpop.f32.mrb[0].mxu0
      %v3825 = vadd.f32 0.0, %v3824
      %v3826 = vpop.f32.mrb[0].mxu0
      %3827 = vmatprep.mubr.f32.mxu0 0.0
      %3828 = vmatmul.mubr.f32.gmra.mrb[0].mxu0 %v3637
      %v3829 = vpop.f32.mrb[0].mxu0
      %v3830 = vadd.f32 0.0, %v3829
      %v3831 = vpop.f32.mrb[0].mxu0
      %3832 = vmatprep.mubr.f32.mxu0 0.0
      %3833 = vmatmul.mubr.f32.gmra.mrb[0].mxu0 %v3640
      %v3834 = vpop.f32.mrb[0].mxu0
      %v3835 = vadd.f32 0.0, %v3834
      %v3836 = vpop.f32.mrb[0].mxu0
      %3837 = vmatprep.mubr.f32.mxu0 0.0
      %3838 = vmatmul.mubr.f32.gmra.mrb[0].mxu0 %v3643
      %v3839 = vpop.f32.mrb[0].mxu0
      %v3840 = vadd.f32 0.0, %v3839
      %v3841 = vpop.f32.mrb[0].mxu0
      %3842 = vmatprep.mubr.f32.mxu0 0.0
      %3843 = vmatmul.mubr.f32.gmra.mrb[0].mxu0 %v3646
      %v3844 = vpop.f32.mrb[0].mxu0
      %v3845 = vadd.f32 0.0, %v3844
      %v3846 = vpop.f32.mrb[0].mxu0
      %3847 = vmatprep.mubr.f32.mxu0 0.0
      %3848 = vmatmul.mubr.f32.gmra.mrb[0].mxu0 %v3649
      %v3849 = vpop.f32.mrb[0].mxu0
      %v3850 = vadd.f32 0.0, %v3849
      %v3851 = vpop.f32.mrb[0].mxu0
      %3852 = vmatprep.mubr.f32.mxu0 0.0
      %3853 = vmatmul.mubr.f32.gmra.mrb[0].mxu0 %v3652
      %v3854 = vpop.f32.mrb[0].mxu0
      %v3855 = vadd.f32 0.0, %v3854
      %v3856 = vpop.f32.mrb[0].mxu0
      %3857 = vmatprep.mubr.f32.mxu0 0.0
      %3858 = vmatmul.mubr.f32.gmra.mrb[0].mxu0 %v3655
      %v3859 = vpop.f32.mrb[0].mxu0
      %v3860 = vadd.f32 0.0, %v3859
      %v3861 = vpop.f32.mrb[0].mxu0
      %3862 = vmatprep.mubr.f32.mxu0 0.0
      %3863 = vmatmul.mubr.f32.gmra.mrb[0].mxu0 %v3658
      %v3864 = vpop.f32.mrb[0].mxu0
      %v3865 = vadd.f32 0.0, %v3864
      %v3866 = vpop.f32.mrb[0].mxu0
      %3867 = vmatprep.mubr.f32.mxu0 0.0
      %3868 = vmatmul.mubr.f32.gmra.mrb[0].mxu0 %v3661
      %v3869 = vpop.f32.mrb[0].mxu0
      %v3870 = vadd.f32 0.0, %v3869
      %v3871 = vpop.f32.mrb[0].mxu0
      %3872 = vmatprep.mubr.f32.mxu0 0.0
      %3873 = vmatmul.mubr.f32.gmra.mrb[0].mxu0 %v3664
      %v3874 = vpop.f32.mrb[0].mxu0
      %v3875 = vadd.f32 0.0, %v3874
      %v3876 = vpop.f32.mrb[0].mxu0
      %3877 = vmatprep.mubr.f32.mxu0 0.0
      %3878 = vmatmul.mubr.f32.gmra.mrb[0].mxu0 %v3667
      %v3879 = vpop.f32.mrb[0].mxu0
      %v3880 = vadd.f32 0.0, %v3879
      %v3881 = vpop.f32.mrb[0].mxu0
      %3882 = vmatprep.mubr.f32.mxu0 0.0
      %3883 = vmatmul.mubr.f32.gmra.mrb[0].mxu0 %v3670
      %v3884 = vpop.f32.mrb[0].mxu0
      %v3885 = vadd.f32 0.0, %v3884
      %v3886 = vpop.f32.mrb[0].mxu0
      %3887 = vmatprep.mubr.f32.mxu0 0.0
      %3888 = vmatmul.mubr.f32.gmra.mrb[0].mxu0 %v3673
      %v3889 = vpop.f32.mrb[0].mxu0
      %v3890 = vadd.f32 0.0, %v3889
      %v3891 = vpop.f32.mrb[0].mxu0
      %3892 = vmatprep.mubr.f32.mxu0 0.0
      %3893 = vmatmul.mubr.f32.gmra.mrb[0].mxu0 %v3676
      %v3894 = vpop.f32.mrb[0].mxu0
      %v3895 = vadd.f32 0.0, %v3894
      %v3896 = vpop.f32.mrb[0].mxu0
      %3897 = vmatprep.mubr.f32.mxu0 0.0
      %3898 = vmatmul.mubr.f32.gmra.mrb[0].mxu0 %v3679
      %v3899 = vpop.f32.mrb[0].mxu0
      %v3900 = vadd.f32 0.0, %v3899
      %v3901 = vpop.f32.mrb[0].mxu0
      %3902 = vmatprep.mubr.f32.mxu0 0.0
      %3903 = vmatmul.mubr.f32.gmra.mrb[0].mxu0 %v3682
      %v3904 = vpop.f32.mrb[0].mxu0
      %v3905 = vadd.f32 0.0, %v3904
      %v3906 = vpop.f32.mrb[0].mxu0
      %3907 = vmatprep.mubr.f32.mxu0 0.0
      %3908 = vmatmul.mubr.f32.gmra.mrb[0].mxu0 %v3685
      %v3909 = vpop.f32.mrb[0].mxu0
      %v3910 = vadd.f32 0.0, %v3909
      %v3911 = vpop.f32.mrb[0].mxu0
      %3912 = vmatprep.mubr.f32.mxu0 0.0
      %3913 = vmatmul.mubr.f32.gmra.mrb[0].mxu0 %v3688
      %v3914 = vpop.f32.mrb[0].mxu0
      %v3915 = vadd.f32 0.0, %v3914
      %v3916 = vpop.f32.mrb[0].mxu0
      %3917 = vdwg.mxu0
      %v3918 = vadd.f32 %v3528, %v3760
      %v3919 = vadd.f32 %v3529, %v3765
      %v3920 = vadd.f32 %v3530, %v3770
      %v3921 = vadd.f32 %v3531, %v3775
      %v3922 = vadd.f32 %v3532, %v3780
      %v3923 = vadd.f32 %v3533, %v3785
      %v3924 = vadd.f32 %v3534, %v3790
      %v3925 = vadd.f32 %v3535, %v3795
      %v3926 = vadd.f32 %v3536, %v3800
      %v3927 = vadd.f32 %v3537, %v3805
      %v3928 = vadd.f32 %v3538, %v3810
      %v3929 = vadd.f32 %v3539, %v3815
      %v3930 = vadd.f32 %v3540, %v3820
      %v3931 = vadd.f32 %v3541, %v3825
      %v3932 = vadd.f32 %v3542, %v3830
      %v3933 = vadd.f32 %v3543, %v3835
      %v3934 = vadd.f32 %v3544, %v3840
      %v3935 = vadd.f32 %v3545, %v3845
      %v3936 = vadd.f32 %v3546, %v3850
      %v3937 = vadd.f32 %v3547, %v3855
      %v3938 = vadd.f32 %v3548, %v3860
      %v3939 = vadd.f32 %v3549, %v3865
      %v3940 = vadd.f32 %v3550, %v3870
      %v3941 = vadd.f32 %v3551, %v3875
      %v3942 = vadd.f32 %v3552, %v3880
      %v3943 = vadd.f32 %v3553, %v3885
      %v3944 = vadd.f32 %v3554, %v3890
      %v3945 = vadd.f32 %v3555, %v3895
      %v3946 = vadd.f32 %v3556, %v3900
      %v3947 = vadd.f32 %v3557, %v3905
      %v3948 = vadd.f32 %v3558, %v3910
      %v3949 = vadd.f32 %v3559, %v3915
      %v3950 = vld [vmem:[%s4] sm:$0x1]
      %v3952 = vlaneseq
      %v3953 = vshrl.u32 %v3952, 7
      %v3954 = vsub.s32 0, %v3953
      %v3955 = vrot.slane %v3950, %v3954
      %v3957 = vadd.f32 %v3918, %v3955
      %v3958 = vadd.f32 %v3919, %v3955
      %v3959 = vadd.f32 %v3920, %v3955
      %v3960 = vadd.f32 %v3921, %v3955
      %v3961 = vadd.f32 %v3922, %v3955
      %v3962 = vadd.f32 %v3923, %v3955
      %v3963 = vadd.f32 %v3924, %v3955
      %v3964 = vadd.f32 %v3925, %v3955
      %v3965 = vadd.f32 %v3926, %v3955
      %v3966 = vadd.f32 %v3927, %v3955
      %v3967 = vadd.f32 %v3928, %v3955
      %v3968 = vadd.f32 %v3929, %v3955
      %v3969 = vadd.f32 %v3930, %v3955
      %v3970 = vadd.f32 %v3931, %v3955
      %v3971 = vadd.f32 %v3932, %v3955
      %v3972 = vadd.f32 %v3933, %v3955
      %v3973 = vadd.f32 %v3934, %v3955
      %v3974 = vadd.f32 %v3935, %v3955
      %v3975 = vadd.f32 %v3936, %v3955
      %v3976 = vadd.f32 %v3937, %v3955
      %v3977 = vadd.f32 %v3938, %v3955
      %v3978 = vadd.f32 %v3939, %v3955
      %v3979 = vadd.f32 %v3940, %v3955
      %v3980 = vadd.f32 %v3941, %v3955
      %v3981 = vadd.f32 %v3942, %v3955
      %v3982 = vadd.f32 %v3943, %v3955
      %v3983 = vadd.f32 %v3944, %v3955
      %v3984 = vadd.f32 %v3945, %v3955
      %v3985 = vadd.f32 %v3946, %v3955
      %v3986 = vadd.f32 %v3947, %v3955
      %v3987 = vadd.f32 %v3948, %v3955
      %v3988 = vadd.f32 %v3949, %v3955
      %v3989 = vxor.u32 %v3957, 2147483648
      %v3990 = vxor.u32 %v3958, 2147483648
      %v3991 = vxor.u32 %v3959, 2147483648
      %v3992 = vxor.u32 %v3960, 2147483648
      %v3993 = vxor.u32 %v3961, 2147483648
      %v3994 = vxor.u32 %v3962, 2147483648
      %v3995 = vxor.u32 %v3963, 2147483648
      %v3996 = vxor.u32 %v3964, 2147483648
      %v3997 = vxor.u32 %v3965, 2147483648
      %v3998 = vxor.u32 %v3966, 2147483648
      %v3999 = vxor.u32 %v3967, 2147483648
      %v4000 = vxor.u32 %v3968, 2147483648
      %v4001 = vxor.u32 %v3969, 2147483648
      %v4002 = vxor.u32 %v3970, 2147483648
      %v4003 = vxor.u32 %v3971, 2147483648
      %v4004 = vxor.u32 %v3972, 2147483648
      %v4005 = vxor.u32 %v3973, 2147483648
      %v4006 = vxor.u32 %v3974, 2147483648
      %v4007 = vxor.u32 %v3975, 2147483648
      %v4008 = vxor.u32 %v3976, 2147483648
      %v4009 = vxor.u32 %v3977, 2147483648
      %v4010 = vxor.u32 %v3978, 2147483648
      %v4011 = vxor.u32 %v3979, 2147483648
      %v4012 = vxor.u32 %v3980, 2147483648
      %v4013 = vxor.u32 %v3981, 2147483648
      %v4014 = vxor.u32 %v3982, 2147483648
      %v4015 = vxor.u32 %v3983, 2147483648
      %v4016 = vxor.u32 %v3984, 2147483648
      %v4017 = vxor.u32 %v3985, 2147483648
      %v4018 = vxor.u32 %v3986, 2147483648
      %v4019 = vxor.u32 %v3987, 2147483648
      %v4020 = vxor.u32 %v3988, 2147483648
      %v4021 = vmul.f32 %v3989, 1.442695
      %v4022 = vpow.pop %v4021
      %v4023 = vmul.f32 %v3990, 1.442695
      %v4024 = vpow.pop %v4023
      %v4025 = vmul.f32 %v3991, 1.442695
      %v4026 = vpow.pop %v4025
      %v4027 = vmul.f32 %v3992, 1.442695
      %v4028 = vpow.pop %v4027
      %v4029 = vmul.f32 %v3993, 1.442695
      %v4030 = vpow.pop %v4029
      %v4031 = vmul.f32 %v3994, 1.442695
      %v4032 = vpow.pop %v4031
      %v4033 = vmul.f32 %v3995, 1.442695
      %v4034 = vpow.pop %v4033
      %v4035 = vmul.f32 %v3996, 1.442695
      %v4036 = vpow.pop %v4035
      %v4037 = vmul.f32 %v3997, 1.442695
      %v4038 = vpow.pop %v4037
      %v4039 = vmul.f32 %v3998, 1.442695
      %v4040 = vpow.pop %v4039
      %v4041 = vmul.f32 %v3999, 1.442695
      %v4042 = vpow.pop %v4041
      %v4043 = vmul.f32 %v4000, 1.442695
      %v4044 = vpow.pop %v4043
      %v4045 = vmul.f32 %v4001, 1.442695
      %v4046 = vpow.pop %v4045
      %v4047 = vmul.f32 %v4002, 1.442695
      %v4048 = vpow.pop %v4047
      %v4049 = vmul.f32 %v4003, 1.442695
      %v4050 = vpow.pop %v4049
      %v4051 = vmul.f32 %v4004, 1.442695
      %v4052 = vpow.pop %v4051
      %v4053 = vmul.f32 %v4005, 1.442695
      %v4054 = vpow.pop %v4053
      %v4055 = vmul.f32 %v4006, 1.442695
      %v4056 = vpow.pop %v4055
      %v4057 = vmul.f32 %v4007, 1.442695
      %v4058 = vpow.pop %v4057
      %v4059 = vmul.f32 %v4008, 1.442695
      %v4060 = vpow.pop %v4059
      %v4061 = vmul.f32 %v4009, 1.442695
      %v4062 = vpow.pop %v4061
      %v4063 = vmul.f32 %v4010, 1.442695
      %v4064 = vpow.pop %v4063
      %v4065 = vmul.f32 %v4011, 1.442695
      %v4066 = vpow.pop %v4065
      %v4067 = vmul.f32 %v4012, 1.442695
      %v4068 = vpow.pop %v4067
      %v4069 = vmul.f32 %v4013, 1.442695
      %v4070 = vpow.pop %v4069
      %v4071 = vmul.f32 %v4014, 1.442695
      %v4072 = vpow.pop %v4071
      %v4073 = vmul.f32 %v4015, 1.442695
      %v4074 = vpow.pop %v4073
      %v4075 = vmul.f32 %v4016, 1.442695
      %v4076 = vpow.pop %v4075
      %v4077 = vmul.f32 %v4017, 1.442695
      %v4078 = vpow.pop %v4077
      %v4079 = vmul.f32 %v4018, 1.442695
      %v4080 = vpow.pop %v4079
      %v4081 = vmul.f32 %v4019, 1.442695
      %v4082 = vpow.pop %v4081
      %v4083 = vmul.f32 %v4020, 1.442695
      %v4084 = vpow.pop %v4083
      %v4085 = vadd.f32 %v4022, 1.0
      %v4086 = vadd.f32 %v4024, 1.0
      %v4087 = vadd.f32 %v4026, 1.0
      %v4088 = vadd.f32 %v4028, 1.0
      %v4089 = vadd.f32 %v4030, 1.0
      %v4090 = vadd.f32 %v4032, 1.0
      %v4091 = vadd.f32 %v4034, 1.0
      %v4092 = vadd.f32 %v4036, 1.0
      %v4093 = vadd.f32 %v4038, 1.0
      %v4094 = vadd.f32 %v4040, 1.0
      %v4095 = vadd.f32 %v4042, 1.0
      %v4096 = vadd.f32 %v4044, 1.0
      %v4097 = vadd.f32 %v4046, 1.0
      %v4098 = vadd.f32 %v4048, 1.0
      %v4099 = vadd.f32 %v4050, 1.0
      %v4100 = vadd.f32 %v4052, 1.0
      %v4101 = vadd.f32 %v4054, 1.0
      %v4102 = vadd.f32 %v4056, 1.0
      %v4103 = vadd.f32 %v4058, 1.0
      %v4104 = vadd.f32 %v4060, 1.0
      %v4105 = vadd.f32 %v4062, 1.0
      %v4106 = vadd.f32 %v4064, 1.0
      %v4107 = vadd.f32 %v4066, 1.0
      %v4108 = vadd.f32 %v4068, 1.0
      %v4109 = vadd.f32 %v4070, 1.0
      %v4110 = vadd.f32 %v4072, 1.0
      %v4111 = vadd.f32 %v4074, 1.0
      %v4112 = vadd.f32 %v4076, 1.0
      %v4113 = vadd.f32 %v4078, 1.0
      %v4114 = vadd.f32 %v4080, 1.0
      %v4115 = vadd.f32 %v4082, 1.0
      %v4116 = vadd.f32 %v4084, 1.0
      %v4117 = vrcp.pop %v4085
      %v4118 = vmul.f32 1.0, %v4117
      %v4119 = vrcp.pop %v4086
      %v4120 = vmul.f32 1.0, %v4119
      %v4121 = vrcp.pop %v4087
      %v4122 = vmul.f32 1.0, %v4121
      %v4123 = vrcp.pop %v4088
      %v4124 = vmul.f32 1.0, %v4123
      %v4125 = vrcp.pop %v4089
      %v4126 = vmul.f32 1.0, %v4125
      %v4127 = vrcp.pop %v4090
      %v4128 = vmul.f32 1.0, %v4127
      %v4129 = vrcp.pop %v4091
      %v4130 = vmul.f32 1.0, %v4129
      %v4131 = vrcp.pop %v4092
      %v4132 = vmul.f32 1.0, %v4131
      %v4133 = vrcp.pop %v4093
      %v4134 = vmul.f32 1.0, %v4133
      %v4135 = vrcp.pop %v4094
      %v4136 = vmul.f32 1.0, %v4135
      %v4137 = vrcp.pop %v4095
      %v4138 = vmul.f32 1.0, %v4137
      %v4139 = vrcp.pop %v4096
      %v4140 = vmul.f32 1.0, %v4139
      %v4141 = vrcp.pop %v4097
      %v4142 = vmul.f32 1.0, %v4141
      %v4143 = vrcp.pop %v4098
      %v4144 = vmul.f32 1.0, %v4143
      %v4145 = vrcp.pop %v4099
      %v4146 = vmul.f32 1.0, %v4145
      %v4147 = vrcp.pop %v4100
      %v4148 = vmul.f32 1.0, %v4147
      %v4149 = vrcp.pop %v4101
      %v4150 = vmul.f32 1.0, %v4149
      %v4151 = vrcp.pop %v4102
      %v4152 = vmul.f32 1.0, %v4151
      %v4153 = vrcp.pop %v4103
      %v4154 = vmul.f32 1.0, %v4153
      %v4155 = vrcp.pop %v4104
      %v4156 = vmul.f32 1.0, %v4155
      %v4157 = vrcp.pop %v4105
      %v4158 = vmul.f32 1.0, %v4157
      %v4159 = vrcp.pop %v4106
      %v4160 = vmul.f32 1.0, %v4159
      %v4161 = vrcp.pop %v4107
      %v4162 = vmul.f32 1.0, %v4161
      %v4163 = vrcp.pop %v4108
      %v4164 = vmul.f32 1.0, %v4163
      %v4165 = vrcp.pop %v4109
      %v4166 = vmul.f32 1.0, %v4165
      %v4167 = vrcp.pop %v4110
      %v4168 = vmul.f32 1.0, %v4167
      %v4169 = vrcp.pop %v4111
      %v4170 = vmul.f32 1.0, %v4169
      %v4171 = vrcp.pop %v4112
      %v4172 = vmul.f32 1.0, %v4171
      %v4173 = vrcp.pop %v4113
      %v4174 = vmul.f32 1.0, %v4173
      %v4175 = vrcp.pop %v4114
      %v4176 = vmul.f32 1.0, %v4175
      %v4177 = vrcp.pop %v4115
      %v4178 = vmul.f32 1.0, %v4177
      %v4179 = vrcp.pop %v4116
      %v4180 = vmul.f32 1.0, %v4179
      %v4181 = vmul.f32 %v3957, %v4118
      %v4182 = vmul.f32 %v3958, %v4120
      %v4183 = vmul.f32 %v3959, %v4122
      %v4184 = vmul.f32 %v3960, %v4124
      %v4185 = vmul.f32 %v3961, %v4126
      %v4186 = vmul.f32 %v3962, %v4128
      %v4187 = vmul.f32 %v3963, %v4130
      %v4188 = vmul.f32 %v3964, %v4132
      %v4189 = vmul.f32 %v3965, %v4134
      %v4190 = vmul.f32 %v3966, %v4136
      %v4191 = vmul.f32 %v3967, %v4138
      %v4192 = vmul.f32 %v3968, %v4140
      %v4193 = vmul.f32 %v3969, %v4142
      %v4194 = vmul.f32 %v3970, %v4144
      %v4195 = vmul.f32 %v3971, %v4146
      %v4196 = vmul.f32 %v3972, %v4148
      %v4197 = vmul.f32 %v3973, %v4150
      %v4198 = vmul.f32 %v3974, %v4152
      %v4199 = vmul.f32 %v3975, %v4154
      %v4200 = vmul.f32 %v3976, %v4156
      %v4201 = vmul.f32 %v3977, %v4158
      %v4202 = vmul.f32 %v3978, %v4160
      %v4203 = vmul.f32 %v3979, %v4162
      %v4204 = vmul.f32 %v3980, %v4164
      %v4205 = vmul.f32 %v3981, %v4166
      %v4206 = vmul.f32 %v3982, %v4168
      %v4207 = vmul.f32 %v3983, %v4170
      %v4208 = vmul.f32 %v3984, %v4172
      %v4209 = vmul.f32 %v3985, %v4174
      %v4210 = vmul.f32 %v3986, %v4176
      %v4211 = vmul.f32 %v3987, %v4178
      %v4212 = vmul.f32 %v3988, %v4180
      %4213 = vst [vmem:[%s388] sm:$0xff] %v4181
      %4214 = vst [vmem:[%s388 + $0x8] sm:$0xff] %v4182
      %4215 = vst [vmem:[%s388 + $0x10] sm:$0xff] %v4183
      %4216 = vst [vmem:[%s388 + $0x18] sm:$0xff] %v4184
      %4217 = vst [vmem:[%s388 + $0x20] sm:$0xff] %v4185
      %4218 = vst [vmem:[%s388 + $0x28] sm:$0xff] %v4186
      %4219 = vst [vmem:[%s388 + $0x30] sm:$0xff] %v4187
      %4220 = vst [vmem:[%s388 + $0x38] sm:$0xff] %v4188
      %4221 = vst [vmem:[%s388 + $0x40] sm:$0xff] %v4189
      %4222 = vst [vmem:[%s388 + $0x48] sm:$0xff] %v4190
      %4223 = vst [vmem:[%s388 + $0x50] sm:$0xff] %v4191
      %4224 = vst [vmem:[%s388 + $0x58] sm:$0xff] %v4192
      %4225 = vst [vmem:[%s388 + $0x60] sm:$0xff] %v4193
      %4226 = vst [vmem:[%s388 + $0x68] sm:$0xff] %v4194
      %4227 = vst [vmem:[%s388 + $0x70] sm:$0xff] %v4195
      %4228 = vst [vmem:[%s388 + $0x78] sm:$0xff] %v4196
      %4229 = vst [vmem:[%s388 + $0x80] sm:$0xff] %v4197
      %4230 = vst [vmem:[%s388 + $0x88] sm:$0xff] %v4198
      %4231 = vst [vmem:[%s388 + $0x90] sm:$0xff] %v4199
      %4232 = vst [vmem:[%s388 + $0x98] sm:$0xff] %v4200
      %4233 = vst [vmem:[%s388 + $0xa0] sm:$0xff] %v4201
      %4234 = vst [vmem:[%s388 + $0xa8] sm:$0xff] %v4202
      %4235 = vst [vmem:[%s388 + $0xb0] sm:$0xff] %v4203
      %4236 = vst [vmem:[%s388 + $0xb8] sm:$0xff] %v4204
      %4237 = vst [vmem:[%s388 + $0xc0] sm:$0xff] %v4205
      %4238 = vst [vmem:[%s388 + $0xc8] sm:$0xff] %v4206
      %4239 = vst [vmem:[%s388 + $0xd0] sm:$0xff] %v4207
      %4240 = vst [vmem:[%s388 + $0xd8] sm:$0xff] %v4208
      %4241 = vst [vmem:[%s388 + $0xe0] sm:$0xff] %v4209
      %4242 = vst [vmem:[%s388 + $0xe8] sm:$0xff] %v4210
      %4243 = vst [vmem:[%s388 + $0xf0] sm:$0xff] %v4211
      %4244 = vst [vmem:[%s388 + $0xf8] sm:$0xff] %v4212
      %s4245 = smul.u32 16, %s21
      %p4246 = scmp.lt.s32.totalorder %s20, 1
      %s4247 = scalar_select %p4246, %s20, 1
      %p4248 = scmp.lt.s32.totalorder %s4245, 15
      %s4249 = scalar_select %p4248, %s4245, 15
      %s4250 = smul.addr %s4249, 2
      %s4251 = smul.addr %s4247, 32
      %s4252 = sadd.s32 %s4250, %s4251
      %s4253 = smul.addr %s4252, 8
      %s4254 = scalar_lea.vmem %s5, %s4253
      // Predicated region
      $region41: #{patch_attention_forward.3} parent=39 // pred_check
        %p4255 = pneg %p182
      $region42: #{patch_attention_forward.3} parent=39 // pred_check_branch
        %4257 = sbr.rel (%p4255) target = $region44
      $region43: #{patch_attention_forward.3} parent=39 // pred_region
        %s4258 = smul.u32 16, %s21
      $region44: #{patch_attention_forward.3} parent=39 // pred_fallthru
        _
    $region40: #{patch_attention_forward.3} parent=5 // pred_fallthru
      _
    %p4259 = scmp.le.s32.totalorder 2, %s11
    // Predicated region
    $region45: #{patch_attention_forward.3} parent=5 // pred_check
      %p4260 = pneg %p4259
    $region46: #{patch_attention_forward.3} parent=5 // pred_check_branch
      %4262 = sbr.rel (%p4260) target = $region48
    $region47: #{patch_attention_forward.3} parent=5 // pred_region
      %s4263 = ssub.s32 %s11, 2
      // Predicated region
      $region49: #{patch_attention_forward.3} parent=47 // pred_check
        %p4264 = pneg %p188
      $region50: #{patch_attention_forward.3} parent=47 // pred_check_branch
        %4266 = sbr.rel (%p4264) target = $region52
      $region51: #{patch_attention_forward.3} parent=47 // pred_region
        %s4267 = smul.u32 16, %s23
        %p4268 = scmp.lt.s32.totalorder %s22, 1
        %s4269 = scalar_select %p4268, %s22, 1
        %p4270 = scmp.lt.s32.totalorder %s4267, 15
        %s4271 = scalar_select %p4270, %s4267, 15
        %s4272 = smul.addr %s4271, 2
        %s4273 = smul.addr %s4269, 32
        %s4274 = sadd.s32 %s4272, %s4273
        %s4275 = smul.addr %s4274, 8
        %s4276 = scalar_lea.vmem %s5, %s4275
      $region52: #{patch_attention_forward.3} parent=47 // pred_fallthru
        _
    $region48: #{patch_attention_forward.3} parent=5 // pred_fallthru
      _
  $region6: #{patch_attention_forward.3} parent=0 // loop_footer
    %s15 = sadd.s32 1, %s11
  $region7: #{patch_attention_forward.3} parent=0 // loop_footer_branch
    %10 = sbr.rel target = $region3
  $region8: #{patch_attention_forward.3} parent=0 // loop_exit
    _

</llo_original>
